<compile_context>
chip_gen: v5e
topology: v5e:2x2
jax: 0.10.0
libtpu: 0.0.40
codegen_flags: <defaults>
</compile_context>

<pallas_src>
import jax
import jax.numpy as jnp
from jax.experimental import pallas as pl
from jax.experimental.pallas import tpu as pltpu


_FAST_PATH_MAX_ELEMS = 8192            # below this, fused XLA sin beats a kernel launch
_TARGET_BLOCK_BYTES = 4 * 1024 * 1024  # ~4 MiB blocks: ~86% of HBM roofline on v6e
_VMEM_LIMIT_BYTES = 48 * 1024 * 1024   # raise scoped VMEM (defaults: 16/32/32 MiB)


def _sine_kernel(freq_ref, x_ref, o_ref):
    # freq_ref lives in SMEM (runtime scalar).  Compute in f32 so bf16 inputs
    # get full-precision range reduction, then cast back on store.
    f = freq_ref[0]
    o_ref[...] = jnp.sin(x_ref[...].astype(jnp.float32) * f).astype(o_ref.dtype)


def _round_up(v, m):
    return ((v + m - 1) // m) * m


def _sine_2d(x2d, freq_arr):
    """Run the sine kernel over a lane-dense (rows, width) view."""
    rows, width = x2d.shape
    itemsize = jnp.dtype(x2d.dtype).itemsize
    sub = max(8, 32 // itemsize)  # packed sublane count: 8/16/32 for 32/16/8-bit

    # Row tile targeting ~4 MiB blocks, multiple of the sublane pack.
    tr = max(sub, (_TARGET_BLOCK_BYTES // (width * itemsize)) // sub * sub)
    if rows >= 2 * sub:
        # Keep >= 2 grid steps so v7x's two TensorCores both get work.
        tr = min(tr, _round_up(pl.cdiv(rows, 2), sub))
    tr = min(tr, rows)
    steps = pl.cdiv(rows, tr)
    # Prefer an even step count (balanced 2-TC split on v7x); harmless elsewhere.
    if steps > 1 and steps % 2 == 1:
        tr_even = _round_up(pl.cdiv(rows, steps + 1), sub)
        if sub <= tr_even < rows and pl.cdiv(rows, tr_even) % 2 == 0:
            tr = tr_even
            steps = pl.cdiv(rows, tr)

    n2d = rows * width
    return pl.pallas_call(
        _sine_kernel,
        out_shape=jax.ShapeDtypeStruct((rows, width), x2d.dtype),
        grid=(steps,),  # ragged last block handled by Pallas masking
        in_specs=[
            pl.BlockSpec(memory_space=pltpu.MemorySpace.SMEM),  # freq scalar
            pl.BlockSpec((tr, width), lambda i: (i, 0)),
        ],
        out_specs=pl.BlockSpec((tr, width), lambda i: (i, 0)),
        compiler_params=pltpu.CompilerParams(
            dimension_semantics=("parallel",),
            vmem_limit_bytes=_VMEM_LIMIT_BYTES,
        ),
        cost_estimate=pl.CostEstimate(
            flops=n2d,
            transcendentals=n2d,
            bytes_accessed=2 * n2d * itemsize,
        ),
    )(freq_arr, x2d)


def sine(x, freq=25.0):
    """y = sin(freq * x), elementwise, via a tiled lane-dense Pallas kernel."""
    orig_shape, orig_dtype = x.shape, x.dtype
    n = x.size
    freq_f32 = jnp.asarray(freq, dtype=jnp.float32)

    # Small / empty inputs: plain XLA is strictly faster than a kernel launch.
    # Same f32 compute path as the kernel so results agree across the threshold.
    if n < _FAST_PATH_MAX_ELEMS:
        return jnp.sin(freq_f32 * x.astype(jnp.float32)).astype(orig_dtype)

    freq_arr = freq_f32.reshape((1,))
    flat = x.reshape(-1)

    # Widest lane-dense width (multiple of 128) giving a zero-copy reshape.
    # Only `width | n` is required: the (8,128) rule is on the block shape,
    # and Pallas masks a ragged last row-block just like a ragged grid step.
    width = None
    for w in (4096, 2048, 1024, 512, 256, 128):
        if n % w == 0:
            width = w
            break

    if width is not None:
        out2d = _sine_2d(flat.reshape(n // width, width), freq_arr)
        return out2d.reshape(orig_shape)

    # Awkward size (n not a multiple of 128): kernel on the aligned prefix,
    # plain XLA sin on the < width tail — no full-array pad copy.
    width = 512
    n_main = (n // width) * width
    out_main = _sine_2d(flat[:n_main].reshape(n_main // width, width), freq_arr)
    tail = flat[n_main:]
    out_tail = jnp.sin(freq_f32 * tail.astype(jnp.float32)).astype(orig_dtype)
    return jnp.concatenate([out_main.reshape(-1), out_tail]).reshape(orig_shape)


class Sine:
    """JAX/Pallas port of the PyTorch SIREN `Sine` activation: sin(freq * x)."""

    def forward(self, x, freq=25.0):
        return sine(x, freq)

    __call__ = forward


if __name__ == "__main__":
    k0, k1 = jax.random.split(jax.random.PRNGKey(0))

    sine_mod = Sine()

    # SIREN-style pre-activation: (batch=2, num_points=256, hidden=128).
    x = jax.random.uniform(k0, (2, 256, 128), dtype=jnp.float32,
                           minval=-1.0, maxval=1.0)
    out = jax.block_until_ready(sine_mod(x))                    # Pallas path
    ref = jnp.sin(25.0 * x)
    assert out.shape == x.shape and out.dtype == x.dtype
    assert jnp.allclose(out, ref, rtol=1e-3, atol=1e-3), \
        float(jnp.max(jnp.abs(out - ref)))

    # Non-default (first-layer) omega.
    out30 = jax.block_until_ready(sine_mod(x, freq=30.0))
    assert jnp.allclose(out30, jnp.sin(30.0 * x), rtol=1e-3, atol=1e-3)

    # Ragged size (n not a multiple of 128) -> aligned-prefix + XLA tail path.
    x_r = jax.random.uniform(k1, (13, 1000), dtype=jnp.float32,
                             minval=-1.0, maxval=1.0)
    out_r = jax.block_until_ready(sine_mod(x_r))
    assert jnp.allclose(out_r, jnp.sin(25.0 * x_r), rtol=1e-3, atol=1e-3)

    # Tiny input -> plain-JAX fast path (no kernel launch).
    x_t = x[:1, :8, :3]
    out_t = jax.block_until_ready(sine_mod(x_t))
    assert jnp.allclose(out_t, jnp.sin(25.0 * x_t), rtol=1e-3, atol=1e-3)

    # freq as a traced value under jit (SMEM scalar -> single compile).
    out_j = jax.block_until_ready(jax.jit(sine)(x, 5.0))
    assert jnp.allclose(out_j, jnp.sin(5.0 * x), rtol=1e-3, atol=1e-3)

    print("KERNEL_OK")
</pallas_src>

<mosaic_0001>
module attributes {stable_mosaic.version = 11 : i64} {
  func.func @_sine_kernel(%arg0: i32, %arg1: memref<1xf32, #tpu.memory_space<smem>>, %arg2: memref<8x4096xf32, #tpu.memory_space<vmem>>, %arg3: memref<8x4096xf32, #tpu.memory_space<vmem>>) attributes {dimension_semantics = [#tpu.dimension_semantics<parallel>], iteration_bounds = array<i64: 2>, scalar_prefetch = 0 : i64, scratch_operands = 0 : i64, tpu.core_type = #tpu.core_type<tc>, window_params = [{transform_indices = @transform_0, window_bounds = array<i64: 1>}, {transform_indices = @transform_1, window_bounds = array<i64: 8, 4096>}, {transform_indices = @transform_2, window_bounds = array<i64: 8, 4096>}]} {
    %c0 = arith.constant 0 : index
    %0 = memref.load %arg1[%c0] : memref<1xf32, #tpu.memory_space<smem>>
    %c0_0 = arith.constant 0 : index
    %c0_1 = arith.constant 0 : index
    %1 = vector.load %arg2[%c0_0, %c0_1] : memref<8x4096xf32, #tpu.memory_space<vmem>>, vector<8x4096xf32>
    %2 = vector.broadcast %0 : f32 to vector<8x4096xf32>
    %3 = arith.mulf %1, %2 : vector<8x4096xf32>
    %4 = math.sin %3 : vector<8x4096xf32>
    %c0_2 = arith.constant 0 : index
    %c0_3 = arith.constant 0 : index
    %5 = vector.load %arg3[%c0_2, %c0_3] : memref<8x4096xf32, #tpu.memory_space<vmem>>, vector<8x4096xf32>
    tpu.vector_store %arg3[%c0_2, %c0_3], %4 {strides = array<i32>} : memref<8x4096xf32, #tpu.memory_space<vmem>>, vector<8x4096xf32>,
    return
  }
  func.func @transform_0(%arg0: i32) -> i32 {
    %c0_i32 = arith.constant 0 : i32
    %c0_i32_0 = arith.constant 0 : i32
    return %c0_i32 : i32
  }
  func.func @transform_1(%arg0: i32) -> (i32, i32) {
    %c0_i32 = arith.constant 0 : i32
    %c0_i32_0 = arith.constant 0 : i32
    return %arg0, %c0_i32 : i32, i32
  }
  func.func @transform_2(%arg0: i32) -> (i32, i32) {
    %c0_i32 = arith.constant 0 : i32
    %c0_i32_0 = arith.constant 0 : i32
    return %arg0, %c0_i32 : i32, i32
  }
}

</mosaic_0001>

<llo_original>
// kernel: tpu_custom_call.1
$region0: #{tpu_custom_call.1}
  #allocation0 [shape = 'u32[]', space=smem, size = 0x4, offset = 0x4, fixed_abs, tag = 'smem constant byte address 0x4 - core index']
  #allocation1 [shape = 'u32[72,128]{1,0:T(1,128)}', space=vmem, size = 0x9000, scoped, tag = 'internal scratch']
  #allocation2 [shape = 'f32[1]{0:T(128)S(6)}', space=smem, size = 0x200, scoped, tag = 'scoped memory for tpu_custom_call.1']
  %s0 = inlined_call_operand.<no memory space> [shape: f32[1], index: 0, kind: input, shape index: {}]
  %s1 = inlined_call_operand.hbm [shape: f32[16,4096], index: 1, kind: input, shape index: {}]
  %s2 = inlined_call_operand.hbm [shape: f32[16,4096], index: 2, kind: output, shape index: {}]
  %s3 = sld [smem:[#allocation0]]
  $region45: #{tpu_custom_call.1} parent=0
    _
  %s5 = ssub.s32 1, %s3
  %s6 = scalar_select 0, %s5, %s3
  %7 = sst [smem:[#allocation2]] %s0
  $region1: #{tpu_custom_call.1} parent=0
    #allocation3 [shape = 'u8[262144]{0}', space=vmem, size = 0x40000, scoped, tag = 'input window, operand 1']
    #allocation4 [shape = 's32[2]{0}', space=sflag, size = 0x8, scoped, tag = 'scoped memory for tpu_custom_call.1']
    #allocation5 [shape = 's32[2]{0}', space=sflag, size = 0x8, scoped, tag = 'scoped memory for tpu_custom_call.1']
    #allocation6 [shape = 'u8[262144]{0}', space=vmem, size = 0x40000, scoped, tag = 'output window, operand 0']
    %8 = vsyncpa [#allocation4], 0
    %s9 = scalar_lea.sflag [#allocation4], 1
    %10 = vsyncpa %s9, 0
    %11 = vsyncpa [#allocation5], 0
    %s12 = scalar_lea.sflag [#allocation5], 1
    %13 = vsyncpa %s12, 0
    loop: start=0, step=1, limit=4
    $region2: #{tpu_custom_call.1} parent=1 // loop_pre_header
      _
    $region3: #{tpu_custom_call.1} parent=1 // loop_header
      %s15 = sphi 0, %s19
      %p16 = scmp.ge.s32.totalorder %s15, 4
      %s23 = sphi 0, %s23
      %s25 = sphi 0, %s23
      %s26 = sphi 0, %s25
      %s40 = sphi 0, %s26
      %s46 = sphi 0, %s48
      %s49 = sphi 0, %s46
      %s50 = sphi 0, %s49
      %s66 = sphi 0, %s50
      %s72 = sphi 0, %s74
      %s75 = sphi 0, %s72
      %s76 = sphi 0, %s75
      %s92 = sphi 0, %s76
    $region4: #{tpu_custom_call.1} parent=1 // loop_header_branch
      %18 = sbr.rel (%p16) target = $region8
    $region5: #{tpu_custom_call.1} parent=1 // loop_body
      %s20 = ssub.s32 %s15, 1
      %s21 = ssub.s32 %s15, 2
      %s22 = sadd.s32 %s15, 1
      %s24 = sadd.s32 %s23, 1
      %p27 = scmp.eq.s32.totalorder %s15, 1
      %p28 = scmp.ne.s32.totalorder %s23, %s25
      %p29 = scmp.eq.s32.totalorder %s15, 0
      %p30 = por %p28, %p29
      %p31 = scmp.ne.s32.totalorder %s23, %s25
      %p32 = scmp.eq.s32.totalorder %s20, 1
      %p33 = por %p31, %p32
      %p34 = scmp.ne.s32.totalorder %s25, %s26
      %p35 = scmp.eq.s32.totalorder %s20, 0
      %p36 = por %p34, %p35
      %p37 = scmp.ne.s32.totalorder %s25, %s26
      %p38 = scmp.eq.s32.totalorder %s21, 1
      %p39 = por %p37, %p38
      %p41 = scmp.ne.s32.totalorder %s26, %s40
      %p42 = scmp.eq.s32.totalorder %s21, 0
      %p43 = por %p41, %p42
      %s44 = ssub.s32 %s15, %s22
      %p45 = scmp.eq.s32.totalorder %s44, 0
      %s47 = sadd.s32 %s46, 1
      %s48 = scalar_select %p45, %s46, %s47
      %p51 = pneg %p45
      %p52 = scmp.eq.s32.totalorder %s15, 1
      %p53 = por %p51, %p52
      %p54 = scmp.ne.s32.totalorder %s46, %s49
      %p55 = scmp.eq.s32.totalorder %s15, 0
      %p56 = por %p54, %p55
      %p57 = scmp.ne.s32.totalorder %s46, %s49
      %p58 = scmp.eq.s32.totalorder %s20, 1
      %p59 = por %p57, %p58
      %p60 = scmp.ne.s32.totalorder %s49, %s50
      %p61 = scmp.eq.s32.totalorder %s20, 0
      %p62 = por %p60, %p61
      %p63 = scmp.ne.s32.totalorder %s49, %s50
      %p64 = scmp.eq.s32.totalorder %s21, 1
      %p65 = por %p63, %p64
      %p67 = scmp.ne.s32.totalorder %s50, %s66
      %p68 = scmp.eq.s32.totalorder %s21, 0
      %p69 = por %p67, %p68
      %s70 = ssub.s32 %s15, %s22
      %p71 = scmp.eq.s32.totalorder %s70, 0
      %s73 = sadd.s32 %s72, 1
      %s74 = scalar_select %p71, %s72, %s73
      %p77 = pneg %p71
      %p78 = scmp.eq.s32.totalorder %s15, 1
      %p79 = por %p77, %p78
      %p80 = scmp.ne.s32.totalorder %s72, %s75
      %p81 = scmp.eq.s32.totalorder %s15, 0
      %p82 = por %p80, %p81
      %p83 = scmp.ne.s32.totalorder %s72, %s75
      %p84 = scmp.eq.s32.totalorder %s20, 1
      %p85 = por %p83, %p84
      %p86 = scmp.ne.s32.totalorder %s75, %s76
      %p87 = scmp.eq.s32.totalorder %s20, 0
      %p88 = por %p86, %p87
      %p89 = scmp.ne.s32.totalorder %s75, %s76
      %p90 = scmp.eq.s32.totalorder %s21, 1
      %p91 = por %p89, %p90
      %p93 = scmp.ne.s32.totalorder %s76, %s92
      %p94 = scmp.eq.s32.totalorder %s21, 0
      %p95 = por %p93, %p94
      %p96 = scmp.le.s32.totalorder 1, %s15
      %p97 = scmp.lt.s32.totalorder %s15, 3
      %p98 = pnand %p96, %p97
      %p99 = pneg %p98
      // Predicated region
      $region9: #{tpu_custom_call.1} parent=5 // pred_check
        _
      $region10: #{tpu_custom_call.1} parent=5 // pred_check_branch
        %101 = sbr.rel (%p98) target = $region12
      $region11: #{tpu_custom_call.1} parent=5 // pred_region
        %s102 = ssub.s32 %s15, 1
        // Predicated region
        $region13: #{tpu_custom_call.1} parent=11 // pred_check
          %p103 = pneg %p36
        $region14: #{tpu_custom_call.1} parent=11 // pred_check_branch
          %105 = sbr.rel (%p103) target = $region16
        $region15: #{tpu_custom_call.1} parent=11 // pred_region
          _
        $region16: #{tpu_custom_call.1} parent=11 // pred_fallthru
          _
      $region12: #{tpu_custom_call.1} parent=5 // pred_fallthru
        _
      %p106 = scmp.lt.s32.totalorder %s15, 2
      // Predicated region
      $region17: #{tpu_custom_call.1} parent=5 // pred_check
        %p107 = pneg %p106
      $region18: #{tpu_custom_call.1} parent=5 // pred_check_branch
        %109 = sbr.rel (%p107) target = $region20
      $region19: #{tpu_custom_call.1} parent=5 // pred_region
        // Predicated region
        $region21: #{tpu_custom_call.1} parent=19 // pred_check
          %p110 = pneg %p56
        $region22: #{tpu_custom_call.1} parent=19 // pred_check_branch
          %112 = sbr.rel (%p110) target = $region24
        $region23: #{tpu_custom_call.1} parent=19 // pred_region
          %s113 = sand.u32 %s46, 1
          %s114 = scalar_lea.sflag [#allocation4], %s113
          %s115 = sand.u32 %s46, 1
          %s116 = smul.addr %s115, 256
          %s117 = scalar_lea.vmem [#allocation3], %s116
          %119 = vsyncadd %s114, 0
          %s120 = smul.addr %s15, 32
          %s121 = smul.addr %s120, 8
          %s122 = scalar_lea.hbm %s1, %s121
          %s124 = sshll.u32 %s122, 4
          %s125 = int_to_ptr.hbm [resolvable:$true] %s124
          %s126 = sshll.u32 %s117, 4
          %s127 = int_to_ptr.vmem [resolvable:$true] %s126
          %129 = dma.hbm_to_vmem [thread:$0]  %s125, 4096, %s127, %s114
        $region24: #{tpu_custom_call.1} parent=19 // pred_fallthru
          _
      $region20: #{tpu_custom_call.1} parent=5 // pred_fallthru
        _
      %p130 = scmp.le.s32.totalorder 1, %s15
      %p131 = scmp.lt.s32.totalorder %s15, 3
      %p132 = pnand %p130, %p131
      %p133 = pneg %p132
      // Predicated region
      $region25: #{tpu_custom_call.1} parent=5 // pred_check
        _
      $region26: #{tpu_custom_call.1} parent=5 // pred_check_branch
        %135 = sbr.rel (%p132) target = $region28
      $region27: #{tpu_custom_call.1} parent=5 // pred_region
        %s136 = ssub.s32 %s15, 1
        %s137 = sand.u32 %s49, 1
        %s138 = scalar_lea.sflag [#allocation4], %s137
        %s139 = sand.u32 %s49, 1
        %s140 = smul.addr %s139, 256
        %s141 = scalar_lea.vmem [#allocation3], %s140
        // Predicated region
        $region29: #{tpu_custom_call.1} parent=27 // pred_check
          %p142 = pneg %p62
        $region30: #{tpu_custom_call.1} parent=27 // pred_check_branch
          %144 = sbr.rel (%p142) target = $region32
        $region31: #{tpu_custom_call.1} parent=27 // pred_region
          %146 = dma.done %s138, 4096
        $region32: #{tpu_custom_call.1} parent=27 // pred_fallthru
          _
        %p147 = pneg %p36
        %p148 = pneg %p33
        %s149 = sand.u32 %s49, 1
        %s150 = scalar_lea.sflag [#allocation4], %s149
        %s151 = sand.u32 %s49, 1
        %s152 = smul.addr %s151, 256
        %s153 = scalar_lea.vmem [#allocation3], %s152
        %p154 = pneg %p62
        %p155 = pneg %p59
        %p156 = pneg %p88
        %p157 = pneg %p85
        %s158 = sand.u32 %s75, 1
        %s159 = scalar_lea.sflag [#allocation5], %s158
        %s160 = sand.u32 %s75, 1
        %s161 = smul.addr %s160, 256
        %s162 = scalar_lea.vmem [#allocation6], %s161
        %s163 = sld [smem:[#allocation2]]
        %v164 = vld [vmem:[%s141] sm:$0xff]
        %v165 = vld [vmem:[%s141 + $0x8] sm:$0xff]
        %v166 = vld [vmem:[%s141 + $0x10] sm:$0xff]
        %v167 = vld [vmem:[%s141 + $0x18] sm:$0xff]
        %v168 = vld [vmem:[%s141 + $0x20] sm:$0xff]
        %v169 = vld [vmem:[%s141 + $0x28] sm:$0xff]
        %v170 = vld [vmem:[%s141 + $0x30] sm:$0xff]
        %v171 = vld [vmem:[%s141 + $0x38] sm:$0xff]
        %v172 = vld [vmem:[%s141 + $0x40] sm:$0xff]
        %v173 = vld [vmem:[%s141 + $0x48] sm:$0xff]
        %v174 = vld [vmem:[%s141 + $0x50] sm:$0xff]
        %v175 = vld [vmem:[%s141 + $0x58] sm:$0xff]
        %v176 = vld [vmem:[%s141 + $0x60] sm:$0xff]
        %v177 = vld [vmem:[%s141 + $0x68] sm:$0xff]
        %v178 = vld [vmem:[%s141 + $0x70] sm:$0xff]
        %v179 = vld [vmem:[%s141 + $0x78] sm:$0xff]
        %v180 = vld [vmem:[%s141 + $0x80] sm:$0xff]
        %v181 = vld [vmem:[%s141 + $0x88] sm:$0xff]
        %v182 = vld [vmem:[%s141 + $0x90] sm:$0xff]
        %v183 = vld [vmem:[%s141 + $0x98] sm:$0xff]
        %v184 = vld [vmem:[%s141 + $0xa0] sm:$0xff]
        %v185 = vld [vmem:[%s141 + $0xa8] sm:$0xff]
        %v186 = vld [vmem:[%s141 + $0xb0] sm:$0xff]
        %v187 = vld [vmem:[%s141 + $0xb8] sm:$0xff]
        %v188 = vld [vmem:[%s141 + $0xc0] sm:$0xff]
        %v189 = vld [vmem:[%s141 + $0xc8] sm:$0xff]
        %v190 = vld [vmem:[%s141 + $0xd0] sm:$0xff]
        %v191 = vld [vmem:[%s141 + $0xd8] sm:$0xff]
        %v192 = vld [vmem:[%s141 + $0xe0] sm:$0xff]
        %v193 = vld [vmem:[%s141 + $0xe8] sm:$0xff]
        %v194 = vld [vmem:[%s141 + $0xf0] sm:$0xff]
        %v195 = vld [vmem:[%s141 + $0xf8] sm:$0xff]
        %v196 = vstv %s163
        %v197 = vmul.f32 %v164, %v196
        %v198 = vmul.f32 %v165, %v196
        %v199 = vmul.f32 %v166, %v196
        %v200 = vmul.f32 %v167, %v196
        %v201 = vmul.f32 %v168, %v196
        %v202 = vmul.f32 %v169, %v196
        %v203 = vmul.f32 %v170, %v196
        %v204 = vmul.f32 %v171, %v196
        %v205 = vmul.f32 %v172, %v196
        %v206 = vmul.f32 %v173, %v196
        %v207 = vmul.f32 %v174, %v196
        %v208 = vmul.f32 %v175, %v196
        %v209 = vmul.f32 %v176, %v196
        %v210 = vmul.f32 %v177, %v196
        %v211 = vmul.f32 %v178, %v196
        %v212 = vmul.f32 %v179, %v196
        %v213 = vmul.f32 %v180, %v196
        %v214 = vmul.f32 %v181, %v196
        %v215 = vmul.f32 %v182, %v196
        %v216 = vmul.f32 %v183, %v196
        %v217 = vmul.f32 %v184, %v196
        %v218 = vmul.f32 %v185, %v196
        %v219 = vmul.f32 %v186, %v196
        %v220 = vmul.f32 %v187, %v196
        %v221 = vmul.f32 %v188, %v196
        %v222 = vmul.f32 %v189, %v196
        %v223 = vmul.f32 %v190, %v196
        %v224 = vmul.f32 %v191, %v196
        %v225 = vmul.f32 %v192, %v196
        %v226 = vmul.f32 %v193, %v196
        %v227 = vmul.f32 %v194, %v196
        %v228 = vmul.f32 %v195, %v196
        %v229 = vand.u32 2147483647, %v197
        %vm230 = vcmp.le.f32.partialorder %v229, 0.7853982
        %vm231 = vcmp.lt.s32.totalorder %v197, 0
        %v232 = vand.u32 %v197, 2139095040
        %v233 = vshrl.u32 %v232, 23
        %v234 = vsub.s32 %v233, 127
        %v235 = vand.u32 2147483647, %v197
        %v236 = vand.u32 %v235, 8388607
        %v237 = vor.u32 %v236, 8388608
        %v238 = vsub.s32 0, %v237
        %v239 = vadd.s32 %v234, 1
        %vm240 = vcmp.gt.s32.totalorder %v239, 0
        %v241 = vsel %vm240, %v239, 0
        %v242 = vshrl.u32 %v241, 5
        %v243 = vand.u32 %v241, 31
        %v244 = vsub.s32 32, %v243
        %v245 = vshrl.u32 683565275, %v244
        %v246 = vshll.u32 683565275, %v243
        %v247 = vshrl.u32 2475754826, %v244
        %v248 = vor.u32 %v246, %v247
        %v249 = vshll.u32 2475754826, %v243
        %v250 = vshrl.u32 2131351028, %v244
        %v251 = vor.u32 %v249, %v250
        %v252 = vshll.u32 2131351028, %v243
        %v253 = vshrl.u32 2102212464, %v244
        %v254 = vor.u32 %v252, %v253
        %v255 = vshll.u32 2102212464, %v243
        %v256 = vshrl.u32 920167782, %v244
        %v257 = vor.u32 %v255, %v256
        %v258 = vshll.u32 920167782, %v243
        %v259 = vshrl.u32 1326507024, %v244
        %v260 = vor.u32 %v258, %v259
        %vm261 = vcmp.lt.s32.totalorder %v242, 1
        %vm262 = vcmp.lt.s32.totalorder %v242, 2
        %vm263 = vcmp.lt.s32.totalorder %v242, 3
        %vm264 = vcmp.lt.s32.totalorder %v242, 4
        %v265 = vsel %vm261, %v245, %v248
        %v266 = vsel %vm264, %v254, 2102212464
        %v267 = vsel %vm263, %v251, %v266
        %v268 = vsel %vm262, %v265, %v267
        %v269 = vsel %vm261, %v248, %v251
        %v270 = vsel %vm264, %v257, 920167782
        %v271 = vsel %vm263, %v254, %v270
        %v272 = vsel %vm262, %v269, %v271
        %v273 = vsel %vm261, %v251, %v254
        %v274 = vsel %vm264, %v260, 1326507024
        %v275 = vsel %vm263, %v257, %v274
        %v276 = vsel %vm262, %v273, %v275
        %v277 = vshll.u32 %v237, 8
        %v278 = vand.u32 %v277, 65535
        %v279 = vshrl.u32 %v277, 16
        %v280 = vand.u32 %v276, 65535
        %v281 = vshrl.u32 %v276, 16
        %v282 = vmul.u32 %v278, %v280
        %v283 = vmul.u32 %v278, %v281
        %v284 = vmul.u32 %v279, %v280
        %v285 = vmul.u32 %v279, %v281
        %v286 = vshll.u32 %v283, 16
        %v287 = vshrl.u32 %v283, 16
        %v288 = vshll.u32 %v284, 16
        %v289 = vshrl.u32 %v284, 16
        %vm290 = vc.u32 %v282, %v286
        %v291 = vsel %vm290, 1, 0
        %v292 = vadd.s32 %v282, %v286
        %v293 = vadd.s32 %v285, %v291
        %vm294 = vc.u32 %v292, %v288
        %v295 = vsel %vm294, 1, 0
        %v296 = vadd.s32 %v292, %v288
        %v297 = vadd.s32 %v293, %v295
        %v298 = vadd.s32 %v297, %v287
        %v299 = vadd.s32 %v298, %v289
        %v300 = vand.u32 %v277, 65535
        %v301 = vshrl.u32 %v277, 16
        %v302 = vand.u32 %v272, 65535
        %v303 = vshrl.u32 %v272, 16
        %v304 = vmul.u32 %v300, %v302
        %v305 = vmul.u32 %v300, %v303
        %v306 = vmul.u32 %v301, %v302
        %v307 = vmul.u32 %v301, %v303
        %v308 = vshll.u32 %v305, 16
        %v309 = vshrl.u32 %v305, 16
        %v310 = vshll.u32 %v306, 16
        %v311 = vshrl.u32 %v306, 16
        %vm312 = vc.u32 %v304, %v308
        %v313 = vsel %vm312, 1, 0
        %v314 = vadd.s32 %v304, %v308
        %v315 = vadd.s32 %v307, %v313
        %vm316 = vc.u32 %v314, %v310
        %v317 = vsel %vm316, 1, 0
        %v318 = vadd.s32 %v314, %v310
        %v319 = vadd.s32 %v315, %v317
        %v320 = vadd.s32 %v319, %v309
        %v321 = vadd.s32 %v320, %v311
        %v322 = vmul.u32 %v277, %v268
        %v323 = vadd.s32 %v299, %v318
        %vm324 = vc.u32 %v299, %v318
        %v325 = vadd.s32 %v321, 1
        %v326 = vsel %vm324, %v325, %v321
        %v327 = vadd.s32 %v322, %v326
        %v328 = vadd.s32 %v327, 536870912
        %v329 = vshrl.u32 %v328, 30
        %v330 = vshll.u32 %v329, 30
        %v331 = vsub.s32 %v327, %v330
        %vm332 = vcmp.lt.s32.totalorder %v331, 0
        %v333 = vsub.s32 0, %v331
        %v334 = vsel %vm332, %v333, %v331
        %v335 = vclz %v334
        %v336 = vsub.s32 %v335, 2
        %vm337 = vcmp.gt.s32.totalorder 0, %v336
        %v338 = vsel %vm337, 0, %v336
        %v339 = vsub.s32 32, %v338
        %v340 = vshll.u32 %v331, %v338
        %v341 = vshrl.u32 %v323, %v339
        %v342 = vor.u32 %v340, %v341
        %v343 = vsub.s32 4294967266, %v338
        %v344 = vadd.s32 %v343, 127
        %v345 = vshll.u32 %v344, 23
        %v346 = vor.u32 4788187, %v345
        %v347 = vand.u32 2147483647, %v346
        %v349 = vcvt.s32.f32 %v342
        %v350 = vmul.f32 %v349, %v347
        %v351 = vxor.u32 %v350, 2147483648
        %v352 = vsel %vm231, %v351, %v350
        %v353 = vsub.s32 4, %v329
        %v354 = vsel %vm231, %v353, %v329
        %v355 = vsel %vm230, %v197, %v352
        %v356 = vsel %vm230, 0, %v354
        %v357 = vmul.f32 %v355, %v355
        %v358 = vmul.f32 %v357, -0.001358992
        %v359 = vadd.f32 %v358, 0.041655596
        %v360 = vmul.f32 %v357, %v359
        %v361 = vadd.f32 %v360, -0.4999988
        %v362 = vmul.f32 %v357, %v361
        %v363 = vadd.f32 1.0, %v362
        %v364 = vmul.f32 %v355, %v355
        %v365 = vmul.f32 %v364, -0.00019511016
        %v366 = vadd.f32 %v365, 0.008332121
        %v367 = vmul.f32 %v364, %v366
        %v368 = vadd.f32 %v367, -0.16666654
        %v369 = vmul.f32 %v364, %v368
        %v370 = vadd.f32 %v369, 1.0
        %v371 = vmul.f32 %v370, %v355
        %vm372 = vweird.f32 %v197
        %v373 = vadd.s32 %v356, 3
        %v374 = vand.u32 %v373, 3
        %vm375 = vcmp.lt.s32.totalorder %v374, 2
        %vm376 = vcmp.eq.s32.totalorder %v374, 0
        %v377 = vxor.u32 %v371, 2147483648
        %v378 = vsel %vm376, %v363, %v377
        %vm379 = vcmp.eq.s32.totalorder %v374, 2
        %v380 = vxor.u32 %v363, 2147483648
        %v381 = vsel %vm379, %v380, %v371
        %v382 = vsel %vm375, %v378, %v381
        %v383 = vsel %vm372, nan, %v382
        %v384 = vand.u32 2147483647, %v198
        %vm385 = vcmp.le.f32.partialorder %v384, 0.7853982
        %vm386 = vcmp.lt.s32.totalorder %v198, 0
        %v387 = vand.u32 %v198, 2139095040
        %v388 = vshrl.u32 %v387, 23
        %v389 = vsub.s32 %v388, 127
        %v390 = vand.u32 2147483647, %v198
        %v391 = vand.u32 %v390, 8388607
        %v392 = vor.u32 %v391, 8388608
        %v393 = vsub.s32 0, %v392
        %v394 = vadd.s32 %v389, 1
        %vm395 = vcmp.gt.s32.totalorder %v394, 0
        %v396 = vsel %vm395, %v394, 0
        %v397 = vshrl.u32 %v396, 5
        %v398 = vand.u32 %v396, 31
        %v399 = vsub.s32 32, %v398
        %v400 = vshrl.u32 683565275, %v399
        %v401 = vshll.u32 683565275, %v398
        %v402 = vshrl.u32 2475754826, %v399
        %v403 = vor.u32 %v401, %v402
        %v404 = vshll.u32 2475754826, %v398
        %v405 = vshrl.u32 2131351028, %v399
        %v406 = vor.u32 %v404, %v405
        %v407 = vshll.u32 2131351028, %v398
        %v408 = vshrl.u32 2102212464, %v399
        %v409 = vor.u32 %v407, %v408
        %v410 = vshll.u32 2102212464, %v398
        %v411 = vshrl.u32 920167782, %v399
        %v412 = vor.u32 %v410, %v411
        %v413 = vshll.u32 920167782, %v398
        %v414 = vshrl.u32 1326507024, %v399
        %v415 = vor.u32 %v413, %v414
        %vm416 = vcmp.lt.s32.totalorder %v397, 1
        %vm417 = vcmp.lt.s32.totalorder %v397, 2
        %vm418 = vcmp.lt.s32.totalorder %v397, 3
        %vm419 = vcmp.lt.s32.totalorder %v397, 4
        %v420 = vsel %vm416, %v400, %v403
        %v421 = vsel %vm419, %v409, 2102212464
        %v422 = vsel %vm418, %v406, %v421
        %v423 = vsel %vm417, %v420, %v422
        %v424 = vsel %vm416, %v403, %v406
        %v425 = vsel %vm419, %v412, 920167782
        %v426 = vsel %vm418, %v409, %v425
        %v427 = vsel %vm417, %v424, %v426
        %v428 = vsel %vm416, %v406, %v409
        %v429 = vsel %vm419, %v415, 1326507024
        %v430 = vsel %vm418, %v412, %v429
        %v431 = vsel %vm417, %v428, %v430
        %v432 = vshll.u32 %v392, 8
        %v433 = vand.u32 %v432, 65535
        %v434 = vshrl.u32 %v432, 16
        %v435 = vand.u32 %v431, 65535
        %v436 = vshrl.u32 %v431, 16
        %v437 = vmul.u32 %v433, %v435
        %v438 = vmul.u32 %v433, %v436
        %v439 = vmul.u32 %v434, %v435
        %v440 = vmul.u32 %v434, %v436
        %v441 = vshll.u32 %v438, 16
        %v442 = vshrl.u32 %v438, 16
        %v443 = vshll.u32 %v439, 16
        %v444 = vshrl.u32 %v439, 16
        %vm445 = vc.u32 %v437, %v441
        %v446 = vsel %vm445, 1, 0
        %v447 = vadd.s32 %v437, %v441
        %v448 = vadd.s32 %v440, %v446
        %vm449 = vc.u32 %v447, %v443
        %v450 = vsel %vm449, 1, 0
        %v451 = vadd.s32 %v447, %v443
        %v452 = vadd.s32 %v448, %v450
        %v453 = vadd.s32 %v452, %v442
        %v454 = vadd.s32 %v453, %v444
        %v455 = vand.u32 %v432, 65535
        %v456 = vshrl.u32 %v432, 16
        %v457 = vand.u32 %v427, 65535
        %v458 = vshrl.u32 %v427, 16
        %v459 = vmul.u32 %v455, %v457
        %v460 = vmul.u32 %v455, %v458
        %v461 = vmul.u32 %v456, %v457
        %v462 = vmul.u32 %v456, %v458
        %v463 = vshll.u32 %v460, 16
        %v464 = vshrl.u32 %v460, 16
        %v465 = vshll.u32 %v461, 16
        %v466 = vshrl.u32 %v461, 16
        %vm467 = vc.u32 %v459, %v463
        %v468 = vsel %vm467, 1, 0
        %v469 = vadd.s32 %v459, %v463
        %v470 = vadd.s32 %v462, %v468
        %vm471 = vc.u32 %v469, %v465
        %v472 = vsel %vm471, 1, 0
        %v473 = vadd.s32 %v469, %v465
        %v474 = vadd.s32 %v470, %v472
        %v475 = vadd.s32 %v474, %v464
        %v476 = vadd.s32 %v475, %v466
        %v477 = vmul.u32 %v432, %v423
        %v478 = vadd.s32 %v454, %v473
        %vm479 = vc.u32 %v454, %v473
        %v480 = vadd.s32 %v476, 1
        %v481 = vsel %vm479, %v480, %v476
        %v482 = vadd.s32 %v477, %v481
        %v483 = vadd.s32 %v482, 536870912
        %v484 = vshrl.u32 %v483, 30
        %v485 = vshll.u32 %v484, 30
        %v486 = vsub.s32 %v482, %v485
        %vm487 = vcmp.lt.s32.totalorder %v486, 0
        %v488 = vsub.s32 0, %v486
        %v489 = vsel %vm487, %v488, %v486
        %v490 = vclz %v489
        %v491 = vsub.s32 %v490, 2
        %vm492 = vcmp.gt.s32.totalorder 0, %v491
        %v493 = vsel %vm492, 0, %v491
        %v494 = vsub.s32 32, %v493
        %v495 = vshll.u32 %v486, %v493
        %v496 = vshrl.u32 %v478, %v494
        %v497 = vor.u32 %v495, %v496
        %v498 = vsub.s32 4294967266, %v493
        %v499 = vadd.s32 %v498, 127
        %v500 = vshll.u32 %v499, 23
        %v501 = vor.u32 4788187, %v500
        %v502 = vand.u32 2147483647, %v501
        %v504 = vcvt.s32.f32 %v497
        %v505 = vmul.f32 %v504, %v502
        %v506 = vxor.u32 %v505, 2147483648
        %v507 = vsel %vm386, %v506, %v505
        %v508 = vsub.s32 4, %v484
        %v509 = vsel %vm386, %v508, %v484
        %v510 = vsel %vm385, %v198, %v507
        %v511 = vsel %vm385, 0, %v509
        %v512 = vmul.f32 %v510, %v510
        %v513 = vmul.f32 %v512, -0.001358992
        %v514 = vadd.f32 %v513, 0.041655596
        %v515 = vmul.f32 %v512, %v514
        %v516 = vadd.f32 %v515, -0.4999988
        %v517 = vmul.f32 %v512, %v516
        %v518 = vadd.f32 1.0, %v517
        %v519 = vmul.f32 %v510, %v510
        %v520 = vmul.f32 %v519, -0.00019511016
        %v521 = vadd.f32 %v520, 0.008332121
        %v522 = vmul.f32 %v519, %v521
        %v523 = vadd.f32 %v522, -0.16666654
        %v524 = vmul.f32 %v519, %v523
        %v525 = vadd.f32 %v524, 1.0
        %v526 = vmul.f32 %v525, %v510
        %vm527 = vweird.f32 %v198
        %v528 = vadd.s32 %v511, 3
        %v529 = vand.u32 %v528, 3
        %vm530 = vcmp.lt.s32.totalorder %v529, 2
        %vm531 = vcmp.eq.s32.totalorder %v529, 0
        %v532 = vxor.u32 %v526, 2147483648
        %v533 = vsel %vm531, %v518, %v532
        %vm534 = vcmp.eq.s32.totalorder %v529, 2
        %v535 = vxor.u32 %v518, 2147483648
        %v536 = vsel %vm534, %v535, %v526
        %v537 = vsel %vm530, %v533, %v536
        %v538 = vsel %vm527, nan, %v537
        %v539 = vand.u32 2147483647, %v199
        %vm540 = vcmp.le.f32.partialorder %v539, 0.7853982
        %vm541 = vcmp.lt.s32.totalorder %v199, 0
        %v542 = vand.u32 %v199, 2139095040
        %v543 = vshrl.u32 %v542, 23
        %v544 = vsub.s32 %v543, 127
        %v545 = vand.u32 2147483647, %v199
        %v546 = vand.u32 %v545, 8388607
        %v547 = vor.u32 %v546, 8388608
        %v548 = vsub.s32 0, %v547
        %v549 = vadd.s32 %v544, 1
        %vm550 = vcmp.gt.s32.totalorder %v549, 0
        %v551 = vsel %vm550, %v549, 0
        %v552 = vshrl.u32 %v551, 5
        %v553 = vand.u32 %v551, 31
        %v554 = vsub.s32 32, %v553
        %v555 = vshrl.u32 683565275, %v554
        %v556 = vshll.u32 683565275, %v553
        %v557 = vshrl.u32 2475754826, %v554
        %v558 = vor.u32 %v556, %v557
        %v559 = vshll.u32 2475754826, %v553
        %v560 = vshrl.u32 2131351028, %v554
        %v561 = vor.u32 %v559, %v560
        %v562 = vshll.u32 2131351028, %v553
        %v563 = vshrl.u32 2102212464, %v554
        %v564 = vor.u32 %v562, %v563
        %v565 = vshll.u32 2102212464, %v553
        %v566 = vshrl.u32 920167782, %v554
        %v567 = vor.u32 %v565, %v566
        %v568 = vshll.u32 920167782, %v553
        %v569 = vshrl.u32 1326507024, %v554
        %v570 = vor.u32 %v568, %v569
        %vm571 = vcmp.lt.s32.totalorder %v552, 1
        %vm572 = vcmp.lt.s32.totalorder %v552, 2
        %vm573 = vcmp.lt.s32.totalorder %v552, 3
        %vm574 = vcmp.lt.s32.totalorder %v552, 4
        %v575 = vsel %vm571, %v555, %v558
        %v576 = vsel %vm574, %v564, 2102212464
        %v577 = vsel %vm573, %v561, %v576
        %v578 = vsel %vm572, %v575, %v577
        %v579 = vsel %vm571, %v558, %v561
        %v580 = vsel %vm574, %v567, 920167782
        %v581 = vsel %vm573, %v564, %v580
        %v582 = vsel %vm572, %v579, %v581
        %v583 = vsel %vm571, %v561, %v564
        %v584 = vsel %vm574, %v570, 1326507024
        %v585 = vsel %vm573, %v567, %v584
        %v586 = vsel %vm572, %v583, %v585
        %v587 = vshll.u32 %v547, 8
        %v588 = vand.u32 %v587, 65535
        %v589 = vshrl.u32 %v587, 16
        %v590 = vand.u32 %v586, 65535
        %v591 = vshrl.u32 %v586, 16
        %v592 = vmul.u32 %v588, %v590
        %v593 = vmul.u32 %v588, %v591
        %v594 = vmul.u32 %v589, %v590
        %v595 = vmul.u32 %v589, %v591
        %v596 = vshll.u32 %v593, 16
        %v597 = vshrl.u32 %v593, 16
        %v598 = vshll.u32 %v594, 16
        %v599 = vshrl.u32 %v594, 16
        %vm600 = vc.u32 %v592, %v596
        %v601 = vsel %vm600, 1, 0
        %v602 = vadd.s32 %v592, %v596
        %v603 = vadd.s32 %v595, %v601
        %vm604 = vc.u32 %v602, %v598
        %v605 = vsel %vm604, 1, 0
        %v606 = vadd.s32 %v602, %v598
        %v607 = vadd.s32 %v603, %v605
        %v608 = vadd.s32 %v607, %v597
        %v609 = vadd.s32 %v608, %v599
        %v610 = vand.u32 %v587, 65535
        %v611 = vshrl.u32 %v587, 16
        %v612 = vand.u32 %v582, 65535
        %v613 = vshrl.u32 %v582, 16
        %v614 = vmul.u32 %v610, %v612
        %v615 = vmul.u32 %v610, %v613
        %v616 = vmul.u32 %v611, %v612
        %v617 = vmul.u32 %v611, %v613
        %v618 = vshll.u32 %v615, 16
        %v619 = vshrl.u32 %v615, 16
        %v620 = vshll.u32 %v616, 16
        %v621 = vshrl.u32 %v616, 16
        %vm622 = vc.u32 %v614, %v618
        %v623 = vsel %vm622, 1, 0
        %v624 = vadd.s32 %v614, %v618
        %v625 = vadd.s32 %v617, %v623
        %vm626 = vc.u32 %v624, %v620
        %v627 = vsel %vm626, 1, 0
        %v628 = vadd.s32 %v624, %v620
        %v629 = vadd.s32 %v625, %v627
        %v630 = vadd.s32 %v629, %v619
        %v631 = vadd.s32 %v630, %v621
        %v632 = vmul.u32 %v587, %v578
        %v633 = vadd.s32 %v609, %v628
        %vm634 = vc.u32 %v609, %v628
        %v635 = vadd.s32 %v631, 1
        %v636 = vsel %vm634, %v635, %v631
        %v637 = vadd.s32 %v632, %v636
        %v638 = vadd.s32 %v637, 536870912
        %v639 = vshrl.u32 %v638, 30
        %v640 = vshll.u32 %v639, 30
        %v641 = vsub.s32 %v637, %v640
        %vm642 = vcmp.lt.s32.totalorder %v641, 0
        %v643 = vsub.s32 0, %v641
        %v644 = vsel %vm642, %v643, %v641
        %v645 = vclz %v644
        %v646 = vsub.s32 %v645, 2
        %vm647 = vcmp.gt.s32.totalorder 0, %v646
        %v648 = vsel %vm647, 0, %v646
        %v649 = vsub.s32 32, %v648
        %v650 = vshll.u32 %v641, %v648
        %v651 = vshrl.u32 %v633, %v649
        %v652 = vor.u32 %v650, %v651
        %v653 = vsub.s32 4294967266, %v648
        %v654 = vadd.s32 %v653, 127
        %v655 = vshll.u32 %v654, 23
        %v656 = vor.u32 4788187, %v655
        %v657 = vand.u32 2147483647, %v656
        %v659 = vcvt.s32.f32 %v652
        %v660 = vmul.f32 %v659, %v657
        %v661 = vxor.u32 %v660, 2147483648
        %v662 = vsel %vm541, %v661, %v660
        %v663 = vsub.s32 4, %v639
        %v664 = vsel %vm541, %v663, %v639
        %v665 = vsel %vm540, %v199, %v662
        %v666 = vsel %vm540, 0, %v664
        %v667 = vmul.f32 %v665, %v665
        %v668 = vmul.f32 %v667, -0.001358992
        %v669 = vadd.f32 %v668, 0.041655596
        %v670 = vmul.f32 %v667, %v669
        %v671 = vadd.f32 %v670, -0.4999988
        %v672 = vmul.f32 %v667, %v671
        %v673 = vadd.f32 1.0, %v672
        %v674 = vmul.f32 %v665, %v665
        %v675 = vmul.f32 %v674, -0.00019511016
        %v676 = vadd.f32 %v675, 0.008332121
        %v677 = vmul.f32 %v674, %v676
        %v678 = vadd.f32 %v677, -0.16666654
        %v679 = vmul.f32 %v674, %v678
        %v680 = vadd.f32 %v679, 1.0
        %v681 = vmul.f32 %v680, %v665
        %vm682 = vweird.f32 %v199
        %v683 = vadd.s32 %v666, 3
        %v684 = vand.u32 %v683, 3
        %vm685 = vcmp.lt.s32.totalorder %v684, 2
        %vm686 = vcmp.eq.s32.totalorder %v684, 0
        %v687 = vxor.u32 %v681, 2147483648
        %v688 = vsel %vm686, %v673, %v687
        %vm689 = vcmp.eq.s32.totalorder %v684, 2
        %v690 = vxor.u32 %v673, 2147483648
        %v691 = vsel %vm689, %v690, %v681
        %v692 = vsel %vm685, %v688, %v691
        %v693 = vsel %vm682, nan, %v692
        %v694 = vand.u32 2147483647, %v200
        %vm695 = vcmp.le.f32.partialorder %v694, 0.7853982
        %vm696 = vcmp.lt.s32.totalorder %v200, 0
        %v697 = vand.u32 %v200, 2139095040
        %v698 = vshrl.u32 %v697, 23
        %v699 = vsub.s32 %v698, 127
        %v700 = vand.u32 2147483647, %v200
        %v701 = vand.u32 %v700, 8388607
        %v702 = vor.u32 %v701, 8388608
        %v703 = vsub.s32 0, %v702
        %v704 = vadd.s32 %v699, 1
        %vm705 = vcmp.gt.s32.totalorder %v704, 0
        %v706 = vsel %vm705, %v704, 0
        %v707 = vshrl.u32 %v706, 5
        %v708 = vand.u32 %v706, 31
        %v709 = vsub.s32 32, %v708
        %v710 = vshrl.u32 683565275, %v709
        %v711 = vshll.u32 683565275, %v708
        %v712 = vshrl.u32 2475754826, %v709
        %v713 = vor.u32 %v711, %v712
        %v714 = vshll.u32 2475754826, %v708
        %v715 = vshrl.u32 2131351028, %v709
        %v716 = vor.u32 %v714, %v715
        %v717 = vshll.u32 2131351028, %v708
        %v718 = vshrl.u32 2102212464, %v709
        %v719 = vor.u32 %v717, %v718
        %v720 = vshll.u32 2102212464, %v708
        %v721 = vshrl.u32 920167782, %v709
        %v722 = vor.u32 %v720, %v721
        %v723 = vshll.u32 920167782, %v708
        %v724 = vshrl.u32 1326507024, %v709
        %v725 = vor.u32 %v723, %v724
        %vm726 = vcmp.lt.s32.totalorder %v707, 1
        %vm727 = vcmp.lt.s32.totalorder %v707, 2
        %vm728 = vcmp.lt.s32.totalorder %v707, 3
        %vm729 = vcmp.lt.s32.totalorder %v707, 4
        %v730 = vsel %vm726, %v710, %v713
        %v731 = vsel %vm729, %v719, 2102212464
        %v732 = vsel %vm728, %v716, %v731
        %v733 = vsel %vm727, %v730, %v732
        %v734 = vsel %vm726, %v713, %v716
        %v735 = vsel %vm729, %v722, 920167782
        %v736 = vsel %vm728, %v719, %v735
        %v737 = vsel %vm727, %v734, %v736
        %v738 = vsel %vm726, %v716, %v719
        %v739 = vsel %vm729, %v725, 1326507024
        %v740 = vsel %vm728, %v722, %v739
        %v741 = vsel %vm727, %v738, %v740
        %v742 = vshll.u32 %v702, 8
        %v743 = vand.u32 %v742, 65535
        %v744 = vshrl.u32 %v742, 16
        %v745 = vand.u32 %v741, 65535
        %v746 = vshrl.u32 %v741, 16
        %v747 = vmul.u32 %v743, %v745
        %v748 = vmul.u32 %v743, %v746
        %v749 = vmul.u32 %v744, %v745
        %v750 = vmul.u32 %v744, %v746
        %v751 = vshll.u32 %v748, 16
        %v752 = vshrl.u32 %v748, 16
        %v753 = vshll.u32 %v749, 16
        %v754 = vshrl.u32 %v749, 16
        %vm755 = vc.u32 %v747, %v751
        %v756 = vsel %vm755, 1, 0
        %v757 = vadd.s32 %v747, %v751
        %v758 = vadd.s32 %v750, %v756
        %vm759 = vc.u32 %v757, %v753
        %v760 = vsel %vm759, 1, 0
        %v761 = vadd.s32 %v757, %v753
        %v762 = vadd.s32 %v758, %v760
        %v763 = vadd.s32 %v762, %v752
        %v764 = vadd.s32 %v763, %v754
        %v765 = vand.u32 %v742, 65535
        %v766 = vshrl.u32 %v742, 16
        %v767 = vand.u32 %v737, 65535
        %v768 = vshrl.u32 %v737, 16
        %v769 = vmul.u32 %v765, %v767
        %v770 = vmul.u32 %v765, %v768
        %v771 = vmul.u32 %v766, %v767
        %v772 = vmul.u32 %v766, %v768
        %v773 = vshll.u32 %v770, 16
        %v774 = vshrl.u32 %v770, 16
        %v775 = vshll.u32 %v771, 16
        %v776 = vshrl.u32 %v771, 16
        %vm777 = vc.u32 %v769, %v773
        %v778 = vsel %vm777, 1, 0
        %v779 = vadd.s32 %v769, %v773
        %v780 = vadd.s32 %v772, %v778
        %vm781 = vc.u32 %v779, %v775
        %v782 = vsel %vm781, 1, 0
        %v783 = vadd.s32 %v779, %v775
        %v784 = vadd.s32 %v780, %v782
        %v785 = vadd.s32 %v784, %v774
        %v786 = vadd.s32 %v785, %v776
        %v787 = vmul.u32 %v742, %v733
        %v788 = vadd.s32 %v764, %v783
        %vm789 = vc.u32 %v764, %v783
        %v790 = vadd.s32 %v786, 1
        %v791 = vsel %vm789, %v790, %v786
        %v792 = vadd.s32 %v787, %v791
        %v793 = vadd.s32 %v792, 536870912
        %v794 = vshrl.u32 %v793, 30
        %v795 = vshll.u32 %v794, 30
        %v796 = vsub.s32 %v792, %v795
        %vm797 = vcmp.lt.s32.totalorder %v796, 0
        %v798 = vsub.s32 0, %v796
        %v799 = vsel %vm797, %v798, %v796
        %v800 = vclz %v799
        %v801 = vsub.s32 %v800, 2
        %vm802 = vcmp.gt.s32.totalorder 0, %v801
        %v803 = vsel %vm802, 0, %v801
        %v804 = vsub.s32 32, %v803
        %v805 = vshll.u32 %v796, %v803
        %v806 = vshrl.u32 %v788, %v804
        %v807 = vor.u32 %v805, %v806
        %v808 = vsub.s32 4294967266, %v803
        %v809 = vadd.s32 %v808, 127
        %v810 = vshll.u32 %v809, 23
        %v811 = vor.u32 4788187, %v810
        %v812 = vand.u32 2147483647, %v811
        %v814 = vcvt.s32.f32 %v807
        %v815 = vmul.f32 %v814, %v812
        %v816 = vxor.u32 %v815, 2147483648
        %v817 = vsel %vm696, %v816, %v815
        %v818 = vsub.s32 4, %v794
        %v819 = vsel %vm696, %v818, %v794
        %v820 = vsel %vm695, %v200, %v817
        %v821 = vsel %vm695, 0, %v819
        %v822 = vmul.f32 %v820, %v820
        %v823 = vmul.f32 %v822, -0.001358992
        %v824 = vadd.f32 %v823, 0.041655596
        %v825 = vmul.f32 %v822, %v824
        %v826 = vadd.f32 %v825, -0.4999988
        %v827 = vmul.f32 %v822, %v826
        %v828 = vadd.f32 1.0, %v827
        %v829 = vmul.f32 %v820, %v820
        %v830 = vmul.f32 %v829, -0.00019511016
        %v831 = vadd.f32 %v830, 0.008332121
        %v832 = vmul.f32 %v829, %v831
        %v833 = vadd.f32 %v832, -0.16666654
        %v834 = vmul.f32 %v829, %v833
        %v835 = vadd.f32 %v834, 1.0
        %v836 = vmul.f32 %v835, %v820
        %vm837 = vweird.f32 %v200
        %v838 = vadd.s32 %v821, 3
        %v839 = vand.u32 %v838, 3
        %vm840 = vcmp.lt.s32.totalorder %v839, 2
        %vm841 = vcmp.eq.s32.totalorder %v839, 0
        %v842 = vxor.u32 %v836, 2147483648
        %v843 = vsel %vm841, %v828, %v842
        %vm844 = vcmp.eq.s32.totalorder %v839, 2
        %v845 = vxor.u32 %v828, 2147483648
        %v846 = vsel %vm844, %v845, %v836
        %v847 = vsel %vm840, %v843, %v846
        %v848 = vsel %vm837, nan, %v847
        %v849 = vand.u32 2147483647, %v201
        %vm850 = vcmp.le.f32.partialorder %v849, 0.7853982
        %vm851 = vcmp.lt.s32.totalorder %v201, 0
        %v852 = vand.u32 %v201, 2139095040
        %v853 = vshrl.u32 %v852, 23
        %v854 = vsub.s32 %v853, 127
        %v855 = vand.u32 2147483647, %v201
        %v856 = vand.u32 %v855, 8388607
        %v857 = vor.u32 %v856, 8388608
        %v858 = vsub.s32 0, %v857
        %v859 = vadd.s32 %v854, 1
        %vm860 = vcmp.gt.s32.totalorder %v859, 0
        %v861 = vsel %vm860, %v859, 0
        %v862 = vshrl.u32 %v861, 5
        %v863 = vand.u32 %v861, 31
        %v864 = vsub.s32 32, %v863
        %v865 = vshrl.u32 683565275, %v864
        %v866 = vshll.u32 683565275, %v863
        %v867 = vshrl.u32 2475754826, %v864
        %v868 = vor.u32 %v866, %v867
        %v869 = vshll.u32 2475754826, %v863
        %v870 = vshrl.u32 2131351028, %v864
        %v871 = vor.u32 %v869, %v870
        %v872 = vshll.u32 2131351028, %v863
        %v873 = vshrl.u32 2102212464, %v864
        %v874 = vor.u32 %v872, %v873
        %v875 = vshll.u32 2102212464, %v863
        %v876 = vshrl.u32 920167782, %v864
        %v877 = vor.u32 %v875, %v876
        %v878 = vshll.u32 920167782, %v863
        %v879 = vshrl.u32 1326507024, %v864
        %v880 = vor.u32 %v878, %v879
        %vm881 = vcmp.lt.s32.totalorder %v862, 1
        %vm882 = vcmp.lt.s32.totalorder %v862, 2
        %vm883 = vcmp.lt.s32.totalorder %v862, 3
        %vm884 = vcmp.lt.s32.totalorder %v862, 4
        %v885 = vsel %vm881, %v865, %v868
        %v886 = vsel %vm884, %v874, 2102212464
        %v887 = vsel %vm883, %v871, %v886
        %v888 = vsel %vm882, %v885, %v887
        %v889 = vsel %vm881, %v868, %v871
        %v890 = vsel %vm884, %v877, 920167782
        %v891 = vsel %vm883, %v874, %v890
        %v892 = vsel %vm882, %v889, %v891
        %v893 = vsel %vm881, %v871, %v874
        %v894 = vsel %vm884, %v880, 1326507024
        %v895 = vsel %vm883, %v877, %v894
        %v896 = vsel %vm882, %v893, %v895
        %v897 = vshll.u32 %v857, 8
        %v898 = vand.u32 %v897, 65535
        %v899 = vshrl.u32 %v897, 16
        %v900 = vand.u32 %v896, 65535
        %v901 = vshrl.u32 %v896, 16
        %v902 = vmul.u32 %v898, %v900
        %v903 = vmul.u32 %v898, %v901
        %v904 = vmul.u32 %v899, %v900
        %v905 = vmul.u32 %v899, %v901
        %v906 = vshll.u32 %v903, 16
        %v907 = vshrl.u32 %v903, 16
        %v908 = vshll.u32 %v904, 16
        %v909 = vshrl.u32 %v904, 16
        %vm910 = vc.u32 %v902, %v906
        %v911 = vsel %vm910, 1, 0
        %v912 = vadd.s32 %v902, %v906
        %v913 = vadd.s32 %v905, %v911
        %vm914 = vc.u32 %v912, %v908
        %v915 = vsel %vm914, 1, 0
        %v916 = vadd.s32 %v912, %v908
        %v917 = vadd.s32 %v913, %v915
        %v918 = vadd.s32 %v917, %v907
        %v919 = vadd.s32 %v918, %v909
        %v920 = vand.u32 %v897, 65535
        %v921 = vshrl.u32 %v897, 16
        %v922 = vand.u32 %v892, 65535
        %v923 = vshrl.u32 %v892, 16
        %v924 = vmul.u32 %v920, %v922
        %v925 = vmul.u32 %v920, %v923
        %v926 = vmul.u32 %v921, %v922
        %v927 = vmul.u32 %v921, %v923
        %v928 = vshll.u32 %v925, 16
        %v929 = vshrl.u32 %v925, 16
        %v930 = vshll.u32 %v926, 16
        %v931 = vshrl.u32 %v926, 16
        %vm932 = vc.u32 %v924, %v928
        %v933 = vsel %vm932, 1, 0
        %v934 = vadd.s32 %v924, %v928
        %v935 = vadd.s32 %v927, %v933
        %vm936 = vc.u32 %v934, %v930
        %v937 = vsel %vm936, 1, 0
        %v938 = vadd.s32 %v934, %v930
        %v939 = vadd.s32 %v935, %v937
        %v940 = vadd.s32 %v939, %v929
        %v941 = vadd.s32 %v940, %v931
        %v942 = vmul.u32 %v897, %v888
        %v943 = vadd.s32 %v919, %v938
        %vm944 = vc.u32 %v919, %v938
        %v945 = vadd.s32 %v941, 1
        %v946 = vsel %vm944, %v945, %v941
        %v947 = vadd.s32 %v942, %v946
        %v948 = vadd.s32 %v947, 536870912
        %v949 = vshrl.u32 %v948, 30
        %v950 = vshll.u32 %v949, 30
        %v951 = vsub.s32 %v947, %v950
        %vm952 = vcmp.lt.s32.totalorder %v951, 0
        %v953 = vsub.s32 0, %v951
        %v954 = vsel %vm952, %v953, %v951
        %v955 = vclz %v954
        %v956 = vsub.s32 %v955, 2
        %vm957 = vcmp.gt.s32.totalorder 0, %v956
        %v958 = vsel %vm957, 0, %v956
        %v959 = vsub.s32 32, %v958
        %v960 = vshll.u32 %v951, %v958
        %v961 = vshrl.u32 %v943, %v959
        %v962 = vor.u32 %v960, %v961
        %v963 = vsub.s32 4294967266, %v958
        %v964 = vadd.s32 %v963, 127
        %v965 = vshll.u32 %v964, 23
        %v966 = vor.u32 4788187, %v965
        %v967 = vand.u32 2147483647, %v966
        %v969 = vcvt.s32.f32 %v962
        %v970 = vmul.f32 %v969, %v967
        %v971 = vxor.u32 %v970, 2147483648
        %v972 = vsel %vm851, %v971, %v970
        %v973 = vsub.s32 4, %v949
        %v974 = vsel %vm851, %v973, %v949
        %v975 = vsel %vm850, %v201, %v972
        %v976 = vsel %vm850, 0, %v974
        %v977 = vmul.f32 %v975, %v975
        %v978 = vmul.f32 %v977, -0.001358992
        %v979 = vadd.f32 %v978, 0.041655596
        %v980 = vmul.f32 %v977, %v979
        %v981 = vadd.f32 %v980, -0.4999988
        %v982 = vmul.f32 %v977, %v981
        %v983 = vadd.f32 1.0, %v982
        %v984 = vmul.f32 %v975, %v975
        %v985 = vmul.f32 %v984, -0.00019511016
        %v986 = vadd.f32 %v985, 0.008332121
        %v987 = vmul.f32 %v984, %v986
        %v988 = vadd.f32 %v987, -0.16666654
        %v989 = vmul.f32 %v984, %v988
        %v990 = vadd.f32 %v989, 1.0
        %v991 = vmul.f32 %v990, %v975
        %vm992 = vweird.f32 %v201
        %v993 = vadd.s32 %v976, 3
        %v994 = vand.u32 %v993, 3
        %vm995 = vcmp.lt.s32.totalorder %v994, 2
        %vm996 = vcmp.eq.s32.totalorder %v994, 0
        %v997 = vxor.u32 %v991, 2147483648
        %v998 = vsel %vm996, %v983, %v997
        %vm999 = vcmp.eq.s32.totalorder %v994, 2
        %v1000 = vxor.u32 %v983, 2147483648
        %v1001 = vsel %vm999, %v1000, %v991
        %v1002 = vsel %vm995, %v998, %v1001
        %v1003 = vsel %vm992, nan, %v1002
        %v1004 = vand.u32 2147483647, %v202
        %vm1005 = vcmp.le.f32.partialorder %v1004, 0.7853982
        %vm1006 = vcmp.lt.s32.totalorder %v202, 0
        %v1007 = vand.u32 %v202, 2139095040
        %v1008 = vshrl.u32 %v1007, 23
        %v1009 = vsub.s32 %v1008, 127
        %v1010 = vand.u32 2147483647, %v202
        %v1011 = vand.u32 %v1010, 8388607
        %v1012 = vor.u32 %v1011, 8388608
        %v1013 = vsub.s32 0, %v1012
        %v1014 = vadd.s32 %v1009, 1
        %vm1015 = vcmp.gt.s32.totalorder %v1014, 0
        %v1016 = vsel %vm1015, %v1014, 0
        %v1017 = vshrl.u32 %v1016, 5
        %v1018 = vand.u32 %v1016, 31
        %v1019 = vsub.s32 32, %v1018
        %v1020 = vshrl.u32 683565275, %v1019
        %v1021 = vshll.u32 683565275, %v1018
        %v1022 = vshrl.u32 2475754826, %v1019
        %v1023 = vor.u32 %v1021, %v1022
        %v1024 = vshll.u32 2475754826, %v1018
        %v1025 = vshrl.u32 2131351028, %v1019
        %v1026 = vor.u32 %v1024, %v1025
        %v1027 = vshll.u32 2131351028, %v1018
        %v1028 = vshrl.u32 2102212464, %v1019
        %v1029 = vor.u32 %v1027, %v1028
        %v1030 = vshll.u32 2102212464, %v1018
        %v1031 = vshrl.u32 920167782, %v1019
        %v1032 = vor.u32 %v1030, %v1031
        %v1033 = vshll.u32 920167782, %v1018
        %v1034 = vshrl.u32 1326507024, %v1019
        %v1035 = vor.u32 %v1033, %v1034
        %vm1036 = vcmp.lt.s32.totalorder %v1017, 1
        %vm1037 = vcmp.lt.s32.totalorder %v1017, 2
        %vm1038 = vcmp.lt.s32.totalorder %v1017, 3
        %vm1039 = vcmp.lt.s32.totalorder %v1017, 4
        %v1040 = vsel %vm1036, %v1020, %v1023
        %v1041 = vsel %vm1039, %v1029, 2102212464
        %v1042 = vsel %vm1038, %v1026, %v1041
        %v1043 = vsel %vm1037, %v1040, %v1042
        %v1044 = vsel %vm1036, %v1023, %v1026
        %v1045 = vsel %vm1039, %v1032, 920167782
        %v1046 = vsel %vm1038, %v1029, %v1045
        %v1047 = vsel %vm1037, %v1044, %v1046
        %v1048 = vsel %vm1036, %v1026, %v1029
        %v1049 = vsel %vm1039, %v1035, 1326507024
        %v1050 = vsel %vm1038, %v1032, %v1049
        %v1051 = vsel %vm1037, %v1048, %v1050
        %v1052 = vshll.u32 %v1012, 8
        %v1053 = vand.u32 %v1052, 65535
        %v1054 = vshrl.u32 %v1052, 16
        %v1055 = vand.u32 %v1051, 65535
        %v1056 = vshrl.u32 %v1051, 16
        %v1057 = vmul.u32 %v1053, %v1055
        %v1058 = vmul.u32 %v1053, %v1056
        %v1059 = vmul.u32 %v1054, %v1055
        %v1060 = vmul.u32 %v1054, %v1056
        %v1061 = vshll.u32 %v1058, 16
        %v1062 = vshrl.u32 %v1058, 16
        %v1063 = vshll.u32 %v1059, 16
        %v1064 = vshrl.u32 %v1059, 16
        %vm1065 = vc.u32 %v1057, %v1061
        %v1066 = vsel %vm1065, 1, 0
        %v1067 = vadd.s32 %v1057, %v1061
        %v1068 = vadd.s32 %v1060, %v1066
        %vm1069 = vc.u32 %v1067, %v1063
        %v1070 = vsel %vm1069, 1, 0
        %v1071 = vadd.s32 %v1067, %v1063
        %v1072 = vadd.s32 %v1068, %v1070
        %v1073 = vadd.s32 %v1072, %v1062
        %v1074 = vadd.s32 %v1073, %v1064
        %v1075 = vand.u32 %v1052, 65535
        %v1076 = vshrl.u32 %v1052, 16
        %v1077 = vand.u32 %v1047, 65535
        %v1078 = vshrl.u32 %v1047, 16
        %v1079 = vmul.u32 %v1075, %v1077
        %v1080 = vmul.u32 %v1075, %v1078
        %v1081 = vmul.u32 %v1076, %v1077
        %v1082 = vmul.u32 %v1076, %v1078
        %v1083 = vshll.u32 %v1080, 16
        %v1084 = vshrl.u32 %v1080, 16
        %v1085 = vshll.u32 %v1081, 16
        %v1086 = vshrl.u32 %v1081, 16
        %vm1087 = vc.u32 %v1079, %v1083
        %v1088 = vsel %vm1087, 1, 0
        %v1089 = vadd.s32 %v1079, %v1083
        %v1090 = vadd.s32 %v1082, %v1088
        %vm1091 = vc.u32 %v1089, %v1085
        %v1092 = vsel %vm1091, 1, 0
        %v1093 = vadd.s32 %v1089, %v1085
        %v1094 = vadd.s32 %v1090, %v1092
        %v1095 = vadd.s32 %v1094, %v1084
        %v1096 = vadd.s32 %v1095, %v1086
        %v1097 = vmul.u32 %v1052, %v1043
        %v1098 = vadd.s32 %v1074, %v1093
        %vm1099 = vc.u32 %v1074, %v1093
        %v1100 = vadd.s32 %v1096, 1
        %v1101 = vsel %vm1099, %v1100, %v1096
        %v1102 = vadd.s32 %v1097, %v1101
        %v1103 = vadd.s32 %v1102, 536870912
        %v1104 = vshrl.u32 %v1103, 30
        %v1105 = vshll.u32 %v1104, 30
        %v1106 = vsub.s32 %v1102, %v1105
        %vm1107 = vcmp.lt.s32.totalorder %v1106, 0
        %v1108 = vsub.s32 0, %v1106
        %v1109 = vsel %vm1107, %v1108, %v1106
        %v1110 = vclz %v1109
        %v1111 = vsub.s32 %v1110, 2
        %vm1112 = vcmp.gt.s32.totalorder 0, %v1111
        %v1113 = vsel %vm1112, 0, %v1111
        %v1114 = vsub.s32 32, %v1113
        %v1115 = vshll.u32 %v1106, %v1113
        %v1116 = vshrl.u32 %v1098, %v1114
        %v1117 = vor.u32 %v1115, %v1116
        %v1118 = vsub.s32 4294967266, %v1113
        %v1119 = vadd.s32 %v1118, 127
        %v1120 = vshll.u32 %v1119, 23
        %v1121 = vor.u32 4788187, %v1120
        %v1122 = vand.u32 2147483647, %v1121
        %v1124 = vcvt.s32.f32 %v1117
        %v1125 = vmul.f32 %v1124, %v1122
        %v1126 = vxor.u32 %v1125, 2147483648
        %v1127 = vsel %vm1006, %v1126, %v1125
        %v1128 = vsub.s32 4, %v1104
        %v1129 = vsel %vm1006, %v1128, %v1104
        %v1130 = vsel %vm1005, %v202, %v1127
        %v1131 = vsel %vm1005, 0, %v1129
        %v1132 = vmul.f32 %v1130, %v1130
        %v1133 = vmul.f32 %v1132, -0.001358992
        %v1134 = vadd.f32 %v1133, 0.041655596
        %v1135 = vmul.f32 %v1132, %v1134
        %v1136 = vadd.f32 %v1135, -0.4999988
        %v1137 = vmul.f32 %v1132, %v1136
        %v1138 = vadd.f32 1.0, %v1137
        %v1139 = vmul.f32 %v1130, %v1130
        %v1140 = vmul.f32 %v1139, -0.00019511016
        %v1141 = vadd.f32 %v1140, 0.008332121
        %v1142 = vmul.f32 %v1139, %v1141
        %v1143 = vadd.f32 %v1142, -0.16666654
        %v1144 = vmul.f32 %v1139, %v1143
        %v1145 = vadd.f32 %v1144, 1.0
        %v1146 = vmul.f32 %v1145, %v1130
        %vm1147 = vweird.f32 %v202
        %v1148 = vadd.s32 %v1131, 3
        %v1149 = vand.u32 %v1148, 3
        %vm1150 = vcmp.lt.s32.totalorder %v1149, 2
        %vm1151 = vcmp.eq.s32.totalorder %v1149, 0
        %v1152 = vxor.u32 %v1146, 2147483648
        %v1153 = vsel %vm1151, %v1138, %v1152
        %vm1154 = vcmp.eq.s32.totalorder %v1149, 2
        %v1155 = vxor.u32 %v1138, 2147483648
        %v1156 = vsel %vm1154, %v1155, %v1146
        %v1157 = vsel %vm1150, %v1153, %v1156
        %v1158 = vsel %vm1147, nan, %v1157
        %v1159 = vand.u32 2147483647, %v203
        %vm1160 = vcmp.le.f32.partialorder %v1159, 0.7853982
        %vm1161 = vcmp.lt.s32.totalorder %v203, 0
        %v1162 = vand.u32 %v203, 2139095040
        %v1163 = vshrl.u32 %v1162, 23
        %v1164 = vsub.s32 %v1163, 127
        %v1165 = vand.u32 2147483647, %v203
        %v1166 = vand.u32 %v1165, 8388607
        %v1167 = vor.u32 %v1166, 8388608
        %v1168 = vsub.s32 0, %v1167
        %v1169 = vadd.s32 %v1164, 1
        %vm1170 = vcmp.gt.s32.totalorder %v1169, 0
        %v1171 = vsel %vm1170, %v1169, 0
        %v1172 = vshrl.u32 %v1171, 5
        %v1173 = vand.u32 %v1171, 31
        %v1174 = vsub.s32 32, %v1173
        %v1175 = vshrl.u32 683565275, %v1174
        %v1176 = vshll.u32 683565275, %v1173
        %v1177 = vshrl.u32 2475754826, %v1174
        %v1178 = vor.u32 %v1176, %v1177
        %v1179 = vshll.u32 2475754826, %v1173
        %v1180 = vshrl.u32 2131351028, %v1174
        %v1181 = vor.u32 %v1179, %v1180
        %v1182 = vshll.u32 2131351028, %v1173
        %v1183 = vshrl.u32 2102212464, %v1174
        %v1184 = vor.u32 %v1182, %v1183
        %v1185 = vshll.u32 2102212464, %v1173
        %v1186 = vshrl.u32 920167782, %v1174
        %v1187 = vor.u32 %v1185, %v1186
        %v1188 = vshll.u32 920167782, %v1173
        %v1189 = vshrl.u32 1326507024, %v1174
        %v1190 = vor.u32 %v1188, %v1189
        %vm1191 = vcmp.lt.s32.totalorder %v1172, 1
        %vm1192 = vcmp.lt.s32.totalorder %v1172, 2
        %vm1193 = vcmp.lt.s32.totalorder %v1172, 3
        %vm1194 = vcmp.lt.s32.totalorder %v1172, 4
        %v1195 = vsel %vm1191, %v1175, %v1178
        %v1196 = vsel %vm1194, %v1184, 2102212464
        %v1197 = vsel %vm1193, %v1181, %v1196
        %v1198 = vsel %vm1192, %v1195, %v1197
        %v1199 = vsel %vm1191, %v1178, %v1181
        %v1200 = vsel %vm1194, %v1187, 920167782
        %v1201 = vsel %vm1193, %v1184, %v1200
        %v1202 = vsel %vm1192, %v1199, %v1201
        %v1203 = vsel %vm1191, %v1181, %v1184
        %v1204 = vsel %vm1194, %v1190, 1326507024
        %v1205 = vsel %vm1193, %v1187, %v1204
        %v1206 = vsel %vm1192, %v1203, %v1205
        %v1207 = vshll.u32 %v1167, 8
        %v1208 = vand.u32 %v1207, 65535
        %v1209 = vshrl.u32 %v1207, 16
        %v1210 = vand.u32 %v1206, 65535
        %v1211 = vshrl.u32 %v1206, 16
        %v1212 = vmul.u32 %v1208, %v1210
        %v1213 = vmul.u32 %v1208, %v1211
        %v1214 = vmul.u32 %v1209, %v1210
        %v1215 = vmul.u32 %v1209, %v1211
        %v1216 = vshll.u32 %v1213, 16
        %v1217 = vshrl.u32 %v1213, 16
        %v1218 = vshll.u32 %v1214, 16
        %v1219 = vshrl.u32 %v1214, 16
        %vm1220 = vc.u32 %v1212, %v1216
        %v1221 = vsel %vm1220, 1, 0
        %v1222 = vadd.s32 %v1212, %v1216
        %v1223 = vadd.s32 %v1215, %v1221
        %vm1224 = vc.u32 %v1222, %v1218
        %v1225 = vsel %vm1224, 1, 0
        %v1226 = vadd.s32 %v1222, %v1218
        %v1227 = vadd.s32 %v1223, %v1225
        %v1228 = vadd.s32 %v1227, %v1217
        %v1229 = vadd.s32 %v1228, %v1219
        %v1230 = vand.u32 %v1207, 65535
        %v1231 = vshrl.u32 %v1207, 16
        %v1232 = vand.u32 %v1202, 65535
        %v1233 = vshrl.u32 %v1202, 16
        %v1234 = vmul.u32 %v1230, %v1232
        %v1235 = vmul.u32 %v1230, %v1233
        %v1236 = vmul.u32 %v1231, %v1232
        %v1237 = vmul.u32 %v1231, %v1233
        %v1238 = vshll.u32 %v1235, 16
        %v1239 = vshrl.u32 %v1235, 16
        %v1240 = vshll.u32 %v1236, 16
        %v1241 = vshrl.u32 %v1236, 16
        %vm1242 = vc.u32 %v1234, %v1238
        %v1243 = vsel %vm1242, 1, 0
        %v1244 = vadd.s32 %v1234, %v1238
        %v1245 = vadd.s32 %v1237, %v1243
        %vm1246 = vc.u32 %v1244, %v1240
        %v1247 = vsel %vm1246, 1, 0
        %v1248 = vadd.s32 %v1244, %v1240
        %v1249 = vadd.s32 %v1245, %v1247
        %v1250 = vadd.s32 %v1249, %v1239
        %v1251 = vadd.s32 %v1250, %v1241
        %v1252 = vmul.u32 %v1207, %v1198
        %v1253 = vadd.s32 %v1229, %v1248
        %vm1254 = vc.u32 %v1229, %v1248
        %v1255 = vadd.s32 %v1251, 1
        %v1256 = vsel %vm1254, %v1255, %v1251
        %v1257 = vadd.s32 %v1252, %v1256
        %v1258 = vadd.s32 %v1257, 536870912
        %v1259 = vshrl.u32 %v1258, 30
        %v1260 = vshll.u32 %v1259, 30
        %v1261 = vsub.s32 %v1257, %v1260
        %vm1262 = vcmp.lt.s32.totalorder %v1261, 0
        %v1263 = vsub.s32 0, %v1261
        %v1264 = vsel %vm1262, %v1263, %v1261
        %v1265 = vclz %v1264
        %v1266 = vsub.s32 %v1265, 2
        %vm1267 = vcmp.gt.s32.totalorder 0, %v1266
        %v1268 = vsel %vm1267, 0, %v1266
        %v1269 = vsub.s32 32, %v1268
        %v1270 = vshll.u32 %v1261, %v1268
        %v1271 = vshrl.u32 %v1253, %v1269
        %v1272 = vor.u32 %v1270, %v1271
        %v1273 = vsub.s32 4294967266, %v1268
        %v1274 = vadd.s32 %v1273, 127
        %v1275 = vshll.u32 %v1274, 23
        %v1276 = vor.u32 4788187, %v1275
        %v1277 = vand.u32 2147483647, %v1276
        %v1279 = vcvt.s32.f32 %v1272
        %v1280 = vmul.f32 %v1279, %v1277
        %v1281 = vxor.u32 %v1280, 2147483648
        %v1282 = vsel %vm1161, %v1281, %v1280
        %v1283 = vsub.s32 4, %v1259
        %v1284 = vsel %vm1161, %v1283, %v1259
        %v1285 = vsel %vm1160, %v203, %v1282
        %v1286 = vsel %vm1160, 0, %v1284
        %v1287 = vmul.f32 %v1285, %v1285
        %v1288 = vmul.f32 %v1287, -0.001358992
        %v1289 = vadd.f32 %v1288, 0.041655596
        %v1290 = vmul.f32 %v1287, %v1289
        %v1291 = vadd.f32 %v1290, -0.4999988
        %v1292 = vmul.f32 %v1287, %v1291
        %v1293 = vadd.f32 1.0, %v1292
        %v1294 = vmul.f32 %v1285, %v1285
        %v1295 = vmul.f32 %v1294, -0.00019511016
        %v1296 = vadd.f32 %v1295, 0.008332121
        %v1297 = vmul.f32 %v1294, %v1296
        %v1298 = vadd.f32 %v1297, -0.16666654
        %v1299 = vmul.f32 %v1294, %v1298
        %v1300 = vadd.f32 %v1299, 1.0
        %v1301 = vmul.f32 %v1300, %v1285
        %vm1302 = vweird.f32 %v203
        %v1303 = vadd.s32 %v1286, 3
        %v1304 = vand.u32 %v1303, 3
        %vm1305 = vcmp.lt.s32.totalorder %v1304, 2
        %vm1306 = vcmp.eq.s32.totalorder %v1304, 0
        %v1307 = vxor.u32 %v1301, 2147483648
        %v1308 = vsel %vm1306, %v1293, %v1307
        %vm1309 = vcmp.eq.s32.totalorder %v1304, 2
        %v1310 = vxor.u32 %v1293, 2147483648
        %v1311 = vsel %vm1309, %v1310, %v1301
        %v1312 = vsel %vm1305, %v1308, %v1311
        %v1313 = vsel %vm1302, nan, %v1312
        %v1314 = vand.u32 2147483647, %v204
        %vm1315 = vcmp.le.f32.partialorder %v1314, 0.7853982
        %vm1316 = vcmp.lt.s32.totalorder %v204, 0
        %v1317 = vand.u32 %v204, 2139095040
        %v1318 = vshrl.u32 %v1317, 23
        %v1319 = vsub.s32 %v1318, 127
        %v1320 = vand.u32 2147483647, %v204
        %v1321 = vand.u32 %v1320, 8388607
        %v1322 = vor.u32 %v1321, 8388608
        %v1323 = vsub.s32 0, %v1322
        %v1324 = vadd.s32 %v1319, 1
        %vm1325 = vcmp.gt.s32.totalorder %v1324, 0
        %v1326 = vsel %vm1325, %v1324, 0
        %v1327 = vshrl.u32 %v1326, 5
        %v1328 = vand.u32 %v1326, 31
        %v1329 = vsub.s32 32, %v1328
        %v1330 = vshrl.u32 683565275, %v1329
        %v1331 = vshll.u32 683565275, %v1328
        %v1332 = vshrl.u32 2475754826, %v1329
        %v1333 = vor.u32 %v1331, %v1332
        %v1334 = vshll.u32 2475754826, %v1328
        %v1335 = vshrl.u32 2131351028, %v1329
        %v1336 = vor.u32 %v1334, %v1335
        %v1337 = vshll.u32 2131351028, %v1328
        %v1338 = vshrl.u32 2102212464, %v1329
        %v1339 = vor.u32 %v1337, %v1338
        %v1340 = vshll.u32 2102212464, %v1328
        %v1341 = vshrl.u32 920167782, %v1329
        %v1342 = vor.u32 %v1340, %v1341
        %v1343 = vshll.u32 920167782, %v1328
        %v1344 = vshrl.u32 1326507024, %v1329
        %v1345 = vor.u32 %v1343, %v1344
        %vm1346 = vcmp.lt.s32.totalorder %v1327, 1
        %vm1347 = vcmp.lt.s32.totalorder %v1327, 2
        %vm1348 = vcmp.lt.s32.totalorder %v1327, 3
        %vm1349 = vcmp.lt.s32.totalorder %v1327, 4
        %v1350 = vsel %vm1346, %v1330, %v1333
        %v1351 = vsel %vm1349, %v1339, 2102212464
        %v1352 = vsel %vm1348, %v1336, %v1351
        %v1353 = vsel %vm1347, %v1350, %v1352
        %v1354 = vsel %vm1346, %v1333, %v1336
        %v1355 = vsel %vm1349, %v1342, 920167782
        %v1356 = vsel %vm1348, %v1339, %v1355
        %v1357 = vsel %vm1347, %v1354, %v1356
        %v1358 = vsel %vm1346, %v1336, %v1339
        %v1359 = vsel %vm1349, %v1345, 1326507024
        %v1360 = vsel %vm1348, %v1342, %v1359
        %v1361 = vsel %vm1347, %v1358, %v1360
        %v1362 = vshll.u32 %v1322, 8
        %v1363 = vand.u32 %v1362, 65535
        %v1364 = vshrl.u32 %v1362, 16
        %v1365 = vand.u32 %v1361, 65535
        %v1366 = vshrl.u32 %v1361, 16
        %v1367 = vmul.u32 %v1363, %v1365
        %v1368 = vmul.u32 %v1363, %v1366
        %v1369 = vmul.u32 %v1364, %v1365
        %v1370 = vmul.u32 %v1364, %v1366
        %v1371 = vshll.u32 %v1368, 16
        %v1372 = vshrl.u32 %v1368, 16
        %v1373 = vshll.u32 %v1369, 16
        %v1374 = vshrl.u32 %v1369, 16
        %vm1375 = vc.u32 %v1367, %v1371
        %v1376 = vsel %vm1375, 1, 0
        %v1377 = vadd.s32 %v1367, %v1371
        %v1378 = vadd.s32 %v1370, %v1376
        %vm1379 = vc.u32 %v1377, %v1373
        %v1380 = vsel %vm1379, 1, 0
        %v1381 = vadd.s32 %v1377, %v1373
        %v1382 = vadd.s32 %v1378, %v1380
        %v1383 = vadd.s32 %v1382, %v1372
        %v1384 = vadd.s32 %v1383, %v1374
        %v1385 = vand.u32 %v1362, 65535
        %v1386 = vshrl.u32 %v1362, 16
        %v1387 = vand.u32 %v1357, 65535
        %v1388 = vshrl.u32 %v1357, 16
        %v1389 = vmul.u32 %v1385, %v1387
        %v1390 = vmul.u32 %v1385, %v1388
        %v1391 = vmul.u32 %v1386, %v1387
        %v1392 = vmul.u32 %v1386, %v1388
        %v1393 = vshll.u32 %v1390, 16
        %v1394 = vshrl.u32 %v1390, 16
        %v1395 = vshll.u32 %v1391, 16
        %v1396 = vshrl.u32 %v1391, 16
        %vm1397 = vc.u32 %v1389, %v1393
        %v1398 = vsel %vm1397, 1, 0
        %v1399 = vadd.s32 %v1389, %v1393
        %v1400 = vadd.s32 %v1392, %v1398
        %vm1401 = vc.u32 %v1399, %v1395
        %v1402 = vsel %vm1401, 1, 0
        %v1403 = vadd.s32 %v1399, %v1395
        %v1404 = vadd.s32 %v1400, %v1402
        %v1405 = vadd.s32 %v1404, %v1394
        %v1406 = vadd.s32 %v1405, %v1396
        %v1407 = vmul.u32 %v1362, %v1353
        %v1408 = vadd.s32 %v1384, %v1403
        %vm1409 = vc.u32 %v1384, %v1403
        %v1410 = vadd.s32 %v1406, 1
        %v1411 = vsel %vm1409, %v1410, %v1406
        %v1412 = vadd.s32 %v1407, %v1411
        %v1413 = vadd.s32 %v1412, 536870912
        %v1414 = vshrl.u32 %v1413, 30
        %v1415 = vshll.u32 %v1414, 30
        %v1416 = vsub.s32 %v1412, %v1415
        %vm1417 = vcmp.lt.s32.totalorder %v1416, 0
        %v1418 = vsub.s32 0, %v1416
        %v1419 = vsel %vm1417, %v1418, %v1416
        %v1420 = vclz %v1419
        %v1421 = vsub.s32 %v1420, 2
        %vm1422 = vcmp.gt.s32.totalorder 0, %v1421
        %v1423 = vsel %vm1422, 0, %v1421
        %v1424 = vsub.s32 32, %v1423
        %v1425 = vshll.u32 %v1416, %v1423
        %v1426 = vshrl.u32 %v1408, %v1424
        %v1427 = vor.u32 %v1425, %v1426
        %v1428 = vsub.s32 4294967266, %v1423
        %v1429 = vadd.s32 %v1428, 127
        %v1430 = vshll.u32 %v1429, 23
        %v1431 = vor.u32 4788187, %v1430
        %v1432 = vand.u32 2147483647, %v1431
        %v1434 = vcvt.s32.f32 %v1427
        %v1435 = vmul.f32 %v1434, %v1432
        %v1436 = vxor.u32 %v1435, 2147483648
        %v1437 = vsel %vm1316, %v1436, %v1435
        %v1438 = vsub.s32 4, %v1414
        %v1439 = vsel %vm1316, %v1438, %v1414
        %v1440 = vsel %vm1315, %v204, %v1437
        %v1441 = vsel %vm1315, 0, %v1439
        %v1442 = vmul.f32 %v1440, %v1440
        %v1443 = vmul.f32 %v1442, -0.001358992
        %v1444 = vadd.f32 %v1443, 0.041655596
        %v1445 = vmul.f32 %v1442, %v1444
        %v1446 = vadd.f32 %v1445, -0.4999988
        %v1447 = vmul.f32 %v1442, %v1446
        %v1448 = vadd.f32 1.0, %v1447
        %v1449 = vmul.f32 %v1440, %v1440
        %v1450 = vmul.f32 %v1449, -0.00019511016
        %v1451 = vadd.f32 %v1450, 0.008332121
        %v1452 = vmul.f32 %v1449, %v1451
        %v1453 = vadd.f32 %v1452, -0.16666654
        %v1454 = vmul.f32 %v1449, %v1453
        %v1455 = vadd.f32 %v1454, 1.0
        %v1456 = vmul.f32 %v1455, %v1440
        %vm1457 = vweird.f32 %v204
        %v1458 = vadd.s32 %v1441, 3
        %v1459 = vand.u32 %v1458, 3
        %vm1460 = vcmp.lt.s32.totalorder %v1459, 2
        %vm1461 = vcmp.eq.s32.totalorder %v1459, 0
        %v1462 = vxor.u32 %v1456, 2147483648
        %v1463 = vsel %vm1461, %v1448, %v1462
        %vm1464 = vcmp.eq.s32.totalorder %v1459, 2
        %v1465 = vxor.u32 %v1448, 2147483648
        %v1466 = vsel %vm1464, %v1465, %v1456
        %v1467 = vsel %vm1460, %v1463, %v1466
        %v1468 = vsel %vm1457, nan, %v1467
        %v1469 = vand.u32 2147483647, %v205
        %vm1470 = vcmp.le.f32.partialorder %v1469, 0.7853982
        %vm1471 = vcmp.lt.s32.totalorder %v205, 0
        %v1472 = vand.u32 %v205, 2139095040
        %v1473 = vshrl.u32 %v1472, 23
        %v1474 = vsub.s32 %v1473, 127
        %v1475 = vand.u32 2147483647, %v205
        %v1476 = vand.u32 %v1475, 8388607
        %v1477 = vor.u32 %v1476, 8388608
        %v1478 = vsub.s32 0, %v1477
        %v1479 = vadd.s32 %v1474, 1
        %vm1480 = vcmp.gt.s32.totalorder %v1479, 0
        %v1481 = vsel %vm1480, %v1479, 0
        %v1482 = vshrl.u32 %v1481, 5
        %v1483 = vand.u32 %v1481, 31
        %v1484 = vsub.s32 32, %v1483
        %v1485 = vshrl.u32 683565275, %v1484
        %v1486 = vshll.u32 683565275, %v1483
        %v1487 = vshrl.u32 2475754826, %v1484
        %v1488 = vor.u32 %v1486, %v1487
        %v1489 = vshll.u32 2475754826, %v1483
        %v1490 = vshrl.u32 2131351028, %v1484
        %v1491 = vor.u32 %v1489, %v1490
        %v1492 = vshll.u32 2131351028, %v1483
        %v1493 = vshrl.u32 2102212464, %v1484
        %v1494 = vor.u32 %v1492, %v1493
        %v1495 = vshll.u32 2102212464, %v1483
        %v1496 = vshrl.u32 920167782, %v1484
        %v1497 = vor.u32 %v1495, %v1496
        %v1498 = vshll.u32 920167782, %v1483
        %v1499 = vshrl.u32 1326507024, %v1484
        %v1500 = vor.u32 %v1498, %v1499
        %vm1501 = vcmp.lt.s32.totalorder %v1482, 1
        %vm1502 = vcmp.lt.s32.totalorder %v1482, 2
        %vm1503 = vcmp.lt.s32.totalorder %v1482, 3
        %vm1504 = vcmp.lt.s32.totalorder %v1482, 4
        %v1505 = vsel %vm1501, %v1485, %v1488
        %v1506 = vsel %vm1504, %v1494, 2102212464
        %v1507 = vsel %vm1503, %v1491, %v1506
        %v1508 = vsel %vm1502, %v1505, %v1507
        %v1509 = vsel %vm1501, %v1488, %v1491
        %v1510 = vsel %vm1504, %v1497, 920167782
        %v1511 = vsel %vm1503, %v1494, %v1510
        %v1512 = vsel %vm1502, %v1509, %v1511
        %v1513 = vsel %vm1501, %v1491, %v1494
        %v1514 = vsel %vm1504, %v1500, 1326507024
        %v1515 = vsel %vm1503, %v1497, %v1514
        %v1516 = vsel %vm1502, %v1513, %v1515
        %v1517 = vshll.u32 %v1477, 8
        %v1518 = vand.u32 %v1517, 65535
        %v1519 = vshrl.u32 %v1517, 16
        %v1520 = vand.u32 %v1516, 65535
        %v1521 = vshrl.u32 %v1516, 16
        %v1522 = vmul.u32 %v1518, %v1520
        %v1523 = vmul.u32 %v1518, %v1521
        %v1524 = vmul.u32 %v1519, %v1520
        %v1525 = vmul.u32 %v1519, %v1521
        %v1526 = vshll.u32 %v1523, 16
        %v1527 = vshrl.u32 %v1523, 16
        %v1528 = vshll.u32 %v1524, 16
        %v1529 = vshrl.u32 %v1524, 16
        %vm1530 = vc.u32 %v1522, %v1526
        %v1531 = vsel %vm1530, 1, 0
        %v1532 = vadd.s32 %v1522, %v1526
        %v1533 = vadd.s32 %v1525, %v1531
        %vm1534 = vc.u32 %v1532, %v1528
        %v1535 = vsel %vm1534, 1, 0
        %v1536 = vadd.s32 %v1532, %v1528
        %v1537 = vadd.s32 %v1533, %v1535
        %v1538 = vadd.s32 %v1537, %v1527
        %v1539 = vadd.s32 %v1538, %v1529
        %v1540 = vand.u32 %v1517, 65535
        %v1541 = vshrl.u32 %v1517, 16
        %v1542 = vand.u32 %v1512, 65535
        %v1543 = vshrl.u32 %v1512, 16
        %v1544 = vmul.u32 %v1540, %v1542
        %v1545 = vmul.u32 %v1540, %v1543
        %v1546 = vmul.u32 %v1541, %v1542
        %v1547 = vmul.u32 %v1541, %v1543
        %v1548 = vshll.u32 %v1545, 16
        %v1549 = vshrl.u32 %v1545, 16
        %v1550 = vshll.u32 %v1546, 16
        %v1551 = vshrl.u32 %v1546, 16
        %vm1552 = vc.u32 %v1544, %v1548
        %v1553 = vsel %vm1552, 1, 0
        %v1554 = vadd.s32 %v1544, %v1548
        %v1555 = vadd.s32 %v1547, %v1553
        %vm1556 = vc.u32 %v1554, %v1550
        %v1557 = vsel %vm1556, 1, 0
        %v1558 = vadd.s32 %v1554, %v1550
        %v1559 = vadd.s32 %v1555, %v1557
        %v1560 = vadd.s32 %v1559, %v1549
        %v1561 = vadd.s32 %v1560, %v1551
        %v1562 = vmul.u32 %v1517, %v1508
        %v1563 = vadd.s32 %v1539, %v1558
        %vm1564 = vc.u32 %v1539, %v1558
        %v1565 = vadd.s32 %v1561, 1
        %v1566 = vsel %vm1564, %v1565, %v1561
        %v1567 = vadd.s32 %v1562, %v1566
        %v1568 = vadd.s32 %v1567, 536870912
        %v1569 = vshrl.u32 %v1568, 30
        %v1570 = vshll.u32 %v1569, 30
        %v1571 = vsub.s32 %v1567, %v1570
        %vm1572 = vcmp.lt.s32.totalorder %v1571, 0
        %v1573 = vsub.s32 0, %v1571
        %v1574 = vsel %vm1572, %v1573, %v1571
        %v1575 = vclz %v1574
        %v1576 = vsub.s32 %v1575, 2
        %vm1577 = vcmp.gt.s32.totalorder 0, %v1576
        %v1578 = vsel %vm1577, 0, %v1576
        %v1579 = vsub.s32 32, %v1578
        %v1580 = vshll.u32 %v1571, %v1578
        %v1581 = vshrl.u32 %v1563, %v1579
        %v1582 = vor.u32 %v1580, %v1581
        %v1583 = vsub.s32 4294967266, %v1578
        %v1584 = vadd.s32 %v1583, 127
        %v1585 = vshll.u32 %v1584, 23
        %v1586 = vor.u32 4788187, %v1585
        %v1587 = vand.u32 2147483647, %v1586
        %v1589 = vcvt.s32.f32 %v1582
        %v1590 = vmul.f32 %v1589, %v1587
        %v1591 = vxor.u32 %v1590, 2147483648
        %v1592 = vsel %vm1471, %v1591, %v1590
        %v1593 = vsub.s32 4, %v1569
        %v1594 = vsel %vm1471, %v1593, %v1569
        %v1595 = vsel %vm1470, %v205, %v1592
        %v1596 = vsel %vm1470, 0, %v1594
        %v1597 = vmul.f32 %v1595, %v1595
        %v1598 = vmul.f32 %v1597, -0.001358992
        %v1599 = vadd.f32 %v1598, 0.041655596
        %v1600 = vmul.f32 %v1597, %v1599
        %v1601 = vadd.f32 %v1600, -0.4999988
        %v1602 = vmul.f32 %v1597, %v1601
        %v1603 = vadd.f32 1.0, %v1602
        %v1604 = vmul.f32 %v1595, %v1595
        %v1605 = vmul.f32 %v1604, -0.00019511016
        %v1606 = vadd.f32 %v1605, 0.008332121
        %v1607 = vmul.f32 %v1604, %v1606
        %v1608 = vadd.f32 %v1607, -0.16666654
        %v1609 = vmul.f32 %v1604, %v1608
        %v1610 = vadd.f32 %v1609, 1.0
        %v1611 = vmul.f32 %v1610, %v1595
        %vm1612 = vweird.f32 %v205
        %v1613 = vadd.s32 %v1596, 3
        %v1614 = vand.u32 %v1613, 3
        %vm1615 = vcmp.lt.s32.totalorder %v1614, 2
        %vm1616 = vcmp.eq.s32.totalorder %v1614, 0
        %v1617 = vxor.u32 %v1611, 2147483648
        %v1618 = vsel %vm1616, %v1603, %v1617
        %vm1619 = vcmp.eq.s32.totalorder %v1614, 2
        %v1620 = vxor.u32 %v1603, 2147483648
        %v1621 = vsel %vm1619, %v1620, %v1611
        %v1622 = vsel %vm1615, %v1618, %v1621
        %v1623 = vsel %vm1612, nan, %v1622
        %v1624 = vand.u32 2147483647, %v206
        %vm1625 = vcmp.le.f32.partialorder %v1624, 0.7853982
        %vm1626 = vcmp.lt.s32.totalorder %v206, 0
        %v1627 = vand.u32 %v206, 2139095040
        %v1628 = vshrl.u32 %v1627, 23
        %v1629 = vsub.s32 %v1628, 127
        %v1630 = vand.u32 2147483647, %v206
        %v1631 = vand.u32 %v1630, 8388607
        %v1632 = vor.u32 %v1631, 8388608
        %v1633 = vsub.s32 0, %v1632
        %v1634 = vadd.s32 %v1629, 1
        %vm1635 = vcmp.gt.s32.totalorder %v1634, 0
        %v1636 = vsel %vm1635, %v1634, 0
        %v1637 = vshrl.u32 %v1636, 5
        %v1638 = vand.u32 %v1636, 31
        %v1639 = vsub.s32 32, %v1638
        %v1640 = vshrl.u32 683565275, %v1639
        %v1641 = vshll.u32 683565275, %v1638
        %v1642 = vshrl.u32 2475754826, %v1639
        %v1643 = vor.u32 %v1641, %v1642
        %v1644 = vshll.u32 2475754826, %v1638
        %v1645 = vshrl.u32 2131351028, %v1639
        %v1646 = vor.u32 %v1644, %v1645
        %v1647 = vshll.u32 2131351028, %v1638
        %v1648 = vshrl.u32 2102212464, %v1639
        %v1649 = vor.u32 %v1647, %v1648
        %v1650 = vshll.u32 2102212464, %v1638
        %v1651 = vshrl.u32 920167782, %v1639
        %v1652 = vor.u32 %v1650, %v1651
        %v1653 = vshll.u32 920167782, %v1638
        %v1654 = vshrl.u32 1326507024, %v1639
        %v1655 = vor.u32 %v1653, %v1654
        %vm1656 = vcmp.lt.s32.totalorder %v1637, 1
        %vm1657 = vcmp.lt.s32.totalorder %v1637, 2
        %vm1658 = vcmp.lt.s32.totalorder %v1637, 3
        %vm1659 = vcmp.lt.s32.totalorder %v1637, 4
        %v1660 = vsel %vm1656, %v1640, %v1643
        %v1661 = vsel %vm1659, %v1649, 2102212464
        %v1662 = vsel %vm1658, %v1646, %v1661
        %v1663 = vsel %vm1657, %v1660, %v1662
        %v1664 = vsel %vm1656, %v1643, %v1646
        %v1665 = vsel %vm1659, %v1652, 920167782
        %v1666 = vsel %vm1658, %v1649, %v1665
        %v1667 = vsel %vm1657, %v1664, %v1666
        %v1668 = vsel %vm1656, %v1646, %v1649
        %v1669 = vsel %vm1659, %v1655, 1326507024
        %v1670 = vsel %vm1658, %v1652, %v1669
        %v1671 = vsel %vm1657, %v1668, %v1670
        %v1672 = vshll.u32 %v1632, 8
        %v1673 = vand.u32 %v1672, 65535
        %v1674 = vshrl.u32 %v1672, 16
        %v1675 = vand.u32 %v1671, 65535
        %v1676 = vshrl.u32 %v1671, 16
        %v1677 = vmul.u32 %v1673, %v1675
        %v1678 = vmul.u32 %v1673, %v1676
        %v1679 = vmul.u32 %v1674, %v1675
        %v1680 = vmul.u32 %v1674, %v1676
        %v1681 = vshll.u32 %v1678, 16
        %v1682 = vshrl.u32 %v1678, 16
        %v1683 = vshll.u32 %v1679, 16
        %v1684 = vshrl.u32 %v1679, 16
        %vm1685 = vc.u32 %v1677, %v1681
        %v1686 = vsel %vm1685, 1, 0
        %v1687 = vadd.s32 %v1677, %v1681
        %v1688 = vadd.s32 %v1680, %v1686
        %vm1689 = vc.u32 %v1687, %v1683
        %v1690 = vsel %vm1689, 1, 0
        %v1691 = vadd.s32 %v1687, %v1683
        %v1692 = vadd.s32 %v1688, %v1690
        %v1693 = vadd.s32 %v1692, %v1682
        %v1694 = vadd.s32 %v1693, %v1684
        %v1695 = vand.u32 %v1672, 65535
        %v1696 = vshrl.u32 %v1672, 16
        %v1697 = vand.u32 %v1667, 65535
        %v1698 = vshrl.u32 %v1667, 16
        %v1699 = vmul.u32 %v1695, %v1697
        %v1700 = vmul.u32 %v1695, %v1698
        %v1701 = vmul.u32 %v1696, %v1697
        %v1702 = vmul.u32 %v1696, %v1698
        %v1703 = vshll.u32 %v1700, 16
        %v1704 = vshrl.u32 %v1700, 16
        %v1705 = vshll.u32 %v1701, 16
        %v1706 = vshrl.u32 %v1701, 16
        %vm1707 = vc.u32 %v1699, %v1703
        %v1708 = vsel %vm1707, 1, 0
        %v1709 = vadd.s32 %v1699, %v1703
        %v1710 = vadd.s32 %v1702, %v1708
        %vm1711 = vc.u32 %v1709, %v1705
        %v1712 = vsel %vm1711, 1, 0
        %v1713 = vadd.s32 %v1709, %v1705
        %v1714 = vadd.s32 %v1710, %v1712
        %v1715 = vadd.s32 %v1714, %v1704
        %v1716 = vadd.s32 %v1715, %v1706
        %v1717 = vmul.u32 %v1672, %v1663
        %v1718 = vadd.s32 %v1694, %v1713
        %vm1719 = vc.u32 %v1694, %v1713
        %v1720 = vadd.s32 %v1716, 1
        %v1721 = vsel %vm1719, %v1720, %v1716
        %v1722 = vadd.s32 %v1717, %v1721
        %v1723 = vadd.s32 %v1722, 536870912
        %v1724 = vshrl.u32 %v1723, 30
        %v1725 = vshll.u32 %v1724, 30
        %v1726 = vsub.s32 %v1722, %v1725
        %vm1727 = vcmp.lt.s32.totalorder %v1726, 0
        %v1728 = vsub.s32 0, %v1726
        %v1729 = vsel %vm1727, %v1728, %v1726
        %v1730 = vclz %v1729
        %v1731 = vsub.s32 %v1730, 2
        %vm1732 = vcmp.gt.s32.totalorder 0, %v1731
        %v1733 = vsel %vm1732, 0, %v1731
        %v1734 = vsub.s32 32, %v1733
        %v1735 = vshll.u32 %v1726, %v1733
        %v1736 = vshrl.u32 %v1718, %v1734
        %v1737 = vor.u32 %v1735, %v1736
        %v1738 = vsub.s32 4294967266, %v1733
        %v1739 = vadd.s32 %v1738, 127
        %v1740 = vshll.u32 %v1739, 23
        %v1741 = vor.u32 4788187, %v1740
        %v1742 = vand.u32 2147483647, %v1741
        %v1744 = vcvt.s32.f32 %v1737
        %v1745 = vmul.f32 %v1744, %v1742
        %v1746 = vxor.u32 %v1745, 2147483648
        %v1747 = vsel %vm1626, %v1746, %v1745
        %v1748 = vsub.s32 4, %v1724
        %v1749 = vsel %vm1626, %v1748, %v1724
        %v1750 = vsel %vm1625, %v206, %v1747
        %v1751 = vsel %vm1625, 0, %v1749
        %v1752 = vmul.f32 %v1750, %v1750
        %v1753 = vmul.f32 %v1752, -0.001358992
        %v1754 = vadd.f32 %v1753, 0.041655596
        %v1755 = vmul.f32 %v1752, %v1754
        %v1756 = vadd.f32 %v1755, -0.4999988
        %v1757 = vmul.f32 %v1752, %v1756
        %v1758 = vadd.f32 1.0, %v1757
        %v1759 = vmul.f32 %v1750, %v1750
        %v1760 = vmul.f32 %v1759, -0.00019511016
        %v1761 = vadd.f32 %v1760, 0.008332121
        %v1762 = vmul.f32 %v1759, %v1761
        %v1763 = vadd.f32 %v1762, -0.16666654
        %v1764 = vmul.f32 %v1759, %v1763
        %v1765 = vadd.f32 %v1764, 1.0
        %v1766 = vmul.f32 %v1765, %v1750
        %vm1767 = vweird.f32 %v206
        %v1768 = vadd.s32 %v1751, 3
        %v1769 = vand.u32 %v1768, 3
        %vm1770 = vcmp.lt.s32.totalorder %v1769, 2
        %vm1771 = vcmp.eq.s32.totalorder %v1769, 0
        %v1772 = vxor.u32 %v1766, 2147483648
        %v1773 = vsel %vm1771, %v1758, %v1772
        %vm1774 = vcmp.eq.s32.totalorder %v1769, 2
        %v1775 = vxor.u32 %v1758, 2147483648
        %v1776 = vsel %vm1774, %v1775, %v1766
        %v1777 = vsel %vm1770, %v1773, %v1776
        %v1778 = vsel %vm1767, nan, %v1777
        %v1779 = vand.u32 2147483647, %v207
        %vm1780 = vcmp.le.f32.partialorder %v1779, 0.7853982
        %vm1781 = vcmp.lt.s32.totalorder %v207, 0
        %v1782 = vand.u32 %v207, 2139095040
        %v1783 = vshrl.u32 %v1782, 23
        %v1784 = vsub.s32 %v1783, 127
        %v1785 = vand.u32 2147483647, %v207
        %v1786 = vand.u32 %v1785, 8388607
        %v1787 = vor.u32 %v1786, 8388608
        %v1788 = vsub.s32 0, %v1787
        %v1789 = vadd.s32 %v1784, 1
        %vm1790 = vcmp.gt.s32.totalorder %v1789, 0
        %v1791 = vsel %vm1790, %v1789, 0
        %v1792 = vshrl.u32 %v1791, 5
        %v1793 = vand.u32 %v1791, 31
        %v1794 = vsub.s32 32, %v1793
        %v1795 = vshrl.u32 683565275, %v1794
        %v1796 = vshll.u32 683565275, %v1793
        %v1797 = vshrl.u32 2475754826, %v1794
        %v1798 = vor.u32 %v1796, %v1797
        %v1799 = vshll.u32 2475754826, %v1793
        %v1800 = vshrl.u32 2131351028, %v1794
        %v1801 = vor.u32 %v1799, %v1800
        %v1802 = vshll.u32 2131351028, %v1793
        %v1803 = vshrl.u32 2102212464, %v1794
        %v1804 = vor.u32 %v1802, %v1803
        %v1805 = vshll.u32 2102212464, %v1793
        %v1806 = vshrl.u32 920167782, %v1794
        %v1807 = vor.u32 %v1805, %v1806
        %v1808 = vshll.u32 920167782, %v1793
        %v1809 = vshrl.u32 1326507024, %v1794
        %v1810 = vor.u32 %v1808, %v1809
        %vm1811 = vcmp.lt.s32.totalorder %v1792, 1
        %vm1812 = vcmp.lt.s32.totalorder %v1792, 2
        %vm1813 = vcmp.lt.s32.totalorder %v1792, 3
        %vm1814 = vcmp.lt.s32.totalorder %v1792, 4
        %v1815 = vsel %vm1811, %v1795, %v1798
        %v1816 = vsel %vm1814, %v1804, 2102212464
        %v1817 = vsel %vm1813, %v1801, %v1816
        %v1818 = vsel %vm1812, %v1815, %v1817
        %v1819 = vsel %vm1811, %v1798, %v1801
        %v1820 = vsel %vm1814, %v1807, 920167782
        %v1821 = vsel %vm1813, %v1804, %v1820
        %v1822 = vsel %vm1812, %v1819, %v1821
        %v1823 = vsel %vm1811, %v1801, %v1804
        %v1824 = vsel %vm1814, %v1810, 1326507024
        %v1825 = vsel %vm1813, %v1807, %v1824
        %v1826 = vsel %vm1812, %v1823, %v1825
        %v1827 = vshll.u32 %v1787, 8
        %v1828 = vand.u32 %v1827, 65535
        %v1829 = vshrl.u32 %v1827, 16
        %v1830 = vand.u32 %v1826, 65535
        %v1831 = vshrl.u32 %v1826, 16
        %v1832 = vmul.u32 %v1828, %v1830
        %v1833 = vmul.u32 %v1828, %v1831
        %v1834 = vmul.u32 %v1829, %v1830
        %v1835 = vmul.u32 %v1829, %v1831
        %v1836 = vshll.u32 %v1833, 16
        %v1837 = vshrl.u32 %v1833, 16
        %v1838 = vshll.u32 %v1834, 16
        %v1839 = vshrl.u32 %v1834, 16
        %vm1840 = vc.u32 %v1832, %v1836
        %v1841 = vsel %vm1840, 1, 0
        %v1842 = vadd.s32 %v1832, %v1836
        %v1843 = vadd.s32 %v1835, %v1841
        %vm1844 = vc.u32 %v1842, %v1838
        %v1845 = vsel %vm1844, 1, 0
        %v1846 = vadd.s32 %v1842, %v1838
        %v1847 = vadd.s32 %v1843, %v1845
        %v1848 = vadd.s32 %v1847, %v1837
        %v1849 = vadd.s32 %v1848, %v1839
        %v1850 = vand.u32 %v1827, 65535
        %v1851 = vshrl.u32 %v1827, 16
        %v1852 = vand.u32 %v1822, 65535
        %v1853 = vshrl.u32 %v1822, 16
        %v1854 = vmul.u32 %v1850, %v1852
        %v1855 = vmul.u32 %v1850, %v1853
        %v1856 = vmul.u32 %v1851, %v1852
        %v1857 = vmul.u32 %v1851, %v1853
        %v1858 = vshll.u32 %v1855, 16
        %v1859 = vshrl.u32 %v1855, 16
        %v1860 = vshll.u32 %v1856, 16
        %v1861 = vshrl.u32 %v1856, 16
        %vm1862 = vc.u32 %v1854, %v1858
        %v1863 = vsel %vm1862, 1, 0
        %v1864 = vadd.s32 %v1854, %v1858
        %v1865 = vadd.s32 %v1857, %v1863
        %vm1866 = vc.u32 %v1864, %v1860
        %v1867 = vsel %vm1866, 1, 0
        %v1868 = vadd.s32 %v1864, %v1860
        %v1869 = vadd.s32 %v1865, %v1867
        %v1870 = vadd.s32 %v1869, %v1859
        %v1871 = vadd.s32 %v1870, %v1861
        %v1872 = vmul.u32 %v1827, %v1818
        %v1873 = vadd.s32 %v1849, %v1868
        %vm1874 = vc.u32 %v1849, %v1868
        %v1875 = vadd.s32 %v1871, 1
        %v1876 = vsel %vm1874, %v1875, %v1871
        %v1877 = vadd.s32 %v1872, %v1876
        %v1878 = vadd.s32 %v1877, 536870912
        %v1879 = vshrl.u32 %v1878, 30
        %v1880 = vshll.u32 %v1879, 30
        %v1881 = vsub.s32 %v1877, %v1880
        %vm1882 = vcmp.lt.s32.totalorder %v1881, 0
        %v1883 = vsub.s32 0, %v1881
        %v1884 = vsel %vm1882, %v1883, %v1881
        %v1885 = vclz %v1884
        %v1886 = vsub.s32 %v1885, 2
        %vm1887 = vcmp.gt.s32.totalorder 0, %v1886
        %v1888 = vsel %vm1887, 0, %v1886
        %v1889 = vsub.s32 32, %v1888
        %v1890 = vshll.u32 %v1881, %v1888
        %v1891 = vshrl.u32 %v1873, %v1889
        %v1892 = vor.u32 %v1890, %v1891
        %v1893 = vsub.s32 4294967266, %v1888
        %v1894 = vadd.s32 %v1893, 127
        %v1895 = vshll.u32 %v1894, 23
        %v1896 = vor.u32 4788187, %v1895
        %v1897 = vand.u32 2147483647, %v1896
        %v1899 = vcvt.s32.f32 %v1892
        %v1900 = vmul.f32 %v1899, %v1897
        %v1901 = vxor.u32 %v1900, 2147483648
        %v1902 = vsel %vm1781, %v1901, %v1900
        %v1903 = vsub.s32 4, %v1879
        %v1904 = vsel %vm1781, %v1903, %v1879
        %v1905 = vsel %vm1780, %v207, %v1902
        %v1906 = vsel %vm1780, 0, %v1904
        %v1907 = vmul.f32 %v1905, %v1905
        %v1908 = vmul.f32 %v1907, -0.001358992
        %v1909 = vadd.f32 %v1908, 0.041655596
        %v1910 = vmul.f32 %v1907, %v1909
        %v1911 = vadd.f32 %v1910, -0.4999988
        %v1912 = vmul.f32 %v1907, %v1911
        %v1913 = vadd.f32 1.0, %v1912
        %v1914 = vmul.f32 %v1905, %v1905
        %v1915 = vmul.f32 %v1914, -0.00019511016
        %v1916 = vadd.f32 %v1915, 0.008332121
        %v1917 = vmul.f32 %v1914, %v1916
        %v1918 = vadd.f32 %v1917, -0.16666654
        %v1919 = vmul.f32 %v1914, %v1918
        %v1920 = vadd.f32 %v1919, 1.0
        %v1921 = vmul.f32 %v1920, %v1905
        %vm1922 = vweird.f32 %v207
        %v1923 = vadd.s32 %v1906, 3
        %v1924 = vand.u32 %v1923, 3
        %vm1925 = vcmp.lt.s32.totalorder %v1924, 2
        %vm1926 = vcmp.eq.s32.totalorder %v1924, 0
        %v1927 = vxor.u32 %v1921, 2147483648
        %v1928 = vsel %vm1926, %v1913, %v1927
        %vm1929 = vcmp.eq.s32.totalorder %v1924, 2
        %v1930 = vxor.u32 %v1913, 2147483648
        %v1931 = vsel %vm1929, %v1930, %v1921
        %v1932 = vsel %vm1925, %v1928, %v1931
        %v1933 = vsel %vm1922, nan, %v1932
        %v1934 = vand.u32 2147483647, %v208
        %vm1935 = vcmp.le.f32.partialorder %v1934, 0.7853982
        %vm1936 = vcmp.lt.s32.totalorder %v208, 0
        %v1937 = vand.u32 %v208, 2139095040
        %v1938 = vshrl.u32 %v1937, 23
        %v1939 = vsub.s32 %v1938, 127
        %v1940 = vand.u32 2147483647, %v208
        %v1941 = vand.u32 %v1940, 8388607
        %v1942 = vor.u32 %v1941, 8388608
        %v1943 = vsub.s32 0, %v1942
        %v1944 = vadd.s32 %v1939, 1
        %vm1945 = vcmp.gt.s32.totalorder %v1944, 0
        %v1946 = vsel %vm1945, %v1944, 0
        %v1947 = vshrl.u32 %v1946, 5
        %v1948 = vand.u32 %v1946, 31
        %v1949 = vsub.s32 32, %v1948
        %v1950 = vshrl.u32 683565275, %v1949
        %v1951 = vshll.u32 683565275, %v1948
        %v1952 = vshrl.u32 2475754826, %v1949
        %v1953 = vor.u32 %v1951, %v1952
        %v1954 = vshll.u32 2475754826, %v1948
        %v1955 = vshrl.u32 2131351028, %v1949
        %v1956 = vor.u32 %v1954, %v1955
        %v1957 = vshll.u32 2131351028, %v1948
        %v1958 = vshrl.u32 2102212464, %v1949
        %v1959 = vor.u32 %v1957, %v1958
        %v1960 = vshll.u32 2102212464, %v1948
        %v1961 = vshrl.u32 920167782, %v1949
        %v1962 = vor.u32 %v1960, %v1961
        %v1963 = vshll.u32 920167782, %v1948
        %v1964 = vshrl.u32 1326507024, %v1949
        %v1965 = vor.u32 %v1963, %v1964
        %vm1966 = vcmp.lt.s32.totalorder %v1947, 1
        %vm1967 = vcmp.lt.s32.totalorder %v1947, 2
        %vm1968 = vcmp.lt.s32.totalorder %v1947, 3
        %vm1969 = vcmp.lt.s32.totalorder %v1947, 4
        %v1970 = vsel %vm1966, %v1950, %v1953
        %v1971 = vsel %vm1969, %v1959, 2102212464
        %v1972 = vsel %vm1968, %v1956, %v1971
        %v1973 = vsel %vm1967, %v1970, %v1972
        %v1974 = vsel %vm1966, %v1953, %v1956
        %v1975 = vsel %vm1969, %v1962, 920167782
        %v1976 = vsel %vm1968, %v1959, %v1975
        %v1977 = vsel %vm1967, %v1974, %v1976
        %v1978 = vsel %vm1966, %v1956, %v1959
        %v1979 = vsel %vm1969, %v1965, 1326507024
        %v1980 = vsel %vm1968, %v1962, %v1979
        %v1981 = vsel %vm1967, %v1978, %v1980
        %v1982 = vshll.u32 %v1942, 8
        %v1983 = vand.u32 %v1982, 65535
        %v1984 = vshrl.u32 %v1982, 16
        %v1985 = vand.u32 %v1981, 65535
        %v1986 = vshrl.u32 %v1981, 16
        %v1987 = vmul.u32 %v1983, %v1985
        %v1988 = vmul.u32 %v1983, %v1986
        %v1989 = vmul.u32 %v1984, %v1985
        %v1990 = vmul.u32 %v1984, %v1986
        %v1991 = vshll.u32 %v1988, 16
        %v1992 = vshrl.u32 %v1988, 16
        %v1993 = vshll.u32 %v1989, 16
        %v1994 = vshrl.u32 %v1989, 16
        %vm1995 = vc.u32 %v1987, %v1991
        %v1996 = vsel %vm1995, 1, 0
        %v1997 = vadd.s32 %v1987, %v1991
        %v1998 = vadd.s32 %v1990, %v1996
        %vm1999 = vc.u32 %v1997, %v1993
        %v2000 = vsel %vm1999, 1, 0
        %v2001 = vadd.s32 %v1997, %v1993
        %v2002 = vadd.s32 %v1998, %v2000
        %v2003 = vadd.s32 %v2002, %v1992
        %v2004 = vadd.s32 %v2003, %v1994
        %v2005 = vand.u32 %v1982, 65535
        %v2006 = vshrl.u32 %v1982, 16
        %v2007 = vand.u32 %v1977, 65535
        %v2008 = vshrl.u32 %v1977, 16
        %v2009 = vmul.u32 %v2005, %v2007
        %v2010 = vmul.u32 %v2005, %v2008
        %v2011 = vmul.u32 %v2006, %v2007
        %v2012 = vmul.u32 %v2006, %v2008
        %v2013 = vshll.u32 %v2010, 16
        %v2014 = vshrl.u32 %v2010, 16
        %v2015 = vshll.u32 %v2011, 16
        %v2016 = vshrl.u32 %v2011, 16
        %vm2017 = vc.u32 %v2009, %v2013
        %v2018 = vsel %vm2017, 1, 0
        %v2019 = vadd.s32 %v2009, %v2013
        %v2020 = vadd.s32 %v2012, %v2018
        %vm2021 = vc.u32 %v2019, %v2015
        %v2022 = vsel %vm2021, 1, 0
        %v2023 = vadd.s32 %v2019, %v2015
        %v2024 = vadd.s32 %v2020, %v2022
        %v2025 = vadd.s32 %v2024, %v2014
        %v2026 = vadd.s32 %v2025, %v2016
        %v2027 = vmul.u32 %v1982, %v1973
        %v2028 = vadd.s32 %v2004, %v2023
        %vm2029 = vc.u32 %v2004, %v2023
        %v2030 = vadd.s32 %v2026, 1
        %v2031 = vsel %vm2029, %v2030, %v2026
        %v2032 = vadd.s32 %v2027, %v2031
        %v2033 = vadd.s32 %v2032, 536870912
        %v2034 = vshrl.u32 %v2033, 30
        %v2035 = vshll.u32 %v2034, 30
        %v2036 = vsub.s32 %v2032, %v2035
        %vm2037 = vcmp.lt.s32.totalorder %v2036, 0
        %v2038 = vsub.s32 0, %v2036
        %v2039 = vsel %vm2037, %v2038, %v2036
        %v2040 = vclz %v2039
        %v2041 = vsub.s32 %v2040, 2
        %vm2042 = vcmp.gt.s32.totalorder 0, %v2041
        %v2043 = vsel %vm2042, 0, %v2041
        %v2044 = vsub.s32 32, %v2043
        %v2045 = vshll.u32 %v2036, %v2043
        %v2046 = vshrl.u32 %v2028, %v2044
        %v2047 = vor.u32 %v2045, %v2046
        %v2048 = vsub.s32 4294967266, %v2043
        %v2049 = vadd.s32 %v2048, 127
        %v2050 = vshll.u32 %v2049, 23
        %v2051 = vor.u32 4788187, %v2050
        %v2052 = vand.u32 2147483647, %v2051
        %v2054 = vcvt.s32.f32 %v2047
        %v2055 = vmul.f32 %v2054, %v2052
        %v2056 = vxor.u32 %v2055, 2147483648
        %v2057 = vsel %vm1936, %v2056, %v2055
        %v2058 = vsub.s32 4, %v2034
        %v2059 = vsel %vm1936, %v2058, %v2034
        %v2060 = vsel %vm1935, %v208, %v2057
        %v2061 = vsel %vm1935, 0, %v2059
        %v2062 = vmul.f32 %v2060, %v2060
        %v2063 = vmul.f32 %v2062, -0.001358992
        %v2064 = vadd.f32 %v2063, 0.041655596
        %v2065 = vmul.f32 %v2062, %v2064
        %v2066 = vadd.f32 %v2065, -0.4999988
        %v2067 = vmul.f32 %v2062, %v2066
        %v2068 = vadd.f32 1.0, %v2067
        %v2069 = vmul.f32 %v2060, %v2060
        %v2070 = vmul.f32 %v2069, -0.00019511016
        %v2071 = vadd.f32 %v2070, 0.008332121
        %v2072 = vmul.f32 %v2069, %v2071
        %v2073 = vadd.f32 %v2072, -0.16666654
        %v2074 = vmul.f32 %v2069, %v2073
        %v2075 = vadd.f32 %v2074, 1.0
        %v2076 = vmul.f32 %v2075, %v2060
        %vm2077 = vweird.f32 %v208
        %v2078 = vadd.s32 %v2061, 3
        %v2079 = vand.u32 %v2078, 3
        %vm2080 = vcmp.lt.s32.totalorder %v2079, 2
        %vm2081 = vcmp.eq.s32.totalorder %v2079, 0
        %v2082 = vxor.u32 %v2076, 2147483648
        %v2083 = vsel %vm2081, %v2068, %v2082
        %vm2084 = vcmp.eq.s32.totalorder %v2079, 2
        %v2085 = vxor.u32 %v2068, 2147483648
        %v2086 = vsel %vm2084, %v2085, %v2076
        %v2087 = vsel %vm2080, %v2083, %v2086
        %v2088 = vsel %vm2077, nan, %v2087
        %v2089 = vand.u32 2147483647, %v209
        %vm2090 = vcmp.le.f32.partialorder %v2089, 0.7853982
        %vm2091 = vcmp.lt.s32.totalorder %v209, 0
        %v2092 = vand.u32 %v209, 2139095040
        %v2093 = vshrl.u32 %v2092, 23
        %v2094 = vsub.s32 %v2093, 127
        %v2095 = vand.u32 2147483647, %v209
        %v2096 = vand.u32 %v2095, 8388607
        %v2097 = vor.u32 %v2096, 8388608
        %v2098 = vsub.s32 0, %v2097
        %v2099 = vadd.s32 %v2094, 1
        %vm2100 = vcmp.gt.s32.totalorder %v2099, 0
        %v2101 = vsel %vm2100, %v2099, 0
        %v2102 = vshrl.u32 %v2101, 5
        %v2103 = vand.u32 %v2101, 31
        %v2104 = vsub.s32 32, %v2103
        %v2105 = vshrl.u32 683565275, %v2104
        %v2106 = vshll.u32 683565275, %v2103
        %v2107 = vshrl.u32 2475754826, %v2104
        %v2108 = vor.u32 %v2106, %v2107
        %v2109 = vshll.u32 2475754826, %v2103
        %v2110 = vshrl.u32 2131351028, %v2104
        %v2111 = vor.u32 %v2109, %v2110
        %v2112 = vshll.u32 2131351028, %v2103
        %v2113 = vshrl.u32 2102212464, %v2104
        %v2114 = vor.u32 %v2112, %v2113
        %v2115 = vshll.u32 2102212464, %v2103
        %v2116 = vshrl.u32 920167782, %v2104
        %v2117 = vor.u32 %v2115, %v2116
        %v2118 = vshll.u32 920167782, %v2103
        %v2119 = vshrl.u32 1326507024, %v2104
        %v2120 = vor.u32 %v2118, %v2119
        %vm2121 = vcmp.lt.s32.totalorder %v2102, 1
        %vm2122 = vcmp.lt.s32.totalorder %v2102, 2
        %vm2123 = vcmp.lt.s32.totalorder %v2102, 3
        %vm2124 = vcmp.lt.s32.totalorder %v2102, 4
        %v2125 = vsel %vm2121, %v2105, %v2108
        %v2126 = vsel %vm2124, %v2114, 2102212464
        %v2127 = vsel %vm2123, %v2111, %v2126
        %v2128 = vsel %vm2122, %v2125, %v2127
        %v2129 = vsel %vm2121, %v2108, %v2111
        %v2130 = vsel %vm2124, %v2117, 920167782
        %v2131 = vsel %vm2123, %v2114, %v2130
        %v2132 = vsel %vm2122, %v2129, %v2131
        %v2133 = vsel %vm2121, %v2111, %v2114
        %v2134 = vsel %vm2124, %v2120, 1326507024
        %v2135 = vsel %vm2123, %v2117, %v2134
        %v2136 = vsel %vm2122, %v2133, %v2135
        %v2137 = vshll.u32 %v2097, 8
        %v2138 = vand.u32 %v2137, 65535
        %v2139 = vshrl.u32 %v2137, 16
        %v2140 = vand.u32 %v2136, 65535
        %v2141 = vshrl.u32 %v2136, 16
        %v2142 = vmul.u32 %v2138, %v2140
        %v2143 = vmul.u32 %v2138, %v2141
        %v2144 = vmul.u32 %v2139, %v2140
        %v2145 = vmul.u32 %v2139, %v2141
        %v2146 = vshll.u32 %v2143, 16
        %v2147 = vshrl.u32 %v2143, 16
        %v2148 = vshll.u32 %v2144, 16
        %v2149 = vshrl.u32 %v2144, 16
        %vm2150 = vc.u32 %v2142, %v2146
        %v2151 = vsel %vm2150, 1, 0
        %v2152 = vadd.s32 %v2142, %v2146
        %v2153 = vadd.s32 %v2145, %v2151
        %vm2154 = vc.u32 %v2152, %v2148
        %v2155 = vsel %vm2154, 1, 0
        %v2156 = vadd.s32 %v2152, %v2148
        %v2157 = vadd.s32 %v2153, %v2155
        %v2158 = vadd.s32 %v2157, %v2147
        %v2159 = vadd.s32 %v2158, %v2149
        %v2160 = vand.u32 %v2137, 65535
        %v2161 = vshrl.u32 %v2137, 16
        %v2162 = vand.u32 %v2132, 65535
        %v2163 = vshrl.u32 %v2132, 16
        %v2164 = vmul.u32 %v2160, %v2162
        %v2165 = vmul.u32 %v2160, %v2163
        %v2166 = vmul.u32 %v2161, %v2162
        %v2167 = vmul.u32 %v2161, %v2163
        %v2168 = vshll.u32 %v2165, 16
        %v2169 = vshrl.u32 %v2165, 16
        %v2170 = vshll.u32 %v2166, 16
        %v2171 = vshrl.u32 %v2166, 16
        %vm2172 = vc.u32 %v2164, %v2168
        %v2173 = vsel %vm2172, 1, 0
        %v2174 = vadd.s32 %v2164, %v2168
        %v2175 = vadd.s32 %v2167, %v2173
        %vm2176 = vc.u32 %v2174, %v2170
        %v2177 = vsel %vm2176, 1, 0
        %v2178 = vadd.s32 %v2174, %v2170
        %v2179 = vadd.s32 %v2175, %v2177
        %v2180 = vadd.s32 %v2179, %v2169
        %v2181 = vadd.s32 %v2180, %v2171
        %v2182 = vmul.u32 %v2137, %v2128
        %v2183 = vadd.s32 %v2159, %v2178
        %vm2184 = vc.u32 %v2159, %v2178
        %v2185 = vadd.s32 %v2181, 1
        %v2186 = vsel %vm2184, %v2185, %v2181
        %v2187 = vadd.s32 %v2182, %v2186
        %v2188 = vadd.s32 %v2187, 536870912
        %v2189 = vshrl.u32 %v2188, 30
        %v2190 = vshll.u32 %v2189, 30
        %v2191 = vsub.s32 %v2187, %v2190
        %vm2192 = vcmp.lt.s32.totalorder %v2191, 0
        %v2193 = vsub.s32 0, %v2191
        %v2194 = vsel %vm2192, %v2193, %v2191
        %v2195 = vclz %v2194
        %v2196 = vsub.s32 %v2195, 2
        %vm2197 = vcmp.gt.s32.totalorder 0, %v2196
        %v2198 = vsel %vm2197, 0, %v2196
        %v2199 = vsub.s32 32, %v2198
        %v2200 = vshll.u32 %v2191, %v2198
        %v2201 = vshrl.u32 %v2183, %v2199
        %v2202 = vor.u32 %v2200, %v2201
        %v2203 = vsub.s32 4294967266, %v2198
        %v2204 = vadd.s32 %v2203, 127
        %v2205 = vshll.u32 %v2204, 23
        %v2206 = vor.u32 4788187, %v2205
        %v2207 = vand.u32 2147483647, %v2206
        %v2209 = vcvt.s32.f32 %v2202
        %v2210 = vmul.f32 %v2209, %v2207
        %v2211 = vxor.u32 %v2210, 2147483648
        %v2212 = vsel %vm2091, %v2211, %v2210
        %v2213 = vsub.s32 4, %v2189
        %v2214 = vsel %vm2091, %v2213, %v2189
        %v2215 = vsel %vm2090, %v209, %v2212
        %v2216 = vsel %vm2090, 0, %v2214
        %v2217 = vmul.f32 %v2215, %v2215
        %v2218 = vmul.f32 %v2217, -0.001358992
        %v2219 = vadd.f32 %v2218, 0.041655596
        %v2220 = vmul.f32 %v2217, %v2219
        %v2221 = vadd.f32 %v2220, -0.4999988
        %v2222 = vmul.f32 %v2217, %v2221
        %v2223 = vadd.f32 1.0, %v2222
        %v2224 = vmul.f32 %v2215, %v2215
        %v2225 = vmul.f32 %v2224, -0.00019511016
        %v2226 = vadd.f32 %v2225, 0.008332121
        %v2227 = vmul.f32 %v2224, %v2226
        %v2228 = vadd.f32 %v2227, -0.16666654
        %v2229 = vmul.f32 %v2224, %v2228
        %v2230 = vadd.f32 %v2229, 1.0
        %v2231 = vmul.f32 %v2230, %v2215
        %vm2232 = vweird.f32 %v209
        %v2233 = vadd.s32 %v2216, 3
        %v2234 = vand.u32 %v2233, 3
        %vm2235 = vcmp.lt.s32.totalorder %v2234, 2
        %vm2236 = vcmp.eq.s32.totalorder %v2234, 0
        %v2237 = vxor.u32 %v2231, 2147483648
        %v2238 = vsel %vm2236, %v2223, %v2237
        %vm2239 = vcmp.eq.s32.totalorder %v2234, 2
        %v2240 = vxor.u32 %v2223, 2147483648
        %v2241 = vsel %vm2239, %v2240, %v2231
        %v2242 = vsel %vm2235, %v2238, %v2241
        %v2243 = vsel %vm2232, nan, %v2242
        %v2244 = vand.u32 2147483647, %v210
        %vm2245 = vcmp.le.f32.partialorder %v2244, 0.7853982
        %vm2246 = vcmp.lt.s32.totalorder %v210, 0
        %v2247 = vand.u32 %v210, 2139095040
        %v2248 = vshrl.u32 %v2247, 23
        %v2249 = vsub.s32 %v2248, 127
        %v2250 = vand.u32 2147483647, %v210
        %v2251 = vand.u32 %v2250, 8388607
        %v2252 = vor.u32 %v2251, 8388608
        %v2253 = vsub.s32 0, %v2252
        %v2254 = vadd.s32 %v2249, 1
        %vm2255 = vcmp.gt.s32.totalorder %v2254, 0
        %v2256 = vsel %vm2255, %v2254, 0
        %v2257 = vshrl.u32 %v2256, 5
        %v2258 = vand.u32 %v2256, 31
        %v2259 = vsub.s32 32, %v2258
        %v2260 = vshrl.u32 683565275, %v2259
        %v2261 = vshll.u32 683565275, %v2258
        %v2262 = vshrl.u32 2475754826, %v2259
        %v2263 = vor.u32 %v2261, %v2262
        %v2264 = vshll.u32 2475754826, %v2258
        %v2265 = vshrl.u32 2131351028, %v2259
        %v2266 = vor.u32 %v2264, %v2265
        %v2267 = vshll.u32 2131351028, %v2258
        %v2268 = vshrl.u32 2102212464, %v2259
        %v2269 = vor.u32 %v2267, %v2268
        %v2270 = vshll.u32 2102212464, %v2258
        %v2271 = vshrl.u32 920167782, %v2259
        %v2272 = vor.u32 %v2270, %v2271
        %v2273 = vshll.u32 920167782, %v2258
        %v2274 = vshrl.u32 1326507024, %v2259
        %v2275 = vor.u32 %v2273, %v2274
        %vm2276 = vcmp.lt.s32.totalorder %v2257, 1
        %vm2277 = vcmp.lt.s32.totalorder %v2257, 2
        %vm2278 = vcmp.lt.s32.totalorder %v2257, 3
        %vm2279 = vcmp.lt.s32.totalorder %v2257, 4
        %v2280 = vsel %vm2276, %v2260, %v2263
        %v2281 = vsel %vm2279, %v2269, 2102212464
        %v2282 = vsel %vm2278, %v2266, %v2281
        %v2283 = vsel %vm2277, %v2280, %v2282
        %v2284 = vsel %vm2276, %v2263, %v2266
        %v2285 = vsel %vm2279, %v2272, 920167782
        %v2286 = vsel %vm2278, %v2269, %v2285
        %v2287 = vsel %vm2277, %v2284, %v2286
        %v2288 = vsel %vm2276, %v2266, %v2269
        %v2289 = vsel %vm2279, %v2275, 1326507024
        %v2290 = vsel %vm2278, %v2272, %v2289
        %v2291 = vsel %vm2277, %v2288, %v2290
        %v2292 = vshll.u32 %v2252, 8
        %v2293 = vand.u32 %v2292, 65535
        %v2294 = vshrl.u32 %v2292, 16
        %v2295 = vand.u32 %v2291, 65535
        %v2296 = vshrl.u32 %v2291, 16
        %v2297 = vmul.u32 %v2293, %v2295
        %v2298 = vmul.u32 %v2293, %v2296
        %v2299 = vmul.u32 %v2294, %v2295
        %v2300 = vmul.u32 %v2294, %v2296
        %v2301 = vshll.u32 %v2298, 16
        %v2302 = vshrl.u32 %v2298, 16
        %v2303 = vshll.u32 %v2299, 16
        %v2304 = vshrl.u32 %v2299, 16
        %vm2305 = vc.u32 %v2297, %v2301
        %v2306 = vsel %vm2305, 1, 0
        %v2307 = vadd.s32 %v2297, %v2301
        %v2308 = vadd.s32 %v2300, %v2306
        %vm2309 = vc.u32 %v2307, %v2303
        %v2310 = vsel %vm2309, 1, 0
        %v2311 = vadd.s32 %v2307, %v2303
        %v2312 = vadd.s32 %v2308, %v2310
        %v2313 = vadd.s32 %v2312, %v2302
        %v2314 = vadd.s32 %v2313, %v2304
        %v2315 = vand.u32 %v2292, 65535
        %v2316 = vshrl.u32 %v2292, 16
        %v2317 = vand.u32 %v2287, 65535
        %v2318 = vshrl.u32 %v2287, 16
        %v2319 = vmul.u32 %v2315, %v2317
        %v2320 = vmul.u32 %v2315, %v2318
        %v2321 = vmul.u32 %v2316, %v2317
        %v2322 = vmul.u32 %v2316, %v2318
        %v2323 = vshll.u32 %v2320, 16
        %v2324 = vshrl.u32 %v2320, 16
        %v2325 = vshll.u32 %v2321, 16
        %v2326 = vshrl.u32 %v2321, 16
        %vm2327 = vc.u32 %v2319, %v2323
        %v2328 = vsel %vm2327, 1, 0
        %v2329 = vadd.s32 %v2319, %v2323
        %v2330 = vadd.s32 %v2322, %v2328
        %vm2331 = vc.u32 %v2329, %v2325
        %v2332 = vsel %vm2331, 1, 0
        %v2333 = vadd.s32 %v2329, %v2325
        %v2334 = vadd.s32 %v2330, %v2332
        %v2335 = vadd.s32 %v2334, %v2324
        %v2336 = vadd.s32 %v2335, %v2326
        %v2337 = vmul.u32 %v2292, %v2283
        %v2338 = vadd.s32 %v2314, %v2333
        %vm2339 = vc.u32 %v2314, %v2333
        %v2340 = vadd.s32 %v2336, 1
        %v2341 = vsel %vm2339, %v2340, %v2336
        %v2342 = vadd.s32 %v2337, %v2341
        %v2343 = vadd.s32 %v2342, 536870912
        %v2344 = vshrl.u32 %v2343, 30
        %v2345 = vshll.u32 %v2344, 30
        %v2346 = vsub.s32 %v2342, %v2345
        %vm2347 = vcmp.lt.s32.totalorder %v2346, 0
        %v2348 = vsub.s32 0, %v2346
        %v2349 = vsel %vm2347, %v2348, %v2346
        %v2350 = vclz %v2349
        %v2351 = vsub.s32 %v2350, 2
        %vm2352 = vcmp.gt.s32.totalorder 0, %v2351
        %v2353 = vsel %vm2352, 0, %v2351
        %v2354 = vsub.s32 32, %v2353
        %v2355 = vshll.u32 %v2346, %v2353
        %v2356 = vshrl.u32 %v2338, %v2354
        %v2357 = vor.u32 %v2355, %v2356
        %v2358 = vsub.s32 4294967266, %v2353
        %v2359 = vadd.s32 %v2358, 127
        %v2360 = vshll.u32 %v2359, 23
        %v2361 = vor.u32 4788187, %v2360
        %v2362 = vand.u32 2147483647, %v2361
        %v2364 = vcvt.s32.f32 %v2357
        %v2365 = vmul.f32 %v2364, %v2362
        %v2366 = vxor.u32 %v2365, 2147483648
        %v2367 = vsel %vm2246, %v2366, %v2365
        %v2368 = vsub.s32 4, %v2344
        %v2369 = vsel %vm2246, %v2368, %v2344
        %v2370 = vsel %vm2245, %v210, %v2367
        %v2371 = vsel %vm2245, 0, %v2369
        %v2372 = vmul.f32 %v2370, %v2370
        %v2373 = vmul.f32 %v2372, -0.001358992
        %v2374 = vadd.f32 %v2373, 0.041655596
        %v2375 = vmul.f32 %v2372, %v2374
        %v2376 = vadd.f32 %v2375, -0.4999988
        %v2377 = vmul.f32 %v2372, %v2376
        %v2378 = vadd.f32 1.0, %v2377
        %v2379 = vmul.f32 %v2370, %v2370
        %v2380 = vmul.f32 %v2379, -0.00019511016
        %v2381 = vadd.f32 %v2380, 0.008332121
        %v2382 = vmul.f32 %v2379, %v2381
        %v2383 = vadd.f32 %v2382, -0.16666654
        %v2384 = vmul.f32 %v2379, %v2383
        %v2385 = vadd.f32 %v2384, 1.0
        %v2386 = vmul.f32 %v2385, %v2370
        %vm2387 = vweird.f32 %v210
        %v2388 = vadd.s32 %v2371, 3
        %v2389 = vand.u32 %v2388, 3
        %vm2390 = vcmp.lt.s32.totalorder %v2389, 2
        %vm2391 = vcmp.eq.s32.totalorder %v2389, 0
        %v2392 = vxor.u32 %v2386, 2147483648
        %v2393 = vsel %vm2391, %v2378, %v2392
        %vm2394 = vcmp.eq.s32.totalorder %v2389, 2
        %v2395 = vxor.u32 %v2378, 2147483648
        %v2396 = vsel %vm2394, %v2395, %v2386
        %v2397 = vsel %vm2390, %v2393, %v2396
        %v2398 = vsel %vm2387, nan, %v2397
        %v2399 = vand.u32 2147483647, %v211
        %vm2400 = vcmp.le.f32.partialorder %v2399, 0.7853982
        %vm2401 = vcmp.lt.s32.totalorder %v211, 0
        %v2402 = vand.u32 %v211, 2139095040
        %v2403 = vshrl.u32 %v2402, 23
        %v2404 = vsub.s32 %v2403, 127
        %v2405 = vand.u32 2147483647, %v211
        %v2406 = vand.u32 %v2405, 8388607
        %v2407 = vor.u32 %v2406, 8388608
        %v2408 = vsub.s32 0, %v2407
        %v2409 = vadd.s32 %v2404, 1
        %vm2410 = vcmp.gt.s32.totalorder %v2409, 0
        %v2411 = vsel %vm2410, %v2409, 0
        %v2412 = vshrl.u32 %v2411, 5
        %v2413 = vand.u32 %v2411, 31
        %v2414 = vsub.s32 32, %v2413
        %v2415 = vshrl.u32 683565275, %v2414
        %v2416 = vshll.u32 683565275, %v2413
        %v2417 = vshrl.u32 2475754826, %v2414
        %v2418 = vor.u32 %v2416, %v2417
        %v2419 = vshll.u32 2475754826, %v2413
        %v2420 = vshrl.u32 2131351028, %v2414
        %v2421 = vor.u32 %v2419, %v2420
        %v2422 = vshll.u32 2131351028, %v2413
        %v2423 = vshrl.u32 2102212464, %v2414
        %v2424 = vor.u32 %v2422, %v2423
        %v2425 = vshll.u32 2102212464, %v2413
        %v2426 = vshrl.u32 920167782, %v2414
        %v2427 = vor.u32 %v2425, %v2426
        %v2428 = vshll.u32 920167782, %v2413
        %v2429 = vshrl.u32 1326507024, %v2414
        %v2430 = vor.u32 %v2428, %v2429
        %vm2431 = vcmp.lt.s32.totalorder %v2412, 1
        %vm2432 = vcmp.lt.s32.totalorder %v2412, 2
        %vm2433 = vcmp.lt.s32.totalorder %v2412, 3
        %vm2434 = vcmp.lt.s32.totalorder %v2412, 4
        %v2435 = vsel %vm2431, %v2415, %v2418
        %v2436 = vsel %vm2434, %v2424, 2102212464
        %v2437 = vsel %vm2433, %v2421, %v2436
        %v2438 = vsel %vm2432, %v2435, %v2437
        %v2439 = vsel %vm2431, %v2418, %v2421
        %v2440 = vsel %vm2434, %v2427, 920167782
        %v2441 = vsel %vm2433, %v2424, %v2440
        %v2442 = vsel %vm2432, %v2439, %v2441
        %v2443 = vsel %vm2431, %v2421, %v2424
        %v2444 = vsel %vm2434, %v2430, 1326507024
        %v2445 = vsel %vm2433, %v2427, %v2444
        %v2446 = vsel %vm2432, %v2443, %v2445
        %v2447 = vshll.u32 %v2407, 8
        %v2448 = vand.u32 %v2447, 65535
        %v2449 = vshrl.u32 %v2447, 16
        %v2450 = vand.u32 %v2446, 65535
        %v2451 = vshrl.u32 %v2446, 16
        %v2452 = vmul.u32 %v2448, %v2450
        %v2453 = vmul.u32 %v2448, %v2451
        %v2454 = vmul.u32 %v2449, %v2450
        %v2455 = vmul.u32 %v2449, %v2451
        %v2456 = vshll.u32 %v2453, 16
        %v2457 = vshrl.u32 %v2453, 16
        %v2458 = vshll.u32 %v2454, 16
        %v2459 = vshrl.u32 %v2454, 16
        %vm2460 = vc.u32 %v2452, %v2456
        %v2461 = vsel %vm2460, 1, 0
        %v2462 = vadd.s32 %v2452, %v2456
        %v2463 = vadd.s32 %v2455, %v2461
        %vm2464 = vc.u32 %v2462, %v2458
        %v2465 = vsel %vm2464, 1, 0
        %v2466 = vadd.s32 %v2462, %v2458
        %v2467 = vadd.s32 %v2463, %v2465
        %v2468 = vadd.s32 %v2467, %v2457
        %v2469 = vadd.s32 %v2468, %v2459
        %v2470 = vand.u32 %v2447, 65535
        %v2471 = vshrl.u32 %v2447, 16
        %v2472 = vand.u32 %v2442, 65535
        %v2473 = vshrl.u32 %v2442, 16
        %v2474 = vmul.u32 %v2470, %v2472
        %v2475 = vmul.u32 %v2470, %v2473
        %v2476 = vmul.u32 %v2471, %v2472
        %v2477 = vmul.u32 %v2471, %v2473
        %v2478 = vshll.u32 %v2475, 16
        %v2479 = vshrl.u32 %v2475, 16
        %v2480 = vshll.u32 %v2476, 16
        %v2481 = vshrl.u32 %v2476, 16
        %vm2482 = vc.u32 %v2474, %v2478
        %v2483 = vsel %vm2482, 1, 0
        %v2484 = vadd.s32 %v2474, %v2478
        %v2485 = vadd.s32 %v2477, %v2483
        %vm2486 = vc.u32 %v2484, %v2480
        %v2487 = vsel %vm2486, 1, 0
        %v2488 = vadd.s32 %v2484, %v2480
        %v2489 = vadd.s32 %v2485, %v2487
        %v2490 = vadd.s32 %v2489, %v2479
        %v2491 = vadd.s32 %v2490, %v2481
        %v2492 = vmul.u32 %v2447, %v2438
        %v2493 = vadd.s32 %v2469, %v2488
        %vm2494 = vc.u32 %v2469, %v2488
        %v2495 = vadd.s32 %v2491, 1
        %v2496 = vsel %vm2494, %v2495, %v2491
        %v2497 = vadd.s32 %v2492, %v2496
        %v2498 = vadd.s32 %v2497, 536870912
        %v2499 = vshrl.u32 %v2498, 30
        %v2500 = vshll.u32 %v2499, 30
        %v2501 = vsub.s32 %v2497, %v2500
        %vm2502 = vcmp.lt.s32.totalorder %v2501, 0
        %v2503 = vsub.s32 0, %v2501
        %v2504 = vsel %vm2502, %v2503, %v2501
        %v2505 = vclz %v2504
        %v2506 = vsub.s32 %v2505, 2
        %vm2507 = vcmp.gt.s32.totalorder 0, %v2506
        %v2508 = vsel %vm2507, 0, %v2506
        %v2509 = vsub.s32 32, %v2508
        %v2510 = vshll.u32 %v2501, %v2508
        %v2511 = vshrl.u32 %v2493, %v2509
        %v2512 = vor.u32 %v2510, %v2511
        %v2513 = vsub.s32 4294967266, %v2508
        %v2514 = vadd.s32 %v2513, 127
        %v2515 = vshll.u32 %v2514, 23
        %v2516 = vor.u32 4788187, %v2515
        %v2517 = vand.u32 2147483647, %v2516
        %v2519 = vcvt.s32.f32 %v2512
        %v2520 = vmul.f32 %v2519, %v2517
        %v2521 = vxor.u32 %v2520, 2147483648
        %v2522 = vsel %vm2401, %v2521, %v2520
        %v2523 = vsub.s32 4, %v2499
        %v2524 = vsel %vm2401, %v2523, %v2499
        %v2525 = vsel %vm2400, %v211, %v2522
        %v2526 = vsel %vm2400, 0, %v2524
        %v2527 = vmul.f32 %v2525, %v2525
        %v2528 = vmul.f32 %v2527, -0.001358992
        %v2529 = vadd.f32 %v2528, 0.041655596
        %v2530 = vmul.f32 %v2527, %v2529
        %v2531 = vadd.f32 %v2530, -0.4999988
        %v2532 = vmul.f32 %v2527, %v2531
        %v2533 = vadd.f32 1.0, %v2532
        %v2534 = vmul.f32 %v2525, %v2525
        %v2535 = vmul.f32 %v2534, -0.00019511016
        %v2536 = vadd.f32 %v2535, 0.008332121
        %v2537 = vmul.f32 %v2534, %v2536
        %v2538 = vadd.f32 %v2537, -0.16666654
        %v2539 = vmul.f32 %v2534, %v2538
        %v2540 = vadd.f32 %v2539, 1.0
        %v2541 = vmul.f32 %v2540, %v2525
        %vm2542 = vweird.f32 %v211
        %v2543 = vadd.s32 %v2526, 3
        %v2544 = vand.u32 %v2543, 3
        %vm2545 = vcmp.lt.s32.totalorder %v2544, 2
        %vm2546 = vcmp.eq.s32.totalorder %v2544, 0
        %v2547 = vxor.u32 %v2541, 2147483648
        %v2548 = vsel %vm2546, %v2533, %v2547
        %vm2549 = vcmp.eq.s32.totalorder %v2544, 2
        %v2550 = vxor.u32 %v2533, 2147483648
        %v2551 = vsel %vm2549, %v2550, %v2541
        %v2552 = vsel %vm2545, %v2548, %v2551
        %v2553 = vsel %vm2542, nan, %v2552
        %v2554 = vand.u32 2147483647, %v212
        %vm2555 = vcmp.le.f32.partialorder %v2554, 0.7853982
        %vm2556 = vcmp.lt.s32.totalorder %v212, 0
        %v2557 = vand.u32 %v212, 2139095040
        %v2558 = vshrl.u32 %v2557, 23
        %v2559 = vsub.s32 %v2558, 127
        %v2560 = vand.u32 2147483647, %v212
        %v2561 = vand.u32 %v2560, 8388607
        %v2562 = vor.u32 %v2561, 8388608
        %v2563 = vsub.s32 0, %v2562
        %v2564 = vadd.s32 %v2559, 1
        %vm2565 = vcmp.gt.s32.totalorder %v2564, 0
        %v2566 = vsel %vm2565, %v2564, 0
        %v2567 = vshrl.u32 %v2566, 5
        %v2568 = vand.u32 %v2566, 31
        %v2569 = vsub.s32 32, %v2568
        %v2570 = vshrl.u32 683565275, %v2569
        %v2571 = vshll.u32 683565275, %v2568
        %v2572 = vshrl.u32 2475754826, %v2569
        %v2573 = vor.u32 %v2571, %v2572
        %v2574 = vshll.u32 2475754826, %v2568
        %v2575 = vshrl.u32 2131351028, %v2569
        %v2576 = vor.u32 %v2574, %v2575
        %v2577 = vshll.u32 2131351028, %v2568
        %v2578 = vshrl.u32 2102212464, %v2569
        %v2579 = vor.u32 %v2577, %v2578
        %v2580 = vshll.u32 2102212464, %v2568
        %v2581 = vshrl.u32 920167782, %v2569
        %v2582 = vor.u32 %v2580, %v2581
        %v2583 = vshll.u32 920167782, %v2568
        %v2584 = vshrl.u32 1326507024, %v2569
        %v2585 = vor.u32 %v2583, %v2584
        %vm2586 = vcmp.lt.s32.totalorder %v2567, 1
        %vm2587 = vcmp.lt.s32.totalorder %v2567, 2
        %vm2588 = vcmp.lt.s32.totalorder %v2567, 3
        %vm2589 = vcmp.lt.s32.totalorder %v2567, 4
        %v2590 = vsel %vm2586, %v2570, %v2573
        %v2591 = vsel %vm2589, %v2579, 2102212464
        %v2592 = vsel %vm2588, %v2576, %v2591
        %v2593 = vsel %vm2587, %v2590, %v2592
        %v2594 = vsel %vm2586, %v2573, %v2576
        %v2595 = vsel %vm2589, %v2582, 920167782
        %v2596 = vsel %vm2588, %v2579, %v2595
        %v2597 = vsel %vm2587, %v2594, %v2596
        %v2598 = vsel %vm2586, %v2576, %v2579
        %v2599 = vsel %vm2589, %v2585, 1326507024
        %v2600 = vsel %vm2588, %v2582, %v2599
        %v2601 = vsel %vm2587, %v2598, %v2600
        %v2602 = vshll.u32 %v2562, 8
        %v2603 = vand.u32 %v2602, 65535
        %v2604 = vshrl.u32 %v2602, 16
        %v2605 = vand.u32 %v2601, 65535
        %v2606 = vshrl.u32 %v2601, 16
        %v2607 = vmul.u32 %v2603, %v2605
        %v2608 = vmul.u32 %v2603, %v2606
        %v2609 = vmul.u32 %v2604, %v2605
        %v2610 = vmul.u32 %v2604, %v2606
        %v2611 = vshll.u32 %v2608, 16
        %v2612 = vshrl.u32 %v2608, 16
        %v2613 = vshll.u32 %v2609, 16
        %v2614 = vshrl.u32 %v2609, 16
        %vm2615 = vc.u32 %v2607, %v2611
        %v2616 = vsel %vm2615, 1, 0
        %v2617 = vadd.s32 %v2607, %v2611
        %v2618 = vadd.s32 %v2610, %v2616
        %vm2619 = vc.u32 %v2617, %v2613
        %v2620 = vsel %vm2619, 1, 0
        %v2621 = vadd.s32 %v2617, %v2613
        %v2622 = vadd.s32 %v2618, %v2620
        %v2623 = vadd.s32 %v2622, %v2612
        %v2624 = vadd.s32 %v2623, %v2614
        %v2625 = vand.u32 %v2602, 65535
        %v2626 = vshrl.u32 %v2602, 16
        %v2627 = vand.u32 %v2597, 65535
        %v2628 = vshrl.u32 %v2597, 16
        %v2629 = vmul.u32 %v2625, %v2627
        %v2630 = vmul.u32 %v2625, %v2628
        %v2631 = vmul.u32 %v2626, %v2627
        %v2632 = vmul.u32 %v2626, %v2628
        %v2633 = vshll.u32 %v2630, 16
        %v2634 = vshrl.u32 %v2630, 16
        %v2635 = vshll.u32 %v2631, 16
        %v2636 = vshrl.u32 %v2631, 16
        %vm2637 = vc.u32 %v2629, %v2633
        %v2638 = vsel %vm2637, 1, 0
        %v2639 = vadd.s32 %v2629, %v2633
        %v2640 = vadd.s32 %v2632, %v2638
        %vm2641 = vc.u32 %v2639, %v2635
        %v2642 = vsel %vm2641, 1, 0
        %v2643 = vadd.s32 %v2639, %v2635
        %v2644 = vadd.s32 %v2640, %v2642
        %v2645 = vadd.s32 %v2644, %v2634
        %v2646 = vadd.s32 %v2645, %v2636
        %v2647 = vmul.u32 %v2602, %v2593
        %v2648 = vadd.s32 %v2624, %v2643
        %vm2649 = vc.u32 %v2624, %v2643
        %v2650 = vadd.s32 %v2646, 1
        %v2651 = vsel %vm2649, %v2650, %v2646
        %v2652 = vadd.s32 %v2647, %v2651
        %v2653 = vadd.s32 %v2652, 536870912
        %v2654 = vshrl.u32 %v2653, 30
        %v2655 = vshll.u32 %v2654, 30
        %v2656 = vsub.s32 %v2652, %v2655
        %vm2657 = vcmp.lt.s32.totalorder %v2656, 0
        %v2658 = vsub.s32 0, %v2656
        %v2659 = vsel %vm2657, %v2658, %v2656
        %v2660 = vclz %v2659
        %v2661 = vsub.s32 %v2660, 2
        %vm2662 = vcmp.gt.s32.totalorder 0, %v2661
        %v2663 = vsel %vm2662, 0, %v2661
        %v2664 = vsub.s32 32, %v2663
        %v2665 = vshll.u32 %v2656, %v2663
        %v2666 = vshrl.u32 %v2648, %v2664
        %v2667 = vor.u32 %v2665, %v2666
        %v2668 = vsub.s32 4294967266, %v2663
        %v2669 = vadd.s32 %v2668, 127
        %v2670 = vshll.u32 %v2669, 23
        %v2671 = vor.u32 4788187, %v2670
        %v2672 = vand.u32 2147483647, %v2671
        %v2674 = vcvt.s32.f32 %v2667
        %v2675 = vmul.f32 %v2674, %v2672
        %v2676 = vxor.u32 %v2675, 2147483648
        %v2677 = vsel %vm2556, %v2676, %v2675
        %v2678 = vsub.s32 4, %v2654
        %v2679 = vsel %vm2556, %v2678, %v2654
        %v2680 = vsel %vm2555, %v212, %v2677
        %v2681 = vsel %vm2555, 0, %v2679
        %v2682 = vmul.f32 %v2680, %v2680
        %v2683 = vmul.f32 %v2682, -0.001358992
        %v2684 = vadd.f32 %v2683, 0.041655596
        %v2685 = vmul.f32 %v2682, %v2684
        %v2686 = vadd.f32 %v2685, -0.4999988
        %v2687 = vmul.f32 %v2682, %v2686
        %v2688 = vadd.f32 1.0, %v2687
        %v2689 = vmul.f32 %v2680, %v2680
        %v2690 = vmul.f32 %v2689, -0.00019511016
        %v2691 = vadd.f32 %v2690, 0.008332121
        %v2692 = vmul.f32 %v2689, %v2691
        %v2693 = vadd.f32 %v2692, -0.16666654
        %v2694 = vmul.f32 %v2689, %v2693
        %v2695 = vadd.f32 %v2694, 1.0
        %v2696 = vmul.f32 %v2695, %v2680
        %vm2697 = vweird.f32 %v212
        %v2698 = vadd.s32 %v2681, 3
        %v2699 = vand.u32 %v2698, 3
        %vm2700 = vcmp.lt.s32.totalorder %v2699, 2
        %vm2701 = vcmp.eq.s32.totalorder %v2699, 0
        %v2702 = vxor.u32 %v2696, 2147483648
        %v2703 = vsel %vm2701, %v2688, %v2702
        %vm2704 = vcmp.eq.s32.totalorder %v2699, 2
        %v2705 = vxor.u32 %v2688, 2147483648
        %v2706 = vsel %vm2704, %v2705, %v2696
        %v2707 = vsel %vm2700, %v2703, %v2706
        %v2708 = vsel %vm2697, nan, %v2707
        %v2709 = vand.u32 2147483647, %v213
        %vm2710 = vcmp.le.f32.partialorder %v2709, 0.7853982
        %vm2711 = vcmp.lt.s32.totalorder %v213, 0
        %v2712 = vand.u32 %v213, 2139095040
        %v2713 = vshrl.u32 %v2712, 23
        %v2714 = vsub.s32 %v2713, 127
        %v2715 = vand.u32 2147483647, %v213
        %v2716 = vand.u32 %v2715, 8388607
        %v2717 = vor.u32 %v2716, 8388608
        %v2718 = vsub.s32 0, %v2717
        %v2719 = vadd.s32 %v2714, 1
        %vm2720 = vcmp.gt.s32.totalorder %v2719, 0
        %v2721 = vsel %vm2720, %v2719, 0
        %v2722 = vshrl.u32 %v2721, 5
        %v2723 = vand.u32 %v2721, 31
        %v2724 = vsub.s32 32, %v2723
        %v2725 = vshrl.u32 683565275, %v2724
        %v2726 = vshll.u32 683565275, %v2723
        %v2727 = vshrl.u32 2475754826, %v2724
        %v2728 = vor.u32 %v2726, %v2727
        %v2729 = vshll.u32 2475754826, %v2723
        %v2730 = vshrl.u32 2131351028, %v2724
        %v2731 = vor.u32 %v2729, %v2730
        %v2732 = vshll.u32 2131351028, %v2723
        %v2733 = vshrl.u32 2102212464, %v2724
        %v2734 = vor.u32 %v2732, %v2733
        %v2735 = vshll.u32 2102212464, %v2723
        %v2736 = vshrl.u32 920167782, %v2724
        %v2737 = vor.u32 %v2735, %v2736
        %v2738 = vshll.u32 920167782, %v2723
        %v2739 = vshrl.u32 1326507024, %v2724
        %v2740 = vor.u32 %v2738, %v2739
        %vm2741 = vcmp.lt.s32.totalorder %v2722, 1
        %vm2742 = vcmp.lt.s32.totalorder %v2722, 2
        %vm2743 = vcmp.lt.s32.totalorder %v2722, 3
        %vm2744 = vcmp.lt.s32.totalorder %v2722, 4
        %v2745 = vsel %vm2741, %v2725, %v2728
        %v2746 = vsel %vm2744, %v2734, 2102212464
        %v2747 = vsel %vm2743, %v2731, %v2746
        %v2748 = vsel %vm2742, %v2745, %v2747
        %v2749 = vsel %vm2741, %v2728, %v2731
        %v2750 = vsel %vm2744, %v2737, 920167782
        %v2751 = vsel %vm2743, %v2734, %v2750
        %v2752 = vsel %vm2742, %v2749, %v2751
        %v2753 = vsel %vm2741, %v2731, %v2734
        %v2754 = vsel %vm2744, %v2740, 1326507024
        %v2755 = vsel %vm2743, %v2737, %v2754
        %v2756 = vsel %vm2742, %v2753, %v2755
        %v2757 = vshll.u32 %v2717, 8
        %v2758 = vand.u32 %v2757, 65535
        %v2759 = vshrl.u32 %v2757, 16
        %v2760 = vand.u32 %v2756, 65535
        %v2761 = vshrl.u32 %v2756, 16
        %v2762 = vmul.u32 %v2758, %v2760
        %v2763 = vmul.u32 %v2758, %v2761
        %v2764 = vmul.u32 %v2759, %v2760
        %v2765 = vmul.u32 %v2759, %v2761
        %v2766 = vshll.u32 %v2763, 16
        %v2767 = vshrl.u32 %v2763, 16
        %v2768 = vshll.u32 %v2764, 16
        %v2769 = vshrl.u32 %v2764, 16
        %vm2770 = vc.u32 %v2762, %v2766
        %v2771 = vsel %vm2770, 1, 0
        %v2772 = vadd.s32 %v2762, %v2766
        %v2773 = vadd.s32 %v2765, %v2771
        %vm2774 = vc.u32 %v2772, %v2768
        %v2775 = vsel %vm2774, 1, 0
        %v2776 = vadd.s32 %v2772, %v2768
        %v2777 = vadd.s32 %v2773, %v2775
        %v2778 = vadd.s32 %v2777, %v2767
        %v2779 = vadd.s32 %v2778, %v2769
        %v2780 = vand.u32 %v2757, 65535
        %v2781 = vshrl.u32 %v2757, 16
        %v2782 = vand.u32 %v2752, 65535
        %v2783 = vshrl.u32 %v2752, 16
        %v2784 = vmul.u32 %v2780, %v2782
        %v2785 = vmul.u32 %v2780, %v2783
        %v2786 = vmul.u32 %v2781, %v2782
        %v2787 = vmul.u32 %v2781, %v2783
        %v2788 = vshll.u32 %v2785, 16
        %v2789 = vshrl.u32 %v2785, 16
        %v2790 = vshll.u32 %v2786, 16
        %v2791 = vshrl.u32 %v2786, 16
        %vm2792 = vc.u32 %v2784, %v2788
        %v2793 = vsel %vm2792, 1, 0
        %v2794 = vadd.s32 %v2784, %v2788
        %v2795 = vadd.s32 %v2787, %v2793
        %vm2796 = vc.u32 %v2794, %v2790
        %v2797 = vsel %vm2796, 1, 0
        %v2798 = vadd.s32 %v2794, %v2790
        %v2799 = vadd.s32 %v2795, %v2797
        %v2800 = vadd.s32 %v2799, %v2789
        %v2801 = vadd.s32 %v2800, %v2791
        %v2802 = vmul.u32 %v2757, %v2748
        %v2803 = vadd.s32 %v2779, %v2798
        %vm2804 = vc.u32 %v2779, %v2798
        %v2805 = vadd.s32 %v2801, 1
        %v2806 = vsel %vm2804, %v2805, %v2801
        %v2807 = vadd.s32 %v2802, %v2806
        %v2808 = vadd.s32 %v2807, 536870912
        %v2809 = vshrl.u32 %v2808, 30
        %v2810 = vshll.u32 %v2809, 30
        %v2811 = vsub.s32 %v2807, %v2810
        %vm2812 = vcmp.lt.s32.totalorder %v2811, 0
        %v2813 = vsub.s32 0, %v2811
        %v2814 = vsel %vm2812, %v2813, %v2811
        %v2815 = vclz %v2814
        %v2816 = vsub.s32 %v2815, 2
        %vm2817 = vcmp.gt.s32.totalorder 0, %v2816
        %v2818 = vsel %vm2817, 0, %v2816
        %v2819 = vsub.s32 32, %v2818
        %v2820 = vshll.u32 %v2811, %v2818
        %v2821 = vshrl.u32 %v2803, %v2819
        %v2822 = vor.u32 %v2820, %v2821
        %v2823 = vsub.s32 4294967266, %v2818
        %v2824 = vadd.s32 %v2823, 127
        %v2825 = vshll.u32 %v2824, 23
        %v2826 = vor.u32 4788187, %v2825
        %v2827 = vand.u32 2147483647, %v2826
        %v2829 = vcvt.s32.f32 %v2822
        %v2830 = vmul.f32 %v2829, %v2827
        %v2831 = vxor.u32 %v2830, 2147483648
        %v2832 = vsel %vm2711, %v2831, %v2830
        %v2833 = vsub.s32 4, %v2809
        %v2834 = vsel %vm2711, %v2833, %v2809
        %v2835 = vsel %vm2710, %v213, %v2832
        %v2836 = vsel %vm2710, 0, %v2834
        %v2837 = vmul.f32 %v2835, %v2835
        %v2838 = vmul.f32 %v2837, -0.001358992
        %v2839 = vadd.f32 %v2838, 0.041655596
        %v2840 = vmul.f32 %v2837, %v2839
        %v2841 = vadd.f32 %v2840, -0.4999988
        %v2842 = vmul.f32 %v2837, %v2841
        %v2843 = vadd.f32 1.0, %v2842
        %v2844 = vmul.f32 %v2835, %v2835
        %v2845 = vmul.f32 %v2844, -0.00019511016
        %v2846 = vadd.f32 %v2845, 0.008332121
        %v2847 = vmul.f32 %v2844, %v2846
        %v2848 = vadd.f32 %v2847, -0.16666654
        %v2849 = vmul.f32 %v2844, %v2848
        %v2850 = vadd.f32 %v2849, 1.0
        %v2851 = vmul.f32 %v2850, %v2835
        %vm2852 = vweird.f32 %v213
        %v2853 = vadd.s32 %v2836, 3
        %v2854 = vand.u32 %v2853, 3
        %vm2855 = vcmp.lt.s32.totalorder %v2854, 2
        %vm2856 = vcmp.eq.s32.totalorder %v2854, 0
        %v2857 = vxor.u32 %v2851, 2147483648
        %v2858 = vsel %vm2856, %v2843, %v2857
        %vm2859 = vcmp.eq.s32.totalorder %v2854, 2
        %v2860 = vxor.u32 %v2843, 2147483648
        %v2861 = vsel %vm2859, %v2860, %v2851
        %v2862 = vsel %vm2855, %v2858, %v2861
        %v2863 = vsel %vm2852, nan, %v2862
        %v2864 = vand.u32 2147483647, %v214
        %vm2865 = vcmp.le.f32.partialorder %v2864, 0.7853982
        %vm2866 = vcmp.lt.s32.totalorder %v214, 0
        %v2867 = vand.u32 %v214, 2139095040
        %v2868 = vshrl.u32 %v2867, 23
        %v2869 = vsub.s32 %v2868, 127
        %v2870 = vand.u32 2147483647, %v214
        %v2871 = vand.u32 %v2870, 8388607
        %v2872 = vor.u32 %v2871, 8388608
        %v2873 = vsub.s32 0, %v2872
        %v2874 = vadd.s32 %v2869, 1
        %vm2875 = vcmp.gt.s32.totalorder %v2874, 0
        %v2876 = vsel %vm2875, %v2874, 0
        %v2877 = vshrl.u32 %v2876, 5
        %v2878 = vand.u32 %v2876, 31
        %v2879 = vsub.s32 32, %v2878
        %v2880 = vshrl.u32 683565275, %v2879
        %v2881 = vshll.u32 683565275, %v2878
        %v2882 = vshrl.u32 2475754826, %v2879
        %v2883 = vor.u32 %v2881, %v2882
        %v2884 = vshll.u32 2475754826, %v2878
        %v2885 = vshrl.u32 2131351028, %v2879
        %v2886 = vor.u32 %v2884, %v2885
        %v2887 = vshll.u32 2131351028, %v2878
        %v2888 = vshrl.u32 2102212464, %v2879
        %v2889 = vor.u32 %v2887, %v2888
        %v2890 = vshll.u32 2102212464, %v2878
        %v2891 = vshrl.u32 920167782, %v2879
        %v2892 = vor.u32 %v2890, %v2891
        %v2893 = vshll.u32 920167782, %v2878
        %v2894 = vshrl.u32 1326507024, %v2879
        %v2895 = vor.u32 %v2893, %v2894
        %vm2896 = vcmp.lt.s32.totalorder %v2877, 1
        %vm2897 = vcmp.lt.s32.totalorder %v2877, 2
        %vm2898 = vcmp.lt.s32.totalorder %v2877, 3
        %vm2899 = vcmp.lt.s32.totalorder %v2877, 4
        %v2900 = vsel %vm2896, %v2880, %v2883
        %v2901 = vsel %vm2899, %v2889, 2102212464
        %v2902 = vsel %vm2898, %v2886, %v2901
        %v2903 = vsel %vm2897, %v2900, %v2902
        %v2904 = vsel %vm2896, %v2883, %v2886
        %v2905 = vsel %vm2899, %v2892, 920167782
        %v2906 = vsel %vm2898, %v2889, %v2905
        %v2907 = vsel %vm2897, %v2904, %v2906
        %v2908 = vsel %vm2896, %v2886, %v2889
        %v2909 = vsel %vm2899, %v2895, 1326507024
        %v2910 = vsel %vm2898, %v2892, %v2909
        %v2911 = vsel %vm2897, %v2908, %v2910
        %v2912 = vshll.u32 %v2872, 8
        %v2913 = vand.u32 %v2912, 65535
        %v2914 = vshrl.u32 %v2912, 16
        %v2915 = vand.u32 %v2911, 65535
        %v2916 = vshrl.u32 %v2911, 16
        %v2917 = vmul.u32 %v2913, %v2915
        %v2918 = vmul.u32 %v2913, %v2916
        %v2919 = vmul.u32 %v2914, %v2915
        %v2920 = vmul.u32 %v2914, %v2916
        %v2921 = vshll.u32 %v2918, 16
        %v2922 = vshrl.u32 %v2918, 16
        %v2923 = vshll.u32 %v2919, 16
        %v2924 = vshrl.u32 %v2919, 16
        %vm2925 = vc.u32 %v2917, %v2921
        %v2926 = vsel %vm2925, 1, 0
        %v2927 = vadd.s32 %v2917, %v2921
        %v2928 = vadd.s32 %v2920, %v2926
        %vm2929 = vc.u32 %v2927, %v2923
        %v2930 = vsel %vm2929, 1, 0
        %v2931 = vadd.s32 %v2927, %v2923
        %v2932 = vadd.s32 %v2928, %v2930
        %v2933 = vadd.s32 %v2932, %v2922
        %v2934 = vadd.s32 %v2933, %v2924
        %v2935 = vand.u32 %v2912, 65535
        %v2936 = vshrl.u32 %v2912, 16
        %v2937 = vand.u32 %v2907, 65535
        %v2938 = vshrl.u32 %v2907, 16
        %v2939 = vmul.u32 %v2935, %v2937
        %v2940 = vmul.u32 %v2935, %v2938
        %v2941 = vmul.u32 %v2936, %v2937
        %v2942 = vmul.u32 %v2936, %v2938
        %v2943 = vshll.u32 %v2940, 16
        %v2944 = vshrl.u32 %v2940, 16
        %v2945 = vshll.u32 %v2941, 16
        %v2946 = vshrl.u32 %v2941, 16
        %vm2947 = vc.u32 %v2939, %v2943
        %v2948 = vsel %vm2947, 1, 0
        %v2949 = vadd.s32 %v2939, %v2943
        %v2950 = vadd.s32 %v2942, %v2948
        %vm2951 = vc.u32 %v2949, %v2945
        %v2952 = vsel %vm2951, 1, 0
        %v2953 = vadd.s32 %v2949, %v2945
        %v2954 = vadd.s32 %v2950, %v2952
        %v2955 = vadd.s32 %v2954, %v2944
        %v2956 = vadd.s32 %v2955, %v2946
        %v2957 = vmul.u32 %v2912, %v2903
        %v2958 = vadd.s32 %v2934, %v2953
        %vm2959 = vc.u32 %v2934, %v2953
        %v2960 = vadd.s32 %v2956, 1
        %v2961 = vsel %vm2959, %v2960, %v2956
        %v2962 = vadd.s32 %v2957, %v2961
        %v2963 = vadd.s32 %v2962, 536870912
        %v2964 = vshrl.u32 %v2963, 30
        %v2965 = vshll.u32 %v2964, 30
        %v2966 = vsub.s32 %v2962, %v2965
        %vm2967 = vcmp.lt.s32.totalorder %v2966, 0
        %v2968 = vsub.s32 0, %v2966
        %v2969 = vsel %vm2967, %v2968, %v2966
        %v2970 = vclz %v2969
        %v2971 = vsub.s32 %v2970, 2
        %vm2972 = vcmp.gt.s32.totalorder 0, %v2971
        %v2973 = vsel %vm2972, 0, %v2971
        %v2974 = vsub.s32 32, %v2973
        %v2975 = vshll.u32 %v2966, %v2973
        %v2976 = vshrl.u32 %v2958, %v2974
        %v2977 = vor.u32 %v2975, %v2976
        %v2978 = vsub.s32 4294967266, %v2973
        %v2979 = vadd.s32 %v2978, 127
        %v2980 = vshll.u32 %v2979, 23
        %v2981 = vor.u32 4788187, %v2980
        %v2982 = vand.u32 2147483647, %v2981
        %v2984 = vcvt.s32.f32 %v2977
        %v2985 = vmul.f32 %v2984, %v2982
        %v2986 = vxor.u32 %v2985, 2147483648
        %v2987 = vsel %vm2866, %v2986, %v2985
        %v2988 = vsub.s32 4, %v2964
        %v2989 = vsel %vm2866, %v2988, %v2964
        %v2990 = vsel %vm2865, %v214, %v2987
        %v2991 = vsel %vm2865, 0, %v2989
        %v2992 = vmul.f32 %v2990, %v2990
        %v2993 = vmul.f32 %v2992, -0.001358992
        %v2994 = vadd.f32 %v2993, 0.041655596
        %v2995 = vmul.f32 %v2992, %v2994
        %v2996 = vadd.f32 %v2995, -0.4999988
        %v2997 = vmul.f32 %v2992, %v2996
        %v2998 = vadd.f32 1.0, %v2997
        %v2999 = vmul.f32 %v2990, %v2990
        %v3000 = vmul.f32 %v2999, -0.00019511016
        %v3001 = vadd.f32 %v3000, 0.008332121
        %v3002 = vmul.f32 %v2999, %v3001
        %v3003 = vadd.f32 %v3002, -0.16666654
        %v3004 = vmul.f32 %v2999, %v3003
        %v3005 = vadd.f32 %v3004, 1.0
        %v3006 = vmul.f32 %v3005, %v2990
        %vm3007 = vweird.f32 %v214
        %v3008 = vadd.s32 %v2991, 3
        %v3009 = vand.u32 %v3008, 3
        %vm3010 = vcmp.lt.s32.totalorder %v3009, 2
        %vm3011 = vcmp.eq.s32.totalorder %v3009, 0
        %v3012 = vxor.u32 %v3006, 2147483648
        %v3013 = vsel %vm3011, %v2998, %v3012
        %vm3014 = vcmp.eq.s32.totalorder %v3009, 2
        %v3015 = vxor.u32 %v2998, 2147483648
        %v3016 = vsel %vm3014, %v3015, %v3006
        %v3017 = vsel %vm3010, %v3013, %v3016
        %v3018 = vsel %vm3007, nan, %v3017
        %v3019 = vand.u32 2147483647, %v215
        %vm3020 = vcmp.le.f32.partialorder %v3019, 0.7853982
        %vm3021 = vcmp.lt.s32.totalorder %v215, 0
        %v3022 = vand.u32 %v215, 2139095040
        %v3023 = vshrl.u32 %v3022, 23
        %v3024 = vsub.s32 %v3023, 127
        %v3025 = vand.u32 2147483647, %v215
        %v3026 = vand.u32 %v3025, 8388607
        %v3027 = vor.u32 %v3026, 8388608
        %v3028 = vsub.s32 0, %v3027
        %v3029 = vadd.s32 %v3024, 1
        %vm3030 = vcmp.gt.s32.totalorder %v3029, 0
        %v3031 = vsel %vm3030, %v3029, 0
        %v3032 = vshrl.u32 %v3031, 5
        %v3033 = vand.u32 %v3031, 31
        %v3034 = vsub.s32 32, %v3033
        %v3035 = vshrl.u32 683565275, %v3034
        %v3036 = vshll.u32 683565275, %v3033
        %v3037 = vshrl.u32 2475754826, %v3034
        %v3038 = vor.u32 %v3036, %v3037
        %v3039 = vshll.u32 2475754826, %v3033
        %v3040 = vshrl.u32 2131351028, %v3034
        %v3041 = vor.u32 %v3039, %v3040
        %v3042 = vshll.u32 2131351028, %v3033
        %v3043 = vshrl.u32 2102212464, %v3034
        %v3044 = vor.u32 %v3042, %v3043
        %v3045 = vshll.u32 2102212464, %v3033
        %v3046 = vshrl.u32 920167782, %v3034
        %v3047 = vor.u32 %v3045, %v3046
        %v3048 = vshll.u32 920167782, %v3033
        %v3049 = vshrl.u32 1326507024, %v3034
        %v3050 = vor.u32 %v3048, %v3049
        %vm3051 = vcmp.lt.s32.totalorder %v3032, 1
        %vm3052 = vcmp.lt.s32.totalorder %v3032, 2
        %vm3053 = vcmp.lt.s32.totalorder %v3032, 3
        %vm3054 = vcmp.lt.s32.totalorder %v3032, 4
        %v3055 = vsel %vm3051, %v3035, %v3038
        %v3056 = vsel %vm3054, %v3044, 2102212464
        %v3057 = vsel %vm3053, %v3041, %v3056
        %v3058 = vsel %vm3052, %v3055, %v3057
        %v3059 = vsel %vm3051, %v3038, %v3041
        %v3060 = vsel %vm3054, %v3047, 920167782
        %v3061 = vsel %vm3053, %v3044, %v3060
        %v3062 = vsel %vm3052, %v3059, %v3061
        %v3063 = vsel %vm3051, %v3041, %v3044
        %v3064 = vsel %vm3054, %v3050, 1326507024
        %v3065 = vsel %vm3053, %v3047, %v3064
        %v3066 = vsel %vm3052, %v3063, %v3065
        %v3067 = vshll.u32 %v3027, 8
        %v3068 = vand.u32 %v3067, 65535
        %v3069 = vshrl.u32 %v3067, 16
        %v3070 = vand.u32 %v3066, 65535
        %v3071 = vshrl.u32 %v3066, 16
        %v3072 = vmul.u32 %v3068, %v3070
        %v3073 = vmul.u32 %v3068, %v3071
        %v3074 = vmul.u32 %v3069, %v3070
        %v3075 = vmul.u32 %v3069, %v3071
        %v3076 = vshll.u32 %v3073, 16
        %v3077 = vshrl.u32 %v3073, 16
        %v3078 = vshll.u32 %v3074, 16
        %v3079 = vshrl.u32 %v3074, 16
        %vm3080 = vc.u32 %v3072, %v3076
        %v3081 = vsel %vm3080, 1, 0
        %v3082 = vadd.s32 %v3072, %v3076
        %v3083 = vadd.s32 %v3075, %v3081
        %vm3084 = vc.u32 %v3082, %v3078
        %v3085 = vsel %vm3084, 1, 0
        %v3086 = vadd.s32 %v3082, %v3078
        %v3087 = vadd.s32 %v3083, %v3085
        %v3088 = vadd.s32 %v3087, %v3077
        %v3089 = vadd.s32 %v3088, %v3079
        %v3090 = vand.u32 %v3067, 65535
        %v3091 = vshrl.u32 %v3067, 16
        %v3092 = vand.u32 %v3062, 65535
        %v3093 = vshrl.u32 %v3062, 16
        %v3094 = vmul.u32 %v3090, %v3092
        %v3095 = vmul.u32 %v3090, %v3093
        %v3096 = vmul.u32 %v3091, %v3092
        %v3097 = vmul.u32 %v3091, %v3093
        %v3098 = vshll.u32 %v3095, 16
        %v3099 = vshrl.u32 %v3095, 16
        %v3100 = vshll.u32 %v3096, 16
        %v3101 = vshrl.u32 %v3096, 16
        %vm3102 = vc.u32 %v3094, %v3098
        %v3103 = vsel %vm3102, 1, 0
        %v3104 = vadd.s32 %v3094, %v3098
        %v3105 = vadd.s32 %v3097, %v3103
        %vm3106 = vc.u32 %v3104, %v3100
        %v3107 = vsel %vm3106, 1, 0
        %v3108 = vadd.s32 %v3104, %v3100
        %v3109 = vadd.s32 %v3105, %v3107
        %v3110 = vadd.s32 %v3109, %v3099
        %v3111 = vadd.s32 %v3110, %v3101
        %v3112 = vmul.u32 %v3067, %v3058
        %v3113 = vadd.s32 %v3089, %v3108
        %vm3114 = vc.u32 %v3089, %v3108
        %v3115 = vadd.s32 %v3111, 1
        %v3116 = vsel %vm3114, %v3115, %v3111
        %v3117 = vadd.s32 %v3112, %v3116
        %v3118 = vadd.s32 %v3117, 536870912
        %v3119 = vshrl.u32 %v3118, 30
        %v3120 = vshll.u32 %v3119, 30
        %v3121 = vsub.s32 %v3117, %v3120
        %vm3122 = vcmp.lt.s32.totalorder %v3121, 0
        %v3123 = vsub.s32 0, %v3121
        %v3124 = vsel %vm3122, %v3123, %v3121
        %v3125 = vclz %v3124
        %v3126 = vsub.s32 %v3125, 2
        %vm3127 = vcmp.gt.s32.totalorder 0, %v3126
        %v3128 = vsel %vm3127, 0, %v3126
        %v3129 = vsub.s32 32, %v3128
        %v3130 = vshll.u32 %v3121, %v3128
        %v3131 = vshrl.u32 %v3113, %v3129
        %v3132 = vor.u32 %v3130, %v3131
        %v3133 = vsub.s32 4294967266, %v3128
        %v3134 = vadd.s32 %v3133, 127
        %v3135 = vshll.u32 %v3134, 23
        %v3136 = vor.u32 4788187, %v3135
        %v3137 = vand.u32 2147483647, %v3136
        %v3139 = vcvt.s32.f32 %v3132
        %v3140 = vmul.f32 %v3139, %v3137
        %v3141 = vxor.u32 %v3140, 2147483648
        %v3142 = vsel %vm3021, %v3141, %v3140
        %v3143 = vsub.s32 4, %v3119
        %v3144 = vsel %vm3021, %v3143, %v3119
        %v3145 = vsel %vm3020, %v215, %v3142
        %v3146 = vsel %vm3020, 0, %v3144
        %v3147 = vmul.f32 %v3145, %v3145
        %v3148 = vmul.f32 %v3147, -0.001358992
        %v3149 = vadd.f32 %v3148, 0.041655596
        %v3150 = vmul.f32 %v3147, %v3149
        %v3151 = vadd.f32 %v3150, -0.4999988
        %v3152 = vmul.f32 %v3147, %v3151
        %v3153 = vadd.f32 1.0, %v3152
        %v3154 = vmul.f32 %v3145, %v3145
        %v3155 = vmul.f32 %v3154, -0.00019511016
        %v3156 = vadd.f32 %v3155, 0.008332121
        %v3157 = vmul.f32 %v3154, %v3156
        %v3158 = vadd.f32 %v3157, -0.16666654
        %v3159 = vmul.f32 %v3154, %v3158
        %v3160 = vadd.f32 %v3159, 1.0
        %v3161 = vmul.f32 %v3160, %v3145
        %vm3162 = vweird.f32 %v215
        %v3163 = vadd.s32 %v3146, 3
        %v3164 = vand.u32 %v3163, 3
        %vm3165 = vcmp.lt.s32.totalorder %v3164, 2
        %vm3166 = vcmp.eq.s32.totalorder %v3164, 0
        %v3167 = vxor.u32 %v3161, 2147483648
        %v3168 = vsel %vm3166, %v3153, %v3167
        %vm3169 = vcmp.eq.s32.totalorder %v3164, 2
        %v3170 = vxor.u32 %v3153, 2147483648
        %v3171 = vsel %vm3169, %v3170, %v3161
        %v3172 = vsel %vm3165, %v3168, %v3171
        %v3173 = vsel %vm3162, nan, %v3172
        %v3174 = vand.u32 2147483647, %v216
        %vm3175 = vcmp.le.f32.partialorder %v3174, 0.7853982
        %vm3176 = vcmp.lt.s32.totalorder %v216, 0
        %v3177 = vand.u32 %v216, 2139095040
        %v3178 = vshrl.u32 %v3177, 23
        %v3179 = vsub.s32 %v3178, 127
        %v3180 = vand.u32 2147483647, %v216
        %v3181 = vand.u32 %v3180, 8388607
        %v3182 = vor.u32 %v3181, 8388608
        %v3183 = vsub.s32 0, %v3182
        %v3184 = vadd.s32 %v3179, 1
        %vm3185 = vcmp.gt.s32.totalorder %v3184, 0
        %v3186 = vsel %vm3185, %v3184, 0
        %v3187 = vshrl.u32 %v3186, 5
        %v3188 = vand.u32 %v3186, 31
        %v3189 = vsub.s32 32, %v3188
        %v3190 = vshrl.u32 683565275, %v3189
        %v3191 = vshll.u32 683565275, %v3188
        %v3192 = vshrl.u32 2475754826, %v3189
        %v3193 = vor.u32 %v3191, %v3192
        %v3194 = vshll.u32 2475754826, %v3188
        %v3195 = vshrl.u32 2131351028, %v3189
        %v3196 = vor.u32 %v3194, %v3195
        %v3197 = vshll.u32 2131351028, %v3188
        %v3198 = vshrl.u32 2102212464, %v3189
        %v3199 = vor.u32 %v3197, %v3198
        %v3200 = vshll.u32 2102212464, %v3188
        %v3201 = vshrl.u32 920167782, %v3189
        %v3202 = vor.u32 %v3200, %v3201
        %v3203 = vshll.u32 920167782, %v3188
        %v3204 = vshrl.u32 1326507024, %v3189
        %v3205 = vor.u32 %v3203, %v3204
        %vm3206 = vcmp.lt.s32.totalorder %v3187, 1
        %vm3207 = vcmp.lt.s32.totalorder %v3187, 2
        %vm3208 = vcmp.lt.s32.totalorder %v3187, 3
        %vm3209 = vcmp.lt.s32.totalorder %v3187, 4
        %v3210 = vsel %vm3206, %v3190, %v3193
        %v3211 = vsel %vm3209, %v3199, 2102212464
        %v3212 = vsel %vm3208, %v3196, %v3211
        %v3213 = vsel %vm3207, %v3210, %v3212
        %v3214 = vsel %vm3206, %v3193, %v3196
        %v3215 = vsel %vm3209, %v3202, 920167782
        %v3216 = vsel %vm3208, %v3199, %v3215
        %v3217 = vsel %vm3207, %v3214, %v3216
        %v3218 = vsel %vm3206, %v3196, %v3199
        %v3219 = vsel %vm3209, %v3205, 1326507024
        %v3220 = vsel %vm3208, %v3202, %v3219
        %v3221 = vsel %vm3207, %v3218, %v3220
        %v3222 = vshll.u32 %v3182, 8
        %v3223 = vand.u32 %v3222, 65535
        %v3224 = vshrl.u32 %v3222, 16
        %v3225 = vand.u32 %v3221, 65535
        %v3226 = vshrl.u32 %v3221, 16
        %v3227 = vmul.u32 %v3223, %v3225
        %v3228 = vmul.u32 %v3223, %v3226
        %v3229 = vmul.u32 %v3224, %v3225
        %v3230 = vmul.u32 %v3224, %v3226
        %v3231 = vshll.u32 %v3228, 16
        %v3232 = vshrl.u32 %v3228, 16
        %v3233 = vshll.u32 %v3229, 16
        %v3234 = vshrl.u32 %v3229, 16
        %vm3235 = vc.u32 %v3227, %v3231
        %v3236 = vsel %vm3235, 1, 0
        %v3237 = vadd.s32 %v3227, %v3231
        %v3238 = vadd.s32 %v3230, %v3236
        %vm3239 = vc.u32 %v3237, %v3233
        %v3240 = vsel %vm3239, 1, 0
        %v3241 = vadd.s32 %v3237, %v3233
        %v3242 = vadd.s32 %v3238, %v3240
        %v3243 = vadd.s32 %v3242, %v3232
        %v3244 = vadd.s32 %v3243, %v3234
        %v3245 = vand.u32 %v3222, 65535
        %v3246 = vshrl.u32 %v3222, 16
        %v3247 = vand.u32 %v3217, 65535
        %v3248 = vshrl.u32 %v3217, 16
        %v3249 = vmul.u32 %v3245, %v3247
        %v3250 = vmul.u32 %v3245, %v3248
        %v3251 = vmul.u32 %v3246, %v3247
        %v3252 = vmul.u32 %v3246, %v3248
        %v3253 = vshll.u32 %v3250, 16
        %v3254 = vshrl.u32 %v3250, 16
        %v3255 = vshll.u32 %v3251, 16
        %v3256 = vshrl.u32 %v3251, 16
        %vm3257 = vc.u32 %v3249, %v3253
        %v3258 = vsel %vm3257, 1, 0
        %v3259 = vadd.s32 %v3249, %v3253
        %v3260 = vadd.s32 %v3252, %v3258
        %vm3261 = vc.u32 %v3259, %v3255
        %v3262 = vsel %vm3261, 1, 0
        %v3263 = vadd.s32 %v3259, %v3255
        %v3264 = vadd.s32 %v3260, %v3262
        %v3265 = vadd.s32 %v3264, %v3254
        %v3266 = vadd.s32 %v3265, %v3256
        %v3267 = vmul.u32 %v3222, %v3213
        %v3268 = vadd.s32 %v3244, %v3263
        %vm3269 = vc.u32 %v3244, %v3263
        %v3270 = vadd.s32 %v3266, 1
        %v3271 = vsel %vm3269, %v3270, %v3266
        %v3272 = vadd.s32 %v3267, %v3271
        %v3273 = vadd.s32 %v3272, 536870912
        %v3274 = vshrl.u32 %v3273, 30
        %v3275 = vshll.u32 %v3274, 30
        %v3276 = vsub.s32 %v3272, %v3275
        %vm3277 = vcmp.lt.s32.totalorder %v3276, 0
        %v3278 = vsub.s32 0, %v3276
        %v3279 = vsel %vm3277, %v3278, %v3276
        %v3280 = vclz %v3279
        %v3281 = vsub.s32 %v3280, 2
        %vm3282 = vcmp.gt.s32.totalorder 0, %v3281
        %v3283 = vsel %vm3282, 0, %v3281
        %v3284 = vsub.s32 32, %v3283
        %v3285 = vshll.u32 %v3276, %v3283
        %v3286 = vshrl.u32 %v3268, %v3284
        %v3287 = vor.u32 %v3285, %v3286
        %v3288 = vsub.s32 4294967266, %v3283
        %v3289 = vadd.s32 %v3288, 127
        %v3290 = vshll.u32 %v3289, 23
        %v3291 = vor.u32 4788187, %v3290
        %v3292 = vand.u32 2147483647, %v3291
        %v3294 = vcvt.s32.f32 %v3287
        %v3295 = vmul.f32 %v3294, %v3292
        %v3296 = vxor.u32 %v3295, 2147483648
        %v3297 = vsel %vm3176, %v3296, %v3295
        %v3298 = vsub.s32 4, %v3274
        %v3299 = vsel %vm3176, %v3298, %v3274
        %v3300 = vsel %vm3175, %v216, %v3297
        %v3301 = vsel %vm3175, 0, %v3299
        %v3302 = vmul.f32 %v3300, %v3300
        %v3303 = vmul.f32 %v3302, -0.001358992
        %v3304 = vadd.f32 %v3303, 0.041655596
        %v3305 = vmul.f32 %v3302, %v3304
        %v3306 = vadd.f32 %v3305, -0.4999988
        %v3307 = vmul.f32 %v3302, %v3306
        %v3308 = vadd.f32 1.0, %v3307
        %v3309 = vmul.f32 %v3300, %v3300
        %v3310 = vmul.f32 %v3309, -0.00019511016
        %v3311 = vadd.f32 %v3310, 0.008332121
        %v3312 = vmul.f32 %v3309, %v3311
        %v3313 = vadd.f32 %v3312, -0.16666654
        %v3314 = vmul.f32 %v3309, %v3313
        %v3315 = vadd.f32 %v3314, 1.0
        %v3316 = vmul.f32 %v3315, %v3300
        %vm3317 = vweird.f32 %v216
        %v3318 = vadd.s32 %v3301, 3
        %v3319 = vand.u32 %v3318, 3
        %vm3320 = vcmp.lt.s32.totalorder %v3319, 2
        %vm3321 = vcmp.eq.s32.totalorder %v3319, 0
        %v3322 = vxor.u32 %v3316, 2147483648
        %v3323 = vsel %vm3321, %v3308, %v3322
        %vm3324 = vcmp.eq.s32.totalorder %v3319, 2
        %v3325 = vxor.u32 %v3308, 2147483648
        %v3326 = vsel %vm3324, %v3325, %v3316
        %v3327 = vsel %vm3320, %v3323, %v3326
        %v3328 = vsel %vm3317, nan, %v3327
        %v3329 = vand.u32 2147483647, %v217
        %vm3330 = vcmp.le.f32.partialorder %v3329, 0.7853982
        %vm3331 = vcmp.lt.s32.totalorder %v217, 0
        %v3332 = vand.u32 %v217, 2139095040
        %v3333 = vshrl.u32 %v3332, 23
        %v3334 = vsub.s32 %v3333, 127
        %v3335 = vand.u32 2147483647, %v217
        %v3336 = vand.u32 %v3335, 8388607
        %v3337 = vor.u32 %v3336, 8388608
        %v3338 = vsub.s32 0, %v3337
        %v3339 = vadd.s32 %v3334, 1
        %vm3340 = vcmp.gt.s32.totalorder %v3339, 0
        %v3341 = vsel %vm3340, %v3339, 0
        %v3342 = vshrl.u32 %v3341, 5
        %v3343 = vand.u32 %v3341, 31
        %v3344 = vsub.s32 32, %v3343
        %v3345 = vshrl.u32 683565275, %v3344
        %v3346 = vshll.u32 683565275, %v3343
        %v3347 = vshrl.u32 2475754826, %v3344
        %v3348 = vor.u32 %v3346, %v3347
        %v3349 = vshll.u32 2475754826, %v3343
        %v3350 = vshrl.u32 2131351028, %v3344
        %v3351 = vor.u32 %v3349, %v3350
        %v3352 = vshll.u32 2131351028, %v3343
        %v3353 = vshrl.u32 2102212464, %v3344
        %v3354 = vor.u32 %v3352, %v3353
        %v3355 = vshll.u32 2102212464, %v3343
        %v3356 = vshrl.u32 920167782, %v3344
        %v3357 = vor.u32 %v3355, %v3356
        %v3358 = vshll.u32 920167782, %v3343
        %v3359 = vshrl.u32 1326507024, %v3344
        %v3360 = vor.u32 %v3358, %v3359
        %vm3361 = vcmp.lt.s32.totalorder %v3342, 1
        %vm3362 = vcmp.lt.s32.totalorder %v3342, 2
        %vm3363 = vcmp.lt.s32.totalorder %v3342, 3
        %vm3364 = vcmp.lt.s32.totalorder %v3342, 4
        %v3365 = vsel %vm3361, %v3345, %v3348
        %v3366 = vsel %vm3364, %v3354, 2102212464
        %v3367 = vsel %vm3363, %v3351, %v3366
        %v3368 = vsel %vm3362, %v3365, %v3367
        %v3369 = vsel %vm3361, %v3348, %v3351
        %v3370 = vsel %vm3364, %v3357, 920167782
        %v3371 = vsel %vm3363, %v3354, %v3370
        %v3372 = vsel %vm3362, %v3369, %v3371
        %v3373 = vsel %vm3361, %v3351, %v3354
        %v3374 = vsel %vm3364, %v3360, 1326507024
        %v3375 = vsel %vm3363, %v3357, %v3374
        %v3376 = vsel %vm3362, %v3373, %v3375
        %v3377 = vshll.u32 %v3337, 8
        %v3378 = vand.u32 %v3377, 65535
        %v3379 = vshrl.u32 %v3377, 16
        %v3380 = vand.u32 %v3376, 65535
        %v3381 = vshrl.u32 %v3376, 16
        %v3382 = vmul.u32 %v3378, %v3380
        %v3383 = vmul.u32 %v3378, %v3381
        %v3384 = vmul.u32 %v3379, %v3380
        %v3385 = vmul.u32 %v3379, %v3381
        %v3386 = vshll.u32 %v3383, 16
        %v3387 = vshrl.u32 %v3383, 16
        %v3388 = vshll.u32 %v3384, 16
        %v3389 = vshrl.u32 %v3384, 16
        %vm3390 = vc.u32 %v3382, %v3386
        %v3391 = vsel %vm3390, 1, 0
        %v3392 = vadd.s32 %v3382, %v3386
        %v3393 = vadd.s32 %v3385, %v3391
        %vm3394 = vc.u32 %v3392, %v3388
        %v3395 = vsel %vm3394, 1, 0
        %v3396 = vadd.s32 %v3392, %v3388
        %v3397 = vadd.s32 %v3393, %v3395
        %v3398 = vadd.s32 %v3397, %v3387
        %v3399 = vadd.s32 %v3398, %v3389
        %v3400 = vand.u32 %v3377, 65535
        %v3401 = vshrl.u32 %v3377, 16
        %v3402 = vand.u32 %v3372, 65535
        %v3403 = vshrl.u32 %v3372, 16
        %v3404 = vmul.u32 %v3400, %v3402
        %v3405 = vmul.u32 %v3400, %v3403
        %v3406 = vmul.u32 %v3401, %v3402
        %v3407 = vmul.u32 %v3401, %v3403
        %v3408 = vshll.u32 %v3405, 16
        %v3409 = vshrl.u32 %v3405, 16
        %v3410 = vshll.u32 %v3406, 16
        %v3411 = vshrl.u32 %v3406, 16
        %vm3412 = vc.u32 %v3404, %v3408
        %v3413 = vsel %vm3412, 1, 0
        %v3414 = vadd.s32 %v3404, %v3408
        %v3415 = vadd.s32 %v3407, %v3413
        %vm3416 = vc.u32 %v3414, %v3410
        %v3417 = vsel %vm3416, 1, 0
        %v3418 = vadd.s32 %v3414, %v3410
        %v3419 = vadd.s32 %v3415, %v3417
        %v3420 = vadd.s32 %v3419, %v3409
        %v3421 = vadd.s32 %v3420, %v3411
        %v3422 = vmul.u32 %v3377, %v3368
        %v3423 = vadd.s32 %v3399, %v3418
        %vm3424 = vc.u32 %v3399, %v3418
        %v3425 = vadd.s32 %v3421, 1
        %v3426 = vsel %vm3424, %v3425, %v3421
        %v3427 = vadd.s32 %v3422, %v3426
        %v3428 = vadd.s32 %v3427, 536870912
        %v3429 = vshrl.u32 %v3428, 30
        %v3430 = vshll.u32 %v3429, 30
        %v3431 = vsub.s32 %v3427, %v3430
        %vm3432 = vcmp.lt.s32.totalorder %v3431, 0
        %v3433 = vsub.s32 0, %v3431
        %v3434 = vsel %vm3432, %v3433, %v3431
        %v3435 = vclz %v3434
        %v3436 = vsub.s32 %v3435, 2
        %vm3437 = vcmp.gt.s32.totalorder 0, %v3436
        %v3438 = vsel %vm3437, 0, %v3436
        %v3439 = vsub.s32 32, %v3438
        %v3440 = vshll.u32 %v3431, %v3438
        %v3441 = vshrl.u32 %v3423, %v3439
        %v3442 = vor.u32 %v3440, %v3441
        %v3443 = vsub.s32 4294967266, %v3438
        %v3444 = vadd.s32 %v3443, 127
        %v3445 = vshll.u32 %v3444, 23
        %v3446 = vor.u32 4788187, %v3445
        %v3447 = vand.u32 2147483647, %v3446
        %v3449 = vcvt.s32.f32 %v3442
        %v3450 = vmul.f32 %v3449, %v3447
        %v3451 = vxor.u32 %v3450, 2147483648
        %v3452 = vsel %vm3331, %v3451, %v3450
        %v3453 = vsub.s32 4, %v3429
        %v3454 = vsel %vm3331, %v3453, %v3429
        %v3455 = vsel %vm3330, %v217, %v3452
        %v3456 = vsel %vm3330, 0, %v3454
        %v3457 = vmul.f32 %v3455, %v3455
        %v3458 = vmul.f32 %v3457, -0.001358992
        %v3459 = vadd.f32 %v3458, 0.041655596
        %v3460 = vmul.f32 %v3457, %v3459
        %v3461 = vadd.f32 %v3460, -0.4999988
        %v3462 = vmul.f32 %v3457, %v3461
        %v3463 = vadd.f32 1.0, %v3462
        %v3464 = vmul.f32 %v3455, %v3455
        %v3465 = vmul.f32 %v3464, -0.00019511016
        %v3466 = vadd.f32 %v3465, 0.008332121
        %v3467 = vmul.f32 %v3464, %v3466
        %v3468 = vadd.f32 %v3467, -0.16666654
        %v3469 = vmul.f32 %v3464, %v3468
        %v3470 = vadd.f32 %v3469, 1.0
        %v3471 = vmul.f32 %v3470, %v3455
        %vm3472 = vweird.f32 %v217
        %v3473 = vadd.s32 %v3456, 3
        %v3474 = vand.u32 %v3473, 3
        %vm3475 = vcmp.lt.s32.totalorder %v3474, 2
        %vm3476 = vcmp.eq.s32.totalorder %v3474, 0
        %v3477 = vxor.u32 %v3471, 2147483648
        %v3478 = vsel %vm3476, %v3463, %v3477
        %vm3479 = vcmp.eq.s32.totalorder %v3474, 2
        %v3480 = vxor.u32 %v3463, 2147483648
        %v3481 = vsel %vm3479, %v3480, %v3471
        %v3482 = vsel %vm3475, %v3478, %v3481
        %v3483 = vsel %vm3472, nan, %v3482
        %v3484 = vand.u32 2147483647, %v218
        %vm3485 = vcmp.le.f32.partialorder %v3484, 0.7853982
        %vm3486 = vcmp.lt.s32.totalorder %v218, 0
        %v3487 = vand.u32 %v218, 2139095040
        %v3488 = vshrl.u32 %v3487, 23
        %v3489 = vsub.s32 %v3488, 127
        %v3490 = vand.u32 2147483647, %v218
        %v3491 = vand.u32 %v3490, 8388607
        %v3492 = vor.u32 %v3491, 8388608
        %v3493 = vsub.s32 0, %v3492
        %v3494 = vadd.s32 %v3489, 1
        %vm3495 = vcmp.gt.s32.totalorder %v3494, 0
        %v3496 = vsel %vm3495, %v3494, 0
        %v3497 = vshrl.u32 %v3496, 5
        %v3498 = vand.u32 %v3496, 31
        %v3499 = vsub.s32 32, %v3498
        %v3500 = vshrl.u32 683565275, %v3499
        %v3501 = vshll.u32 683565275, %v3498
        %v3502 = vshrl.u32 2475754826, %v3499
        %v3503 = vor.u32 %v3501, %v3502
        %v3504 = vshll.u32 2475754826, %v3498
        %v3505 = vshrl.u32 2131351028, %v3499
        %v3506 = vor.u32 %v3504, %v3505
        %v3507 = vshll.u32 2131351028, %v3498
        %v3508 = vshrl.u32 2102212464, %v3499
        %v3509 = vor.u32 %v3507, %v3508
        %v3510 = vshll.u32 2102212464, %v3498
        %v3511 = vshrl.u32 920167782, %v3499
        %v3512 = vor.u32 %v3510, %v3511
        %v3513 = vshll.u32 920167782, %v3498
        %v3514 = vshrl.u32 1326507024, %v3499
        %v3515 = vor.u32 %v3513, %v3514
        %vm3516 = vcmp.lt.s32.totalorder %v3497, 1
        %vm3517 = vcmp.lt.s32.totalorder %v3497, 2
        %vm3518 = vcmp.lt.s32.totalorder %v3497, 3
        %vm3519 = vcmp.lt.s32.totalorder %v3497, 4
        %v3520 = vsel %vm3516, %v3500, %v3503
        %v3521 = vsel %vm3519, %v3509, 2102212464
        %v3522 = vsel %vm3518, %v3506, %v3521
        %v3523 = vsel %vm3517, %v3520, %v3522
        %v3524 = vsel %vm3516, %v3503, %v3506
        %v3525 = vsel %vm3519, %v3512, 920167782
        %v3526 = vsel %vm3518, %v3509, %v3525
        %v3527 = vsel %vm3517, %v3524, %v3526
        %v3528 = vsel %vm3516, %v3506, %v3509
        %v3529 = vsel %vm3519, %v3515, 1326507024
        %v3530 = vsel %vm3518, %v3512, %v3529
        %v3531 = vsel %vm3517, %v3528, %v3530
        %v3532 = vshll.u32 %v3492, 8
        %v3533 = vand.u32 %v3532, 65535
        %v3534 = vshrl.u32 %v3532, 16
        %v3535 = vand.u32 %v3531, 65535
        %v3536 = vshrl.u32 %v3531, 16
        %v3537 = vmul.u32 %v3533, %v3535
        %v3538 = vmul.u32 %v3533, %v3536
        %v3539 = vmul.u32 %v3534, %v3535
        %v3540 = vmul.u32 %v3534, %v3536
        %v3541 = vshll.u32 %v3538, 16
        %v3542 = vshrl.u32 %v3538, 16
        %v3543 = vshll.u32 %v3539, 16
        %v3544 = vshrl.u32 %v3539, 16
        %vm3545 = vc.u32 %v3537, %v3541
        %v3546 = vsel %vm3545, 1, 0
        %v3547 = vadd.s32 %v3537, %v3541
        %v3548 = vadd.s32 %v3540, %v3546
        %vm3549 = vc.u32 %v3547, %v3543
        %v3550 = vsel %vm3549, 1, 0
        %v3551 = vadd.s32 %v3547, %v3543
        %v3552 = vadd.s32 %v3548, %v3550
        %v3553 = vadd.s32 %v3552, %v3542
        %v3554 = vadd.s32 %v3553, %v3544
        %v3555 = vand.u32 %v3532, 65535
        %v3556 = vshrl.u32 %v3532, 16
        %v3557 = vand.u32 %v3527, 65535
        %v3558 = vshrl.u32 %v3527, 16
        %v3559 = vmul.u32 %v3555, %v3557
        %v3560 = vmul.u32 %v3555, %v3558
        %v3561 = vmul.u32 %v3556, %v3557
        %v3562 = vmul.u32 %v3556, %v3558
        %v3563 = vshll.u32 %v3560, 16
        %v3564 = vshrl.u32 %v3560, 16
        %v3565 = vshll.u32 %v3561, 16
        %v3566 = vshrl.u32 %v3561, 16
        %vm3567 = vc.u32 %v3559, %v3563
        %v3568 = vsel %vm3567, 1, 0
        %v3569 = vadd.s32 %v3559, %v3563
        %v3570 = vadd.s32 %v3562, %v3568
        %vm3571 = vc.u32 %v3569, %v3565
        %v3572 = vsel %vm3571, 1, 0
        %v3573 = vadd.s32 %v3569, %v3565
        %v3574 = vadd.s32 %v3570, %v3572
        %v3575 = vadd.s32 %v3574, %v3564
        %v3576 = vadd.s32 %v3575, %v3566
        %v3577 = vmul.u32 %v3532, %v3523
        %v3578 = vadd.s32 %v3554, %v3573
        %vm3579 = vc.u32 %v3554, %v3573
        %v3580 = vadd.s32 %v3576, 1
        %v3581 = vsel %vm3579, %v3580, %v3576
        %v3582 = vadd.s32 %v3577, %v3581
        %v3583 = vadd.s32 %v3582, 536870912
        %v3584 = vshrl.u32 %v3583, 30
        %v3585 = vshll.u32 %v3584, 30
        %v3586 = vsub.s32 %v3582, %v3585
        %vm3587 = vcmp.lt.s32.totalorder %v3586, 0
        %v3588 = vsub.s32 0, %v3586
        %v3589 = vsel %vm3587, %v3588, %v3586
        %v3590 = vclz %v3589
        %v3591 = vsub.s32 %v3590, 2
        %vm3592 = vcmp.gt.s32.totalorder 0, %v3591
        %v3593 = vsel %vm3592, 0, %v3591
        %v3594 = vsub.s32 32, %v3593
        %v3595 = vshll.u32 %v3586, %v3593
        %v3596 = vshrl.u32 %v3578, %v3594
        %v3597 = vor.u32 %v3595, %v3596
        %v3598 = vsub.s32 4294967266, %v3593
        %v3599 = vadd.s32 %v3598, 127
        %v3600 = vshll.u32 %v3599, 23
        %v3601 = vor.u32 4788187, %v3600
        %v3602 = vand.u32 2147483647, %v3601
        %v3604 = vcvt.s32.f32 %v3597
        %v3605 = vmul.f32 %v3604, %v3602
        %v3606 = vxor.u32 %v3605, 2147483648
        %v3607 = vsel %vm3486, %v3606, %v3605
        %v3608 = vsub.s32 4, %v3584
        %v3609 = vsel %vm3486, %v3608, %v3584
        %v3610 = vsel %vm3485, %v218, %v3607
        %v3611 = vsel %vm3485, 0, %v3609
        %v3612 = vmul.f32 %v3610, %v3610
        %v3613 = vmul.f32 %v3612, -0.001358992
        %v3614 = vadd.f32 %v3613, 0.041655596
        %v3615 = vmul.f32 %v3612, %v3614
        %v3616 = vadd.f32 %v3615, -0.4999988
        %v3617 = vmul.f32 %v3612, %v3616
        %v3618 = vadd.f32 1.0, %v3617
        %v3619 = vmul.f32 %v3610, %v3610
        %v3620 = vmul.f32 %v3619, -0.00019511016
        %v3621 = vadd.f32 %v3620, 0.008332121
        %v3622 = vmul.f32 %v3619, %v3621
        %v3623 = vadd.f32 %v3622, -0.16666654
        %v3624 = vmul.f32 %v3619, %v3623
        %v3625 = vadd.f32 %v3624, 1.0
        %v3626 = vmul.f32 %v3625, %v3610
        %vm3627 = vweird.f32 %v218
        %v3628 = vadd.s32 %v3611, 3
        %v3629 = vand.u32 %v3628, 3
        %vm3630 = vcmp.lt.s32.totalorder %v3629, 2
        %vm3631 = vcmp.eq.s32.totalorder %v3629, 0
        %v3632 = vxor.u32 %v3626, 2147483648
        %v3633 = vsel %vm3631, %v3618, %v3632
        %vm3634 = vcmp.eq.s32.totalorder %v3629, 2
        %v3635 = vxor.u32 %v3618, 2147483648
        %v3636 = vsel %vm3634, %v3635, %v3626
        %v3637 = vsel %vm3630, %v3633, %v3636
        %v3638 = vsel %vm3627, nan, %v3637
        %v3639 = vand.u32 2147483647, %v219
        %vm3640 = vcmp.le.f32.partialorder %v3639, 0.7853982
        %vm3641 = vcmp.lt.s32.totalorder %v219, 0
        %v3642 = vand.u32 %v219, 2139095040
        %v3643 = vshrl.u32 %v3642, 23
        %v3644 = vsub.s32 %v3643, 127
        %v3645 = vand.u32 2147483647, %v219
        %v3646 = vand.u32 %v3645, 8388607
        %v3647 = vor.u32 %v3646, 8388608
        %v3648 = vsub.s32 0, %v3647
        %v3649 = vadd.s32 %v3644, 1
        %vm3650 = vcmp.gt.s32.totalorder %v3649, 0
        %v3651 = vsel %vm3650, %v3649, 0
        %v3652 = vshrl.u32 %v3651, 5
        %v3653 = vand.u32 %v3651, 31
        %v3654 = vsub.s32 32, %v3653
        %v3655 = vshrl.u32 683565275, %v3654
        %v3656 = vshll.u32 683565275, %v3653
        %v3657 = vshrl.u32 2475754826, %v3654
        %v3658 = vor.u32 %v3656, %v3657
        %v3659 = vshll.u32 2475754826, %v3653
        %v3660 = vshrl.u32 2131351028, %v3654
        %v3661 = vor.u32 %v3659, %v3660
        %v3662 = vshll.u32 2131351028, %v3653
        %v3663 = vshrl.u32 2102212464, %v3654
        %v3664 = vor.u32 %v3662, %v3663
        %v3665 = vshll.u32 2102212464, %v3653
        %v3666 = vshrl.u32 920167782, %v3654
        %v3667 = vor.u32 %v3665, %v3666
        %v3668 = vshll.u32 920167782, %v3653
        %v3669 = vshrl.u32 1326507024, %v3654
        %v3670 = vor.u32 %v3668, %v3669
        %vm3671 = vcmp.lt.s32.totalorder %v3652, 1
        %vm3672 = vcmp.lt.s32.totalorder %v3652, 2
        %vm3673 = vcmp.lt.s32.totalorder %v3652, 3
        %vm3674 = vcmp.lt.s32.totalorder %v3652, 4
        %v3675 = vsel %vm3671, %v3655, %v3658
        %v3676 = vsel %vm3674, %v3664, 2102212464
        %v3677 = vsel %vm3673, %v3661, %v3676
        %v3678 = vsel %vm3672, %v3675, %v3677
        %v3679 = vsel %vm3671, %v3658, %v3661
        %v3680 = vsel %vm3674, %v3667, 920167782
        %v3681 = vsel %vm3673, %v3664, %v3680
        %v3682 = vsel %vm3672, %v3679, %v3681
        %v3683 = vsel %vm3671, %v3661, %v3664
        %v3684 = vsel %vm3674, %v3670, 1326507024
        %v3685 = vsel %vm3673, %v3667, %v3684
        %v3686 = vsel %vm3672, %v3683, %v3685
        %v3687 = vshll.u32 %v3647, 8
        %v3688 = vand.u32 %v3687, 65535
        %v3689 = vshrl.u32 %v3687, 16
        %v3690 = vand.u32 %v3686, 65535
        %v3691 = vshrl.u32 %v3686, 16
        %v3692 = vmul.u32 %v3688, %v3690
        %v3693 = vmul.u32 %v3688, %v3691
        %v3694 = vmul.u32 %v3689, %v3690
        %v3695 = vmul.u32 %v3689, %v3691
        %v3696 = vshll.u32 %v3693, 16
        %v3697 = vshrl.u32 %v3693, 16
        %v3698 = vshll.u32 %v3694, 16
        %v3699 = vshrl.u32 %v3694, 16
        %vm3700 = vc.u32 %v3692, %v3696
        %v3701 = vsel %vm3700, 1, 0
        %v3702 = vadd.s32 %v3692, %v3696
        %v3703 = vadd.s32 %v3695, %v3701
        %vm3704 = vc.u32 %v3702, %v3698
        %v3705 = vsel %vm3704, 1, 0
        %v3706 = vadd.s32 %v3702, %v3698
        %v3707 = vadd.s32 %v3703, %v3705
        %v3708 = vadd.s32 %v3707, %v3697
        %v3709 = vadd.s32 %v3708, %v3699
        %v3710 = vand.u32 %v3687, 65535
        %v3711 = vshrl.u32 %v3687, 16
        %v3712 = vand.u32 %v3682, 65535
        %v3713 = vshrl.u32 %v3682, 16
        %v3714 = vmul.u32 %v3710, %v3712
        %v3715 = vmul.u32 %v3710, %v3713
        %v3716 = vmul.u32 %v3711, %v3712
        %v3717 = vmul.u32 %v3711, %v3713
        %v3718 = vshll.u32 %v3715, 16
        %v3719 = vshrl.u32 %v3715, 16
        %v3720 = vshll.u32 %v3716, 16
        %v3721 = vshrl.u32 %v3716, 16
        %vm3722 = vc.u32 %v3714, %v3718
        %v3723 = vsel %vm3722, 1, 0
        %v3724 = vadd.s32 %v3714, %v3718
        %v3725 = vadd.s32 %v3717, %v3723
        %vm3726 = vc.u32 %v3724, %v3720
        %v3727 = vsel %vm3726, 1, 0
        %v3728 = vadd.s32 %v3724, %v3720
        %v3729 = vadd.s32 %v3725, %v3727
        %v3730 = vadd.s32 %v3729, %v3719
        %v3731 = vadd.s32 %v3730, %v3721
        %v3732 = vmul.u32 %v3687, %v3678
        %v3733 = vadd.s32 %v3709, %v3728
        %vm3734 = vc.u32 %v3709, %v3728
        %v3735 = vadd.s32 %v3731, 1
        %v3736 = vsel %vm3734, %v3735, %v3731
        %v3737 = vadd.s32 %v3732, %v3736
        %v3738 = vadd.s32 %v3737, 536870912
        %v3739 = vshrl.u32 %v3738, 30
        %v3740 = vshll.u32 %v3739, 30
        %v3741 = vsub.s32 %v3737, %v3740
        %vm3742 = vcmp.lt.s32.totalorder %v3741, 0
        %v3743 = vsub.s32 0, %v3741
        %v3744 = vsel %vm3742, %v3743, %v3741
        %v3745 = vclz %v3744
        %v3746 = vsub.s32 %v3745, 2
        %vm3747 = vcmp.gt.s32.totalorder 0, %v3746
        %v3748 = vsel %vm3747, 0, %v3746
        %v3749 = vsub.s32 32, %v3748
        %v3750 = vshll.u32 %v3741, %v3748
        %v3751 = vshrl.u32 %v3733, %v3749
        %v3752 = vor.u32 %v3750, %v3751
        %v3753 = vsub.s32 4294967266, %v3748
        %v3754 = vadd.s32 %v3753, 127
        %v3755 = vshll.u32 %v3754, 23
        %v3756 = vor.u32 4788187, %v3755
        %v3757 = vand.u32 2147483647, %v3756
        %v3759 = vcvt.s32.f32 %v3752
        %v3760 = vmul.f32 %v3759, %v3757
        %v3761 = vxor.u32 %v3760, 2147483648
        %v3762 = vsel %vm3641, %v3761, %v3760
        %v3763 = vsub.s32 4, %v3739
        %v3764 = vsel %vm3641, %v3763, %v3739
        %v3765 = vsel %vm3640, %v219, %v3762
        %v3766 = vsel %vm3640, 0, %v3764
        %v3767 = vmul.f32 %v3765, %v3765
        %v3768 = vmul.f32 %v3767, -0.001358992
        %v3769 = vadd.f32 %v3768, 0.041655596
        %v3770 = vmul.f32 %v3767, %v3769
        %v3771 = vadd.f32 %v3770, -0.4999988
        %v3772 = vmul.f32 %v3767, %v3771
        %v3773 = vadd.f32 1.0, %v3772
        %v3774 = vmul.f32 %v3765, %v3765
        %v3775 = vmul.f32 %v3774, -0.00019511016
        %v3776 = vadd.f32 %v3775, 0.008332121
        %v3777 = vmul.f32 %v3774, %v3776
        %v3778 = vadd.f32 %v3777, -0.16666654
        %v3779 = vmul.f32 %v3774, %v3778
        %v3780 = vadd.f32 %v3779, 1.0
        %v3781 = vmul.f32 %v3780, %v3765
        %vm3782 = vweird.f32 %v219
        %v3783 = vadd.s32 %v3766, 3
        %v3784 = vand.u32 %v3783, 3
        %vm3785 = vcmp.lt.s32.totalorder %v3784, 2
        %vm3786 = vcmp.eq.s32.totalorder %v3784, 0
        %v3787 = vxor.u32 %v3781, 2147483648
        %v3788 = vsel %vm3786, %v3773, %v3787
        %vm3789 = vcmp.eq.s32.totalorder %v3784, 2
        %v3790 = vxor.u32 %v3773, 2147483648
        %v3791 = vsel %vm3789, %v3790, %v3781
        %v3792 = vsel %vm3785, %v3788, %v3791
        %v3793 = vsel %vm3782, nan, %v3792
        %v3794 = vand.u32 2147483647, %v220
        %vm3795 = vcmp.le.f32.partialorder %v3794, 0.7853982
        %vm3796 = vcmp.lt.s32.totalorder %v220, 0
        %v3797 = vand.u32 %v220, 2139095040
        %v3798 = vshrl.u32 %v3797, 23
        %v3799 = vsub.s32 %v3798, 127
        %v3800 = vand.u32 2147483647, %v220
        %v3801 = vand.u32 %v3800, 8388607
        %v3802 = vor.u32 %v3801, 8388608
        %v3803 = vsub.s32 0, %v3802
        %v3804 = vadd.s32 %v3799, 1
        %vm3805 = vcmp.gt.s32.totalorder %v3804, 0
        %v3806 = vsel %vm3805, %v3804, 0
        %v3807 = vshrl.u32 %v3806, 5
        %v3808 = vand.u32 %v3806, 31
        %v3809 = vsub.s32 32, %v3808
        %v3810 = vshrl.u32 683565275, %v3809
        %v3811 = vshll.u32 683565275, %v3808
        %v3812 = vshrl.u32 2475754826, %v3809
        %v3813 = vor.u32 %v3811, %v3812
        %v3814 = vshll.u32 2475754826, %v3808
        %v3815 = vshrl.u32 2131351028, %v3809
        %v3816 = vor.u32 %v3814, %v3815
        %v3817 = vshll.u32 2131351028, %v3808
        %v3818 = vshrl.u32 2102212464, %v3809
        %v3819 = vor.u32 %v3817, %v3818
        %v3820 = vshll.u32 2102212464, %v3808
        %v3821 = vshrl.u32 920167782, %v3809
        %v3822 = vor.u32 %v3820, %v3821
        %v3823 = vshll.u32 920167782, %v3808
        %v3824 = vshrl.u32 1326507024, %v3809
        %v3825 = vor.u32 %v3823, %v3824
        %vm3826 = vcmp.lt.s32.totalorder %v3807, 1
        %vm3827 = vcmp.lt.s32.totalorder %v3807, 2
        %vm3828 = vcmp.lt.s32.totalorder %v3807, 3
        %vm3829 = vcmp.lt.s32.totalorder %v3807, 4
        %v3830 = vsel %vm3826, %v3810, %v3813
        %v3831 = vsel %vm3829, %v3819, 2102212464
        %v3832 = vsel %vm3828, %v3816, %v3831
        %v3833 = vsel %vm3827, %v3830, %v3832
        %v3834 = vsel %vm3826, %v3813, %v3816
        %v3835 = vsel %vm3829, %v3822, 920167782
        %v3836 = vsel %vm3828, %v3819, %v3835
        %v3837 = vsel %vm3827, %v3834, %v3836
        %v3838 = vsel %vm3826, %v3816, %v3819
        %v3839 = vsel %vm3829, %v3825, 1326507024
        %v3840 = vsel %vm3828, %v3822, %v3839
        %v3841 = vsel %vm3827, %v3838, %v3840
        %v3842 = vshll.u32 %v3802, 8
        %v3843 = vand.u32 %v3842, 65535
        %v3844 = vshrl.u32 %v3842, 16
        %v3845 = vand.u32 %v3841, 65535
        %v3846 = vshrl.u32 %v3841, 16
        %v3847 = vmul.u32 %v3843, %v3845
        %v3848 = vmul.u32 %v3843, %v3846
        %v3849 = vmul.u32 %v3844, %v3845
        %v3850 = vmul.u32 %v3844, %v3846
        %v3851 = vshll.u32 %v3848, 16
        %v3852 = vshrl.u32 %v3848, 16
        %v3853 = vshll.u32 %v3849, 16
        %v3854 = vshrl.u32 %v3849, 16
        %vm3855 = vc.u32 %v3847, %v3851
        %v3856 = vsel %vm3855, 1, 0
        %v3857 = vadd.s32 %v3847, %v3851
        %v3858 = vadd.s32 %v3850, %v3856
        %vm3859 = vc.u32 %v3857, %v3853
        %v3860 = vsel %vm3859, 1, 0
        %v3861 = vadd.s32 %v3857, %v3853
        %v3862 = vadd.s32 %v3858, %v3860
        %v3863 = vadd.s32 %v3862, %v3852
        %v3864 = vadd.s32 %v3863, %v3854
        %v3865 = vand.u32 %v3842, 65535
        %v3866 = vshrl.u32 %v3842, 16
        %v3867 = vand.u32 %v3837, 65535
        %v3868 = vshrl.u32 %v3837, 16
        %v3869 = vmul.u32 %v3865, %v3867
        %v3870 = vmul.u32 %v3865, %v3868
        %v3871 = vmul.u32 %v3866, %v3867
        %v3872 = vmul.u32 %v3866, %v3868
        %v3873 = vshll.u32 %v3870, 16
        %v3874 = vshrl.u32 %v3870, 16
        %v3875 = vshll.u32 %v3871, 16
        %v3876 = vshrl.u32 %v3871, 16
        %vm3877 = vc.u32 %v3869, %v3873
        %v3878 = vsel %vm3877, 1, 0
        %v3879 = vadd.s32 %v3869, %v3873
        %v3880 = vadd.s32 %v3872, %v3878
        %vm3881 = vc.u32 %v3879, %v3875
        %v3882 = vsel %vm3881, 1, 0
        %v3883 = vadd.s32 %v3879, %v3875
        %v3884 = vadd.s32 %v3880, %v3882
        %v3885 = vadd.s32 %v3884, %v3874
        %v3886 = vadd.s32 %v3885, %v3876
        %v3887 = vmul.u32 %v3842, %v3833
        %v3888 = vadd.s32 %v3864, %v3883
        %vm3889 = vc.u32 %v3864, %v3883
        %v3890 = vadd.s32 %v3886, 1
        %v3891 = vsel %vm3889, %v3890, %v3886
        %v3892 = vadd.s32 %v3887, %v3891
        %v3893 = vadd.s32 %v3892, 536870912
        %v3894 = vshrl.u32 %v3893, 30
        %v3895 = vshll.u32 %v3894, 30
        %v3896 = vsub.s32 %v3892, %v3895
        %vm3897 = vcmp.lt.s32.totalorder %v3896, 0
        %v3898 = vsub.s32 0, %v3896
        %v3899 = vsel %vm3897, %v3898, %v3896
        %v3900 = vclz %v3899
        %v3901 = vsub.s32 %v3900, 2
        %vm3902 = vcmp.gt.s32.totalorder 0, %v3901
        %v3903 = vsel %vm3902, 0, %v3901
        %v3904 = vsub.s32 32, %v3903
        %v3905 = vshll.u32 %v3896, %v3903
        %v3906 = vshrl.u32 %v3888, %v3904
        %v3907 = vor.u32 %v3905, %v3906
        %v3908 = vsub.s32 4294967266, %v3903
        %v3909 = vadd.s32 %v3908, 127
        %v3910 = vshll.u32 %v3909, 23
        %v3911 = vor.u32 4788187, %v3910
        %v3912 = vand.u32 2147483647, %v3911
        %v3914 = vcvt.s32.f32 %v3907
        %v3915 = vmul.f32 %v3914, %v3912
        %v3916 = vxor.u32 %v3915, 2147483648
        %v3917 = vsel %vm3796, %v3916, %v3915
        %v3918 = vsub.s32 4, %v3894
        %v3919 = vsel %vm3796, %v3918, %v3894
        %v3920 = vsel %vm3795, %v220, %v3917
        %v3921 = vsel %vm3795, 0, %v3919
        %v3922 = vmul.f32 %v3920, %v3920
        %v3923 = vmul.f32 %v3922, -0.001358992
        %v3924 = vadd.f32 %v3923, 0.041655596
        %v3925 = vmul.f32 %v3922, %v3924
        %v3926 = vadd.f32 %v3925, -0.4999988
        %v3927 = vmul.f32 %v3922, %v3926
        %v3928 = vadd.f32 1.0, %v3927
        %v3929 = vmul.f32 %v3920, %v3920
        %v3930 = vmul.f32 %v3929, -0.00019511016
        %v3931 = vadd.f32 %v3930, 0.008332121
        %v3932 = vmul.f32 %v3929, %v3931
        %v3933 = vadd.f32 %v3932, -0.16666654
        %v3934 = vmul.f32 %v3929, %v3933
        %v3935 = vadd.f32 %v3934, 1.0
        %v3936 = vmul.f32 %v3935, %v3920
        %vm3937 = vweird.f32 %v220
        %v3938 = vadd.s32 %v3921, 3
        %v3939 = vand.u32 %v3938, 3
        %vm3940 = vcmp.lt.s32.totalorder %v3939, 2
        %vm3941 = vcmp.eq.s32.totalorder %v3939, 0
        %v3942 = vxor.u32 %v3936, 2147483648
        %v3943 = vsel %vm3941, %v3928, %v3942
        %vm3944 = vcmp.eq.s32.totalorder %v3939, 2
        %v3945 = vxor.u32 %v3928, 2147483648
        %v3946 = vsel %vm3944, %v3945, %v3936
        %v3947 = vsel %vm3940, %v3943, %v3946
        %v3948 = vsel %vm3937, nan, %v3947
        %v3949 = vand.u32 2147483647, %v221
        %vm3950 = vcmp.le.f32.partialorder %v3949, 0.7853982
        %vm3951 = vcmp.lt.s32.totalorder %v221, 0
        %v3952 = vand.u32 %v221, 2139095040
        %v3953 = vshrl.u32 %v3952, 23
        %v3954 = vsub.s32 %v3953, 127
        %v3955 = vand.u32 2147483647, %v221
        %v3956 = vand.u32 %v3955, 8388607
        %v3957 = vor.u32 %v3956, 8388608
        %v3958 = vsub.s32 0, %v3957
        %v3959 = vadd.s32 %v3954, 1
        %vm3960 = vcmp.gt.s32.totalorder %v3959, 0
        %v3961 = vsel %vm3960, %v3959, 0
        %v3962 = vshrl.u32 %v3961, 5
        %v3963 = vand.u32 %v3961, 31
        %v3964 = vsub.s32 32, %v3963
        %v3965 = vshrl.u32 683565275, %v3964
        %v3966 = vshll.u32 683565275, %v3963
        %v3967 = vshrl.u32 2475754826, %v3964
        %v3968 = vor.u32 %v3966, %v3967
        %v3969 = vshll.u32 2475754826, %v3963
        %v3970 = vshrl.u32 2131351028, %v3964
        %v3971 = vor.u32 %v3969, %v3970
        %v3972 = vshll.u32 2131351028, %v3963
        %v3973 = vshrl.u32 2102212464, %v3964
        %v3974 = vor.u32 %v3972, %v3973
        %v3975 = vshll.u32 2102212464, %v3963
        %v3976 = vshrl.u32 920167782, %v3964
        %v3977 = vor.u32 %v3975, %v3976
        %v3978 = vshll.u32 920167782, %v3963
        %v3979 = vshrl.u32 1326507024, %v3964
        %v3980 = vor.u32 %v3978, %v3979
        %vm3981 = vcmp.lt.s32.totalorder %v3962, 1
        %vm3982 = vcmp.lt.s32.totalorder %v3962, 2
        %vm3983 = vcmp.lt.s32.totalorder %v3962, 3
        %vm3984 = vcmp.lt.s32.totalorder %v3962, 4
        %v3985 = vsel %vm3981, %v3965, %v3968
        %v3986 = vsel %vm3984, %v3974, 2102212464
        %v3987 = vsel %vm3983, %v3971, %v3986
        %v3988 = vsel %vm3982, %v3985, %v3987
        %v3989 = vsel %vm3981, %v3968, %v3971
        %v3990 = vsel %vm3984, %v3977, 920167782
        %v3991 = vsel %vm3983, %v3974, %v3990
        %v3992 = vsel %vm3982, %v3989, %v3991
        %v3993 = vsel %vm3981, %v3971, %v3974
        %v3994 = vsel %vm3984, %v3980, 1326507024
        %v3995 = vsel %vm3983, %v3977, %v3994
        %v3996 = vsel %vm3982, %v3993, %v3995
        %v3997 = vshll.u32 %v3957, 8
        %v3998 = vand.u32 %v3997, 65535
        %v3999 = vshrl.u32 %v3997, 16
        %v4000 = vand.u32 %v3996, 65535
        %v4001 = vshrl.u32 %v3996, 16
        %v4002 = vmul.u32 %v3998, %v4000
        %v4003 = vmul.u32 %v3998, %v4001
        %v4004 = vmul.u32 %v3999, %v4000
        %v4005 = vmul.u32 %v3999, %v4001
        %v4006 = vshll.u32 %v4003, 16
        %v4007 = vshrl.u32 %v4003, 16
        %v4008 = vshll.u32 %v4004, 16
        %v4009 = vshrl.u32 %v4004, 16
        %vm4010 = vc.u32 %v4002, %v4006
        %v4011 = vsel %vm4010, 1, 0
        %v4012 = vadd.s32 %v4002, %v4006
        %v4013 = vadd.s32 %v4005, %v4011
        %vm4014 = vc.u32 %v4012, %v4008
        %v4015 = vsel %vm4014, 1, 0
        %v4016 = vadd.s32 %v4012, %v4008
        %v4017 = vadd.s32 %v4013, %v4015
        %v4018 = vadd.s32 %v4017, %v4007
        %v4019 = vadd.s32 %v4018, %v4009
        %v4020 = vand.u32 %v3997, 65535
        %v4021 = vshrl.u32 %v3997, 16
        %v4022 = vand.u32 %v3992, 65535
        %v4023 = vshrl.u32 %v3992, 16
        %v4024 = vmul.u32 %v4020, %v4022
        %v4025 = vmul.u32 %v4020, %v4023
        %v4026 = vmul.u32 %v4021, %v4022
        %v4027 = vmul.u32 %v4021, %v4023
        %v4028 = vshll.u32 %v4025, 16
        %v4029 = vshrl.u32 %v4025, 16
        %v4030 = vshll.u32 %v4026, 16
        %v4031 = vshrl.u32 %v4026, 16
        %vm4032 = vc.u32 %v4024, %v4028
        %v4033 = vsel %vm4032, 1, 0
        %v4034 = vadd.s32 %v4024, %v4028
        %v4035 = vadd.s32 %v4027, %v4033
        %vm4036 = vc.u32 %v4034, %v4030
        %v4037 = vsel %vm4036, 1, 0
        %v4038 = vadd.s32 %v4034, %v4030
        %v4039 = vadd.s32 %v4035, %v4037
        %v4040 = vadd.s32 %v4039, %v4029
        %v4041 = vadd.s32 %v4040, %v4031
        %v4042 = vmul.u32 %v3997, %v3988
        %v4043 = vadd.s32 %v4019, %v4038
        %vm4044 = vc.u32 %v4019, %v4038
        %v4045 = vadd.s32 %v4041, 1
        %v4046 = vsel %vm4044, %v4045, %v4041
        %v4047 = vadd.s32 %v4042, %v4046
        %v4048 = vadd.s32 %v4047, 536870912
        %v4049 = vshrl.u32 %v4048, 30
        %v4050 = vshll.u32 %v4049, 30
        %v4051 = vsub.s32 %v4047, %v4050
        %vm4052 = vcmp.lt.s32.totalorder %v4051, 0
        %v4053 = vsub.s32 0, %v4051
        %v4054 = vsel %vm4052, %v4053, %v4051
        %v4055 = vclz %v4054
        %v4056 = vsub.s32 %v4055, 2
        %vm4057 = vcmp.gt.s32.totalorder 0, %v4056
        %v4058 = vsel %vm4057, 0, %v4056
        %v4059 = vsub.s32 32, %v4058
        %v4060 = vshll.u32 %v4051, %v4058
        %v4061 = vshrl.u32 %v4043, %v4059
        %v4062 = vor.u32 %v4060, %v4061
        %v4063 = vsub.s32 4294967266, %v4058
        %v4064 = vadd.s32 %v4063, 127
        %v4065 = vshll.u32 %v4064, 23
        %v4066 = vor.u32 4788187, %v4065
        %v4067 = vand.u32 2147483647, %v4066
        %v4069 = vcvt.s32.f32 %v4062
        %v4070 = vmul.f32 %v4069, %v4067
        %v4071 = vxor.u32 %v4070, 2147483648
        %v4072 = vsel %vm3951, %v4071, %v4070
        %v4073 = vsub.s32 4, %v4049
        %v4074 = vsel %vm3951, %v4073, %v4049
        %v4075 = vsel %vm3950, %v221, %v4072
        %v4076 = vsel %vm3950, 0, %v4074
        %v4077 = vmul.f32 %v4075, %v4075
        %v4078 = vmul.f32 %v4077, -0.001358992
        %v4079 = vadd.f32 %v4078, 0.041655596
        %v4080 = vmul.f32 %v4077, %v4079
        %v4081 = vadd.f32 %v4080, -0.4999988
        %v4082 = vmul.f32 %v4077, %v4081
        %v4083 = vadd.f32 1.0, %v4082
        %v4084 = vmul.f32 %v4075, %v4075
        %v4085 = vmul.f32 %v4084, -0.00019511016
        %v4086 = vadd.f32 %v4085, 0.008332121
        %v4087 = vmul.f32 %v4084, %v4086
        %v4088 = vadd.f32 %v4087, -0.16666654
        %v4089 = vmul.f32 %v4084, %v4088
        %v4090 = vadd.f32 %v4089, 1.0
        %v4091 = vmul.f32 %v4090, %v4075
        %vm4092 = vweird.f32 %v221
        %v4093 = vadd.s32 %v4076, 3
        %v4094 = vand.u32 %v4093, 3
        %vm4095 = vcmp.lt.s32.totalorder %v4094, 2
        %vm4096 = vcmp.eq.s32.totalorder %v4094, 0
        %v4097 = vxor.u32 %v4091, 2147483648
        %v4098 = vsel %vm4096, %v4083, %v4097
        %vm4099 = vcmp.eq.s32.totalorder %v4094, 2
        %v4100 = vxor.u32 %v4083, 2147483648
        %v4101 = vsel %vm4099, %v4100, %v4091
        %v4102 = vsel %vm4095, %v4098, %v4101
        %v4103 = vsel %vm4092, nan, %v4102
        %v4104 = vand.u32 2147483647, %v222
        %vm4105 = vcmp.le.f32.partialorder %v4104, 0.7853982
        %vm4106 = vcmp.lt.s32.totalorder %v222, 0
        %v4107 = vand.u32 %v222, 2139095040
        %v4108 = vshrl.u32 %v4107, 23
        %v4109 = vsub.s32 %v4108, 127
        %v4110 = vand.u32 2147483647, %v222
        %v4111 = vand.u32 %v4110, 8388607
        %v4112 = vor.u32 %v4111, 8388608
        %v4113 = vsub.s32 0, %v4112
        %v4114 = vadd.s32 %v4109, 1
        %vm4115 = vcmp.gt.s32.totalorder %v4114, 0
        %v4116 = vsel %vm4115, %v4114, 0
        %v4117 = vshrl.u32 %v4116, 5
        %v4118 = vand.u32 %v4116, 31
        %v4119 = vsub.s32 32, %v4118
        %v4120 = vshrl.u32 683565275, %v4119
        %v4121 = vshll.u32 683565275, %v4118
        %v4122 = vshrl.u32 2475754826, %v4119
        %v4123 = vor.u32 %v4121, %v4122
        %v4124 = vshll.u32 2475754826, %v4118
        %v4125 = vshrl.u32 2131351028, %v4119
        %v4126 = vor.u32 %v4124, %v4125
        %v4127 = vshll.u32 2131351028, %v4118
        %v4128 = vshrl.u32 2102212464, %v4119
        %v4129 = vor.u32 %v4127, %v4128
        %v4130 = vshll.u32 2102212464, %v4118
        %v4131 = vshrl.u32 920167782, %v4119
        %v4132 = vor.u32 %v4130, %v4131
        %v4133 = vshll.u32 920167782, %v4118
        %v4134 = vshrl.u32 1326507024, %v4119
        %v4135 = vor.u32 %v4133, %v4134
        %vm4136 = vcmp.lt.s32.totalorder %v4117, 1
        %vm4137 = vcmp.lt.s32.totalorder %v4117, 2
        %vm4138 = vcmp.lt.s32.totalorder %v4117, 3
        %vm4139 = vcmp.lt.s32.totalorder %v4117, 4
        %v4140 = vsel %vm4136, %v4120, %v4123
        %v4141 = vsel %vm4139, %v4129, 2102212464
        %v4142 = vsel %vm4138, %v4126, %v4141
        %v4143 = vsel %vm4137, %v4140, %v4142
        %v4144 = vsel %vm4136, %v4123, %v4126
        %v4145 = vsel %vm4139, %v4132, 920167782
        %v4146 = vsel %vm4138, %v4129, %v4145
        %v4147 = vsel %vm4137, %v4144, %v4146
        %v4148 = vsel %vm4136, %v4126, %v4129
        %v4149 = vsel %vm4139, %v4135, 1326507024
        %v4150 = vsel %vm4138, %v4132, %v4149
        %v4151 = vsel %vm4137, %v4148, %v4150
        %v4152 = vshll.u32 %v4112, 8
        %v4153 = vand.u32 %v4152, 65535
        %v4154 = vshrl.u32 %v4152, 16
        %v4155 = vand.u32 %v4151, 65535
        %v4156 = vshrl.u32 %v4151, 16
        %v4157 = vmul.u32 %v4153, %v4155
        %v4158 = vmul.u32 %v4153, %v4156
        %v4159 = vmul.u32 %v4154, %v4155
        %v4160 = vmul.u32 %v4154, %v4156
        %v4161 = vshll.u32 %v4158, 16
        %v4162 = vshrl.u32 %v4158, 16
        %v4163 = vshll.u32 %v4159, 16
        %v4164 = vshrl.u32 %v4159, 16
        %vm4165 = vc.u32 %v4157, %v4161
        %v4166 = vsel %vm4165, 1, 0
        %v4167 = vadd.s32 %v4157, %v4161
        %v4168 = vadd.s32 %v4160, %v4166
        %vm4169 = vc.u32 %v4167, %v4163
        %v4170 = vsel %vm4169, 1, 0
        %v4171 = vadd.s32 %v4167, %v4163
        %v4172 = vadd.s32 %v4168, %v4170
        %v4173 = vadd.s32 %v4172, %v4162
        %v4174 = vadd.s32 %v4173, %v4164
        %v4175 = vand.u32 %v4152, 65535
        %v4176 = vshrl.u32 %v4152, 16
        %v4177 = vand.u32 %v4147, 65535
        %v4178 = vshrl.u32 %v4147, 16
        %v4179 = vmul.u32 %v4175, %v4177
        %v4180 = vmul.u32 %v4175, %v4178
        %v4181 = vmul.u32 %v4176, %v4177
        %v4182 = vmul.u32 %v4176, %v4178
        %v4183 = vshll.u32 %v4180, 16
        %v4184 = vshrl.u32 %v4180, 16
        %v4185 = vshll.u32 %v4181, 16
        %v4186 = vshrl.u32 %v4181, 16
        %vm4187 = vc.u32 %v4179, %v4183
        %v4188 = vsel %vm4187, 1, 0
        %v4189 = vadd.s32 %v4179, %v4183
        %v4190 = vadd.s32 %v4182, %v4188
        %vm4191 = vc.u32 %v4189, %v4185
        %v4192 = vsel %vm4191, 1, 0
        %v4193 = vadd.s32 %v4189, %v4185
        %v4194 = vadd.s32 %v4190, %v4192
        %v4195 = vadd.s32 %v4194, %v4184
        %v4196 = vadd.s32 %v4195, %v4186
        %v4197 = vmul.u32 %v4152, %v4143
        %v4198 = vadd.s32 %v4174, %v4193
        %vm4199 = vc.u32 %v4174, %v4193
        %v4200 = vadd.s32 %v4196, 1
        %v4201 = vsel %vm4199, %v4200, %v4196
        %v4202 = vadd.s32 %v4197, %v4201
        %v4203 = vadd.s32 %v4202, 536870912
        %v4204 = vshrl.u32 %v4203, 30
        %v4205 = vshll.u32 %v4204, 30
        %v4206 = vsub.s32 %v4202, %v4205
        %vm4207 = vcmp.lt.s32.totalorder %v4206, 0
        %v4208 = vsub.s32 0, %v4206
        %v4209 = vsel %vm4207, %v4208, %v4206
        %v4210 = vclz %v4209
        %v4211 = vsub.s32 %v4210, 2
        %vm4212 = vcmp.gt.s32.totalorder 0, %v4211
        %v4213 = vsel %vm4212, 0, %v4211
        %v4214 = vsub.s32 32, %v4213
        %v4215 = vshll.u32 %v4206, %v4213
        %v4216 = vshrl.u32 %v4198, %v4214
        %v4217 = vor.u32 %v4215, %v4216
        %v4218 = vsub.s32 4294967266, %v4213
        %v4219 = vadd.s32 %v4218, 127
        %v4220 = vshll.u32 %v4219, 23
        %v4221 = vor.u32 4788187, %v4220
        %v4222 = vand.u32 2147483647, %v4221
        %v4224 = vcvt.s32.f32 %v4217
        %v4225 = vmul.f32 %v4224, %v4222
        %v4226 = vxor.u32 %v4225, 2147483648
        %v4227 = vsel %vm4106, %v4226, %v4225
        %v4228 = vsub.s32 4, %v4204
        %v4229 = vsel %vm4106, %v4228, %v4204
        %v4230 = vsel %vm4105, %v222, %v4227
        %v4231 = vsel %vm4105, 0, %v4229
        %v4232 = vmul.f32 %v4230, %v4230
        %v4233 = vmul.f32 %v4232, -0.001358992
        %v4234 = vadd.f32 %v4233, 0.041655596
        %v4235 = vmul.f32 %v4232, %v4234
        %v4236 = vadd.f32 %v4235, -0.4999988
        %v4237 = vmul.f32 %v4232, %v4236
        %v4238 = vadd.f32 1.0, %v4237
        %v4239 = vmul.f32 %v4230, %v4230
        %v4240 = vmul.f32 %v4239, -0.00019511016
        %v4241 = vadd.f32 %v4240, 0.008332121
        %v4242 = vmul.f32 %v4239, %v4241
        %v4243 = vadd.f32 %v4242, -0.16666654
        %v4244 = vmul.f32 %v4239, %v4243
        %v4245 = vadd.f32 %v4244, 1.0
        %v4246 = vmul.f32 %v4245, %v4230
        %vm4247 = vweird.f32 %v222
        %v4248 = vadd.s32 %v4231, 3
        %v4249 = vand.u32 %v4248, 3
        %vm4250 = vcmp.lt.s32.totalorder %v4249, 2
        %vm4251 = vcmp.eq.s32.totalorder %v4249, 0
        %v4252 = vxor.u32 %v4246, 2147483648
        %v4253 = vsel %vm4251, %v4238, %v4252
        %vm4254 = vcmp.eq.s32.totalorder %v4249, 2
        %v4255 = vxor.u32 %v4238, 2147483648
        %v4256 = vsel %vm4254, %v4255, %v4246
        %v4257 = vsel %vm4250, %v4253, %v4256
        %v4258 = vsel %vm4247, nan, %v4257
        %v4259 = vand.u32 2147483647, %v223
        %vm4260 = vcmp.le.f32.partialorder %v4259, 0.7853982
        %vm4261 = vcmp.lt.s32.totalorder %v223, 0
        %v4262 = vand.u32 %v223, 2139095040
        %v4263 = vshrl.u32 %v4262, 23
        %v4264 = vsub.s32 %v4263, 127
        %v4265 = vand.u32 2147483647, %v223
        %v4266 = vand.u32 %v4265, 8388607
        %v4267 = vor.u32 %v4266, 8388608
        %v4268 = vsub.s32 0, %v4267
        %v4269 = vadd.s32 %v4264, 1
        %vm4270 = vcmp.gt.s32.totalorder %v4269, 0
        %v4271 = vsel %vm4270, %v4269, 0
        %v4272 = vshrl.u32 %v4271, 5
        %v4273 = vand.u32 %v4271, 31
        %v4274 = vsub.s32 32, %v4273
        %v4275 = vshrl.u32 683565275, %v4274
        %v4276 = vshll.u32 683565275, %v4273
        %v4277 = vshrl.u32 2475754826, %v4274
        %v4278 = vor.u32 %v4276, %v4277
        %v4279 = vshll.u32 2475754826, %v4273
        %v4280 = vshrl.u32 2131351028, %v4274
        %v4281 = vor.u32 %v4279, %v4280
        %v4282 = vshll.u32 2131351028, %v4273
        %v4283 = vshrl.u32 2102212464, %v4274
        %v4284 = vor.u32 %v4282, %v4283
        %v4285 = vshll.u32 2102212464, %v4273
        %v4286 = vshrl.u32 920167782, %v4274
        %v4287 = vor.u32 %v4285, %v4286
        %v4288 = vshll.u32 920167782, %v4273
        %v4289 = vshrl.u32 1326507024, %v4274
        %v4290 = vor.u32 %v4288, %v4289
        %vm4291 = vcmp.lt.s32.totalorder %v4272, 1
        %vm4292 = vcmp.lt.s32.totalorder %v4272, 2
        %vm4293 = vcmp.lt.s32.totalorder %v4272, 3
        %vm4294 = vcmp.lt.s32.totalorder %v4272, 4
        %v4295 = vsel %vm4291, %v4275, %v4278
        %v4296 = vsel %vm4294, %v4284, 2102212464
        %v4297 = vsel %vm4293, %v4281, %v4296
        %v4298 = vsel %vm4292, %v4295, %v4297
        %v4299 = vsel %vm4291, %v4278, %v4281
        %v4300 = vsel %vm4294, %v4287, 920167782
        %v4301 = vsel %vm4293, %v4284, %v4300
        %v4302 = vsel %vm4292, %v4299, %v4301
        %v4303 = vsel %vm4291, %v4281, %v4284
        %v4304 = vsel %vm4294, %v4290, 1326507024
        %v4305 = vsel %vm4293, %v4287, %v4304
        %v4306 = vsel %vm4292, %v4303, %v4305
        %v4307 = vshll.u32 %v4267, 8
        %v4308 = vand.u32 %v4307, 65535
        %v4309 = vshrl.u32 %v4307, 16
        %v4310 = vand.u32 %v4306, 65535
        %v4311 = vshrl.u32 %v4306, 16
        %v4312 = vmul.u32 %v4308, %v4310
        %v4313 = vmul.u32 %v4308, %v4311
        %v4314 = vmul.u32 %v4309, %v4310
        %v4315 = vmul.u32 %v4309, %v4311
        %v4316 = vshll.u32 %v4313, 16
        %v4317 = vshrl.u32 %v4313, 16
        %v4318 = vshll.u32 %v4314, 16
        %v4319 = vshrl.u32 %v4314, 16
        %vm4320 = vc.u32 %v4312, %v4316
        %v4321 = vsel %vm4320, 1, 0
        %v4322 = vadd.s32 %v4312, %v4316
        %v4323 = vadd.s32 %v4315, %v4321
        %vm4324 = vc.u32 %v4322, %v4318
        %v4325 = vsel %vm4324, 1, 0
        %v4326 = vadd.s32 %v4322, %v4318
        %v4327 = vadd.s32 %v4323, %v4325
        %v4328 = vadd.s32 %v4327, %v4317
        %v4329 = vadd.s32 %v4328, %v4319
        %v4330 = vand.u32 %v4307, 65535
        %v4331 = vshrl.u32 %v4307, 16
        %v4332 = vand.u32 %v4302, 65535
        %v4333 = vshrl.u32 %v4302, 16
        %v4334 = vmul.u32 %v4330, %v4332
        %v4335 = vmul.u32 %v4330, %v4333
        %v4336 = vmul.u32 %v4331, %v4332
        %v4337 = vmul.u32 %v4331, %v4333
        %v4338 = vshll.u32 %v4335, 16
        %v4339 = vshrl.u32 %v4335, 16
        %v4340 = vshll.u32 %v4336, 16
        %v4341 = vshrl.u32 %v4336, 16
        %vm4342 = vc.u32 %v4334, %v4338
        %v4343 = vsel %vm4342, 1, 0
        %v4344 = vadd.s32 %v4334, %v4338
        %v4345 = vadd.s32 %v4337, %v4343
        %vm4346 = vc.u32 %v4344, %v4340
        %v4347 = vsel %vm4346, 1, 0
        %v4348 = vadd.s32 %v4344, %v4340
        %v4349 = vadd.s32 %v4345, %v4347
        %v4350 = vadd.s32 %v4349, %v4339
        %v4351 = vadd.s32 %v4350, %v4341
        %v4352 = vmul.u32 %v4307, %v4298
        %v4353 = vadd.s32 %v4329, %v4348
        %vm4354 = vc.u32 %v4329, %v4348
        %v4355 = vadd.s32 %v4351, 1
        %v4356 = vsel %vm4354, %v4355, %v4351
        %v4357 = vadd.s32 %v4352, %v4356
        %v4358 = vadd.s32 %v4357, 536870912
        %v4359 = vshrl.u32 %v4358, 30
        %v4360 = vshll.u32 %v4359, 30
        %v4361 = vsub.s32 %v4357, %v4360
        %vm4362 = vcmp.lt.s32.totalorder %v4361, 0
        %v4363 = vsub.s32 0, %v4361
        %v4364 = vsel %vm4362, %v4363, %v4361
        %v4365 = vclz %v4364
        %v4366 = vsub.s32 %v4365, 2
        %vm4367 = vcmp.gt.s32.totalorder 0, %v4366
        %v4368 = vsel %vm4367, 0, %v4366
        %v4369 = vsub.s32 32, %v4368
        %v4370 = vshll.u32 %v4361, %v4368
        %v4371 = vshrl.u32 %v4353, %v4369
        %v4372 = vor.u32 %v4370, %v4371
        %v4373 = vsub.s32 4294967266, %v4368
        %v4374 = vadd.s32 %v4373, 127
        %v4375 = vshll.u32 %v4374, 23
        %v4376 = vor.u32 4788187, %v4375
        %v4377 = vand.u32 2147483647, %v4376
        %v4379 = vcvt.s32.f32 %v4372
        %v4380 = vmul.f32 %v4379, %v4377
        %v4381 = vxor.u32 %v4380, 2147483648
        %v4382 = vsel %vm4261, %v4381, %v4380
        %v4383 = vsub.s32 4, %v4359
        %v4384 = vsel %vm4261, %v4383, %v4359
        %v4385 = vsel %vm4260, %v223, %v4382
        %v4386 = vsel %vm4260, 0, %v4384
        %v4387 = vmul.f32 %v4385, %v4385
        %v4388 = vmul.f32 %v4387, -0.001358992
        %v4389 = vadd.f32 %v4388, 0.041655596
        %v4390 = vmul.f32 %v4387, %v4389
        %v4391 = vadd.f32 %v4390, -0.4999988
        %v4392 = vmul.f32 %v4387, %v4391
        %v4393 = vadd.f32 1.0, %v4392
        %v4394 = vmul.f32 %v4385, %v4385
        %v4395 = vmul.f32 %v4394, -0.00019511016
        %v4396 = vadd.f32 %v4395, 0.008332121
        %v4397 = vmul.f32 %v4394, %v4396
        %v4398 = vadd.f32 %v4397, -0.16666654
        %v4399 = vmul.f32 %v4394, %v4398
        %v4400 = vadd.f32 %v4399, 1.0
        %v4401 = vmul.f32 %v4400, %v4385
        %vm4402 = vweird.f32 %v223
        %v4403 = vadd.s32 %v4386, 3
        %v4404 = vand.u32 %v4403, 3
        %vm4405 = vcmp.lt.s32.totalorder %v4404, 2
        %vm4406 = vcmp.eq.s32.totalorder %v4404, 0
        %v4407 = vxor.u32 %v4401, 2147483648
        %v4408 = vsel %vm4406, %v4393, %v4407
        %vm4409 = vcmp.eq.s32.totalorder %v4404, 2
        %v4410 = vxor.u32 %v4393, 2147483648
        %v4411 = vsel %vm4409, %v4410, %v4401
        %v4412 = vsel %vm4405, %v4408, %v4411
        %v4413 = vsel %vm4402, nan, %v4412
        %v4414 = vand.u32 2147483647, %v224
        %vm4415 = vcmp.le.f32.partialorder %v4414, 0.7853982
        %vm4416 = vcmp.lt.s32.totalorder %v224, 0
        %v4417 = vand.u32 %v224, 2139095040
        %v4418 = vshrl.u32 %v4417, 23
        %v4419 = vsub.s32 %v4418, 127
        %v4420 = vand.u32 2147483647, %v224
        %v4421 = vand.u32 %v4420, 8388607
        %v4422 = vor.u32 %v4421, 8388608
        %v4423 = vsub.s32 0, %v4422
        %v4424 = vadd.s32 %v4419, 1
        %vm4425 = vcmp.gt.s32.totalorder %v4424, 0
        %v4426 = vsel %vm4425, %v4424, 0
        %v4427 = vshrl.u32 %v4426, 5
        %v4428 = vand.u32 %v4426, 31
        %v4429 = vsub.s32 32, %v4428
        %v4430 = vshrl.u32 683565275, %v4429
        %v4431 = vshll.u32 683565275, %v4428
        %v4432 = vshrl.u32 2475754826, %v4429
        %v4433 = vor.u32 %v4431, %v4432
        %v4434 = vshll.u32 2475754826, %v4428
        %v4435 = vshrl.u32 2131351028, %v4429
        %v4436 = vor.u32 %v4434, %v4435
        %v4437 = vshll.u32 2131351028, %v4428
        %v4438 = vshrl.u32 2102212464, %v4429
        %v4439 = vor.u32 %v4437, %v4438
        %v4440 = vshll.u32 2102212464, %v4428
        %v4441 = vshrl.u32 920167782, %v4429
        %v4442 = vor.u32 %v4440, %v4441
        %v4443 = vshll.u32 920167782, %v4428
        %v4444 = vshrl.u32 1326507024, %v4429
        %v4445 = vor.u32 %v4443, %v4444
        %vm4446 = vcmp.lt.s32.totalorder %v4427, 1
        %vm4447 = vcmp.lt.s32.totalorder %v4427, 2
        %vm4448 = vcmp.lt.s32.totalorder %v4427, 3
        %vm4449 = vcmp.lt.s32.totalorder %v4427, 4
        %v4450 = vsel %vm4446, %v4430, %v4433
        %v4451 = vsel %vm4449, %v4439, 2102212464
        %v4452 = vsel %vm4448, %v4436, %v4451
        %v4453 = vsel %vm4447, %v4450, %v4452
        %v4454 = vsel %vm4446, %v4433, %v4436
        %v4455 = vsel %vm4449, %v4442, 920167782
        %v4456 = vsel %vm4448, %v4439, %v4455
        %v4457 = vsel %vm4447, %v4454, %v4456
        %v4458 = vsel %vm4446, %v4436, %v4439
        %v4459 = vsel %vm4449, %v4445, 1326507024
        %v4460 = vsel %vm4448, %v4442, %v4459
        %v4461 = vsel %vm4447, %v4458, %v4460
        %v4462 = vshll.u32 %v4422, 8
        %v4463 = vand.u32 %v4462, 65535
        %v4464 = vshrl.u32 %v4462, 16
        %v4465 = vand.u32 %v4461, 65535
        %v4466 = vshrl.u32 %v4461, 16
        %v4467 = vmul.u32 %v4463, %v4465
        %v4468 = vmul.u32 %v4463, %v4466
        %v4469 = vmul.u32 %v4464, %v4465
        %v4470 = vmul.u32 %v4464, %v4466
        %v4471 = vshll.u32 %v4468, 16
        %v4472 = vshrl.u32 %v4468, 16
        %v4473 = vshll.u32 %v4469, 16
        %v4474 = vshrl.u32 %v4469, 16
        %vm4475 = vc.u32 %v4467, %v4471
        %v4476 = vsel %vm4475, 1, 0
        %v4477 = vadd.s32 %v4467, %v4471
        %v4478 = vadd.s32 %v4470, %v4476
        %vm4479 = vc.u32 %v4477, %v4473
        %v4480 = vsel %vm4479, 1, 0
        %v4481 = vadd.s32 %v4477, %v4473
        %v4482 = vadd.s32 %v4478, %v4480
        %v4483 = vadd.s32 %v4482, %v4472
        %v4484 = vadd.s32 %v4483, %v4474
        %v4485 = vand.u32 %v4462, 65535
        %v4486 = vshrl.u32 %v4462, 16
        %v4487 = vand.u32 %v4457, 65535
        %v4488 = vshrl.u32 %v4457, 16
        %v4489 = vmul.u32 %v4485, %v4487
        %v4490 = vmul.u32 %v4485, %v4488
        %v4491 = vmul.u32 %v4486, %v4487
        %v4492 = vmul.u32 %v4486, %v4488
        %v4493 = vshll.u32 %v4490, 16
        %v4494 = vshrl.u32 %v4490, 16
        %v4495 = vshll.u32 %v4491, 16
        %v4496 = vshrl.u32 %v4491, 16
        %vm4497 = vc.u32 %v4489, %v4493
        %v4498 = vsel %vm4497, 1, 0
        %v4499 = vadd.s32 %v4489, %v4493
        %v4500 = vadd.s32 %v4492, %v4498
        %vm4501 = vc.u32 %v4499, %v4495
        %v4502 = vsel %vm4501, 1, 0
        %v4503 = vadd.s32 %v4499, %v4495
        %v4504 = vadd.s32 %v4500, %v4502
        %v4505 = vadd.s32 %v4504, %v4494
        %v4506 = vadd.s32 %v4505, %v4496
        %v4507 = vmul.u32 %v4462, %v4453
        %v4508 = vadd.s32 %v4484, %v4503
        %vm4509 = vc.u32 %v4484, %v4503
        %v4510 = vadd.s32 %v4506, 1
        %v4511 = vsel %vm4509, %v4510, %v4506
        %v4512 = vadd.s32 %v4507, %v4511
        %v4513 = vadd.s32 %v4512, 536870912
        %v4514 = vshrl.u32 %v4513, 30
        %v4515 = vshll.u32 %v4514, 30
        %v4516 = vsub.s32 %v4512, %v4515
        %vm4517 = vcmp.lt.s32.totalorder %v4516, 0
        %v4518 = vsub.s32 0, %v4516
        %v4519 = vsel %vm4517, %v4518, %v4516
        %v4520 = vclz %v4519
        %v4521 = vsub.s32 %v4520, 2
        %vm4522 = vcmp.gt.s32.totalorder 0, %v4521
        %v4523 = vsel %vm4522, 0, %v4521
        %v4524 = vsub.s32 32, %v4523
        %v4525 = vshll.u32 %v4516, %v4523
        %v4526 = vshrl.u32 %v4508, %v4524
        %v4527 = vor.u32 %v4525, %v4526
        %v4528 = vsub.s32 4294967266, %v4523
        %v4529 = vadd.s32 %v4528, 127
        %v4530 = vshll.u32 %v4529, 23
        %v4531 = vor.u32 4788187, %v4530
        %v4532 = vand.u32 2147483647, %v4531
        %v4534 = vcvt.s32.f32 %v4527
        %v4535 = vmul.f32 %v4534, %v4532
        %v4536 = vxor.u32 %v4535, 2147483648
        %v4537 = vsel %vm4416, %v4536, %v4535
        %v4538 = vsub.s32 4, %v4514
        %v4539 = vsel %vm4416, %v4538, %v4514
        %v4540 = vsel %vm4415, %v224, %v4537
        %v4541 = vsel %vm4415, 0, %v4539
        %v4542 = vmul.f32 %v4540, %v4540
        %v4543 = vmul.f32 %v4542, -0.001358992
        %v4544 = vadd.f32 %v4543, 0.041655596
        %v4545 = vmul.f32 %v4542, %v4544
        %v4546 = vadd.f32 %v4545, -0.4999988
        %v4547 = vmul.f32 %v4542, %v4546
        %v4548 = vadd.f32 1.0, %v4547
        %v4549 = vmul.f32 %v4540, %v4540
        %v4550 = vmul.f32 %v4549, -0.00019511016
        %v4551 = vadd.f32 %v4550, 0.008332121
        %v4552 = vmul.f32 %v4549, %v4551
        %v4553 = vadd.f32 %v4552, -0.16666654
        %v4554 = vmul.f32 %v4549, %v4553
        %v4555 = vadd.f32 %v4554, 1.0
        %v4556 = vmul.f32 %v4555, %v4540
        %vm4557 = vweird.f32 %v224
        %v4558 = vadd.s32 %v4541, 3
        %v4559 = vand.u32 %v4558, 3
        %vm4560 = vcmp.lt.s32.totalorder %v4559, 2
        %vm4561 = vcmp.eq.s32.totalorder %v4559, 0
        %v4562 = vxor.u32 %v4556, 2147483648
        %v4563 = vsel %vm4561, %v4548, %v4562
        %vm4564 = vcmp.eq.s32.totalorder %v4559, 2
        %v4565 = vxor.u32 %v4548, 2147483648
        %v4566 = vsel %vm4564, %v4565, %v4556
        %v4567 = vsel %vm4560, %v4563, %v4566
        %v4568 = vsel %vm4557, nan, %v4567
        %v4569 = vand.u32 2147483647, %v225
        %vm4570 = vcmp.le.f32.partialorder %v4569, 0.7853982
        %vm4571 = vcmp.lt.s32.totalorder %v225, 0
        %v4572 = vand.u32 %v225, 2139095040
        %v4573 = vshrl.u32 %v4572, 23
        %v4574 = vsub.s32 %v4573, 127
        %v4575 = vand.u32 2147483647, %v225
        %v4576 = vand.u32 %v4575, 8388607
        %v4577 = vor.u32 %v4576, 8388608
        %v4578 = vsub.s32 0, %v4577
        %v4579 = vadd.s32 %v4574, 1
        %vm4580 = vcmp.gt.s32.totalorder %v4579, 0
        %v4581 = vsel %vm4580, %v4579, 0
        %v4582 = vshrl.u32 %v4581, 5
        %v4583 = vand.u32 %v4581, 31
        %v4584 = vsub.s32 32, %v4583
        %v4585 = vshrl.u32 683565275, %v4584
        %v4586 = vshll.u32 683565275, %v4583
        %v4587 = vshrl.u32 2475754826, %v4584
        %v4588 = vor.u32 %v4586, %v4587
        %v4589 = vshll.u32 2475754826, %v4583
        %v4590 = vshrl.u32 2131351028, %v4584
        %v4591 = vor.u32 %v4589, %v4590
        %v4592 = vshll.u32 2131351028, %v4583
        %v4593 = vshrl.u32 2102212464, %v4584
        %v4594 = vor.u32 %v4592, %v4593
        %v4595 = vshll.u32 2102212464, %v4583
        %v4596 = vshrl.u32 920167782, %v4584
        %v4597 = vor.u32 %v4595, %v4596
        %v4598 = vshll.u32 920167782, %v4583
        %v4599 = vshrl.u32 1326507024, %v4584
        %v4600 = vor.u32 %v4598, %v4599
        %vm4601 = vcmp.lt.s32.totalorder %v4582, 1
        %vm4602 = vcmp.lt.s32.totalorder %v4582, 2
        %vm4603 = vcmp.lt.s32.totalorder %v4582, 3
        %vm4604 = vcmp.lt.s32.totalorder %v4582, 4
        %v4605 = vsel %vm4601, %v4585, %v4588
        %v4606 = vsel %vm4604, %v4594, 2102212464
        %v4607 = vsel %vm4603, %v4591, %v4606
        %v4608 = vsel %vm4602, %v4605, %v4607
        %v4609 = vsel %vm4601, %v4588, %v4591
        %v4610 = vsel %vm4604, %v4597, 920167782
        %v4611 = vsel %vm4603, %v4594, %v4610
        %v4612 = vsel %vm4602, %v4609, %v4611
        %v4613 = vsel %vm4601, %v4591, %v4594
        %v4614 = vsel %vm4604, %v4600, 1326507024
        %v4615 = vsel %vm4603, %v4597, %v4614
        %v4616 = vsel %vm4602, %v4613, %v4615
        %v4617 = vshll.u32 %v4577, 8
        %v4618 = vand.u32 %v4617, 65535
        %v4619 = vshrl.u32 %v4617, 16
        %v4620 = vand.u32 %v4616, 65535
        %v4621 = vshrl.u32 %v4616, 16
        %v4622 = vmul.u32 %v4618, %v4620
        %v4623 = vmul.u32 %v4618, %v4621
        %v4624 = vmul.u32 %v4619, %v4620
        %v4625 = vmul.u32 %v4619, %v4621
        %v4626 = vshll.u32 %v4623, 16
        %v4627 = vshrl.u32 %v4623, 16
        %v4628 = vshll.u32 %v4624, 16
        %v4629 = vshrl.u32 %v4624, 16
        %vm4630 = vc.u32 %v4622, %v4626
        %v4631 = vsel %vm4630, 1, 0
        %v4632 = vadd.s32 %v4622, %v4626
        %v4633 = vadd.s32 %v4625, %v4631
        %vm4634 = vc.u32 %v4632, %v4628
        %v4635 = vsel %vm4634, 1, 0
        %v4636 = vadd.s32 %v4632, %v4628
        %v4637 = vadd.s32 %v4633, %v4635
        %v4638 = vadd.s32 %v4637, %v4627
        %v4639 = vadd.s32 %v4638, %v4629
        %v4640 = vand.u32 %v4617, 65535
        %v4641 = vshrl.u32 %v4617, 16
        %v4642 = vand.u32 %v4612, 65535
        %v4643 = vshrl.u32 %v4612, 16
        %v4644 = vmul.u32 %v4640, %v4642
        %v4645 = vmul.u32 %v4640, %v4643
        %v4646 = vmul.u32 %v4641, %v4642
        %v4647 = vmul.u32 %v4641, %v4643
        %v4648 = vshll.u32 %v4645, 16
        %v4649 = vshrl.u32 %v4645, 16
        %v4650 = vshll.u32 %v4646, 16
        %v4651 = vshrl.u32 %v4646, 16
        %vm4652 = vc.u32 %v4644, %v4648
        %v4653 = vsel %vm4652, 1, 0
        %v4654 = vadd.s32 %v4644, %v4648
        %v4655 = vadd.s32 %v4647, %v4653
        %vm4656 = vc.u32 %v4654, %v4650
        %v4657 = vsel %vm4656, 1, 0
        %v4658 = vadd.s32 %v4654, %v4650
        %v4659 = vadd.s32 %v4655, %v4657
        %v4660 = vadd.s32 %v4659, %v4649
        %v4661 = vadd.s32 %v4660, %v4651
        %v4662 = vmul.u32 %v4617, %v4608
        %v4663 = vadd.s32 %v4639, %v4658
        %vm4664 = vc.u32 %v4639, %v4658
        %v4665 = vadd.s32 %v4661, 1
        %v4666 = vsel %vm4664, %v4665, %v4661
        %v4667 = vadd.s32 %v4662, %v4666
        %v4668 = vadd.s32 %v4667, 536870912
        %v4669 = vshrl.u32 %v4668, 30
        %v4670 = vshll.u32 %v4669, 30
        %v4671 = vsub.s32 %v4667, %v4670
        %vm4672 = vcmp.lt.s32.totalorder %v4671, 0
        %v4673 = vsub.s32 0, %v4671
        %v4674 = vsel %vm4672, %v4673, %v4671
        %v4675 = vclz %v4674
        %v4676 = vsub.s32 %v4675, 2
        %vm4677 = vcmp.gt.s32.totalorder 0, %v4676
        %v4678 = vsel %vm4677, 0, %v4676
        %v4679 = vsub.s32 32, %v4678
        %v4680 = vshll.u32 %v4671, %v4678
        %v4681 = vshrl.u32 %v4663, %v4679
        %v4682 = vor.u32 %v4680, %v4681
        %v4683 = vsub.s32 4294967266, %v4678
        %v4684 = vadd.s32 %v4683, 127
        %v4685 = vshll.u32 %v4684, 23
        %v4686 = vor.u32 4788187, %v4685
        %v4687 = vand.u32 2147483647, %v4686
        %v4689 = vcvt.s32.f32 %v4682
        %v4690 = vmul.f32 %v4689, %v4687
        %v4691 = vxor.u32 %v4690, 2147483648
        %v4692 = vsel %vm4571, %v4691, %v4690
        %v4693 = vsub.s32 4, %v4669
        %v4694 = vsel %vm4571, %v4693, %v4669
        %v4695 = vsel %vm4570, %v225, %v4692
        %v4696 = vsel %vm4570, 0, %v4694
        %v4697 = vmul.f32 %v4695, %v4695
        %v4698 = vmul.f32 %v4697, -0.001358992
        %v4699 = vadd.f32 %v4698, 0.041655596
        %v4700 = vmul.f32 %v4697, %v4699
        %v4701 = vadd.f32 %v4700, -0.4999988
        %v4702 = vmul.f32 %v4697, %v4701
        %v4703 = vadd.f32 1.0, %v4702
        %v4704 = vmul.f32 %v4695, %v4695
        %v4705 = vmul.f32 %v4704, -0.00019511016
        %v4706 = vadd.f32 %v4705, 0.008332121
        %v4707 = vmul.f32 %v4704, %v4706
        %v4708 = vadd.f32 %v4707, -0.16666654
        %v4709 = vmul.f32 %v4704, %v4708
        %v4710 = vadd.f32 %v4709, 1.0
        %v4711 = vmul.f32 %v4710, %v4695
        %vm4712 = vweird.f32 %v225
        %v4713 = vadd.s32 %v4696, 3
        %v4714 = vand.u32 %v4713, 3
        %vm4715 = vcmp.lt.s32.totalorder %v4714, 2
        %vm4716 = vcmp.eq.s32.totalorder %v4714, 0
        %v4717 = vxor.u32 %v4711, 2147483648
        %v4718 = vsel %vm4716, %v4703, %v4717
        %vm4719 = vcmp.eq.s32.totalorder %v4714, 2
        %v4720 = vxor.u32 %v4703, 2147483648
        %v4721 = vsel %vm4719, %v4720, %v4711
        %v4722 = vsel %vm4715, %v4718, %v4721
        %v4723 = vsel %vm4712, nan, %v4722
        %v4724 = vand.u32 2147483647, %v226
        %vm4725 = vcmp.le.f32.partialorder %v4724, 0.7853982
        %vm4726 = vcmp.lt.s32.totalorder %v226, 0
        %v4727 = vand.u32 %v226, 2139095040
        %v4728 = vshrl.u32 %v4727, 23
        %v4729 = vsub.s32 %v4728, 127
        %v4730 = vand.u32 2147483647, %v226
        %v4731 = vand.u32 %v4730, 8388607
        %v4732 = vor.u32 %v4731, 8388608
        %v4733 = vsub.s32 0, %v4732
        %v4734 = vadd.s32 %v4729, 1
        %vm4735 = vcmp.gt.s32.totalorder %v4734, 0
        %v4736 = vsel %vm4735, %v4734, 0
        %v4737 = vshrl.u32 %v4736, 5
        %v4738 = vand.u32 %v4736, 31
        %v4739 = vsub.s32 32, %v4738
        %v4740 = vshrl.u32 683565275, %v4739
        %v4741 = vshll.u32 683565275, %v4738
        %v4742 = vshrl.u32 2475754826, %v4739
        %v4743 = vor.u32 %v4741, %v4742
        %v4744 = vshll.u32 2475754826, %v4738
        %v4745 = vshrl.u32 2131351028, %v4739
        %v4746 = vor.u32 %v4744, %v4745
        %v4747 = vshll.u32 2131351028, %v4738
        %v4748 = vshrl.u32 2102212464, %v4739
        %v4749 = vor.u32 %v4747, %v4748
        %v4750 = vshll.u32 2102212464, %v4738
        %v4751 = vshrl.u32 920167782, %v4739
        %v4752 = vor.u32 %v4750, %v4751
        %v4753 = vshll.u32 920167782, %v4738
        %v4754 = vshrl.u32 1326507024, %v4739
        %v4755 = vor.u32 %v4753, %v4754
        %vm4756 = vcmp.lt.s32.totalorder %v4737, 1
        %vm4757 = vcmp.lt.s32.totalorder %v4737, 2
        %vm4758 = vcmp.lt.s32.totalorder %v4737, 3
        %vm4759 = vcmp.lt.s32.totalorder %v4737, 4
        %v4760 = vsel %vm4756, %v4740, %v4743
        %v4761 = vsel %vm4759, %v4749, 2102212464
        %v4762 = vsel %vm4758, %v4746, %v4761
        %v4763 = vsel %vm4757, %v4760, %v4762
        %v4764 = vsel %vm4756, %v4743, %v4746
        %v4765 = vsel %vm4759, %v4752, 920167782
        %v4766 = vsel %vm4758, %v4749, %v4765
        %v4767 = vsel %vm4757, %v4764, %v4766
        %v4768 = vsel %vm4756, %v4746, %v4749
        %v4769 = vsel %vm4759, %v4755, 1326507024
        %v4770 = vsel %vm4758, %v4752, %v4769
        %v4771 = vsel %vm4757, %v4768, %v4770
        %v4772 = vshll.u32 %v4732, 8
        %v4773 = vand.u32 %v4772, 65535
        %v4774 = vshrl.u32 %v4772, 16
        %v4775 = vand.u32 %v4771, 65535
        %v4776 = vshrl.u32 %v4771, 16
        %v4777 = vmul.u32 %v4773, %v4775
        %v4778 = vmul.u32 %v4773, %v4776
        %v4779 = vmul.u32 %v4774, %v4775
        %v4780 = vmul.u32 %v4774, %v4776
        %v4781 = vshll.u32 %v4778, 16
        %v4782 = vshrl.u32 %v4778, 16
        %v4783 = vshll.u32 %v4779, 16
        %v4784 = vshrl.u32 %v4779, 16
        %vm4785 = vc.u32 %v4777, %v4781
        %v4786 = vsel %vm4785, 1, 0
        %v4787 = vadd.s32 %v4777, %v4781
        %v4788 = vadd.s32 %v4780, %v4786
        %vm4789 = vc.u32 %v4787, %v4783
        %v4790 = vsel %vm4789, 1, 0
        %v4791 = vadd.s32 %v4787, %v4783
        %v4792 = vadd.s32 %v4788, %v4790
        %v4793 = vadd.s32 %v4792, %v4782
        %v4794 = vadd.s32 %v4793, %v4784
        %v4795 = vand.u32 %v4772, 65535
        %v4796 = vshrl.u32 %v4772, 16
        %v4797 = vand.u32 %v4767, 65535
        %v4798 = vshrl.u32 %v4767, 16
        %v4799 = vmul.u32 %v4795, %v4797
        %v4800 = vmul.u32 %v4795, %v4798
        %v4801 = vmul.u32 %v4796, %v4797
        %v4802 = vmul.u32 %v4796, %v4798
        %v4803 = vshll.u32 %v4800, 16
        %v4804 = vshrl.u32 %v4800, 16
        %v4805 = vshll.u32 %v4801, 16
        %v4806 = vshrl.u32 %v4801, 16
        %vm4807 = vc.u32 %v4799, %v4803
        %v4808 = vsel %vm4807, 1, 0
        %v4809 = vadd.s32 %v4799, %v4803
        %v4810 = vadd.s32 %v4802, %v4808
        %vm4811 = vc.u32 %v4809, %v4805
        %v4812 = vsel %vm4811, 1, 0
        %v4813 = vadd.s32 %v4809, %v4805
        %v4814 = vadd.s32 %v4810, %v4812
        %v4815 = vadd.s32 %v4814, %v4804
        %v4816 = vadd.s32 %v4815, %v4806
        %v4817 = vmul.u32 %v4772, %v4763
        %v4818 = vadd.s32 %v4794, %v4813
        %vm4819 = vc.u32 %v4794, %v4813
        %v4820 = vadd.s32 %v4816, 1
        %v4821 = vsel %vm4819, %v4820, %v4816
        %v4822 = vadd.s32 %v4817, %v4821
        %v4823 = vadd.s32 %v4822, 536870912
        %v4824 = vshrl.u32 %v4823, 30
        %v4825 = vshll.u32 %v4824, 30
        %v4826 = vsub.s32 %v4822, %v4825
        %vm4827 = vcmp.lt.s32.totalorder %v4826, 0
        %v4828 = vsub.s32 0, %v4826
        %v4829 = vsel %vm4827, %v4828, %v4826
        %v4830 = vclz %v4829
        %v4831 = vsub.s32 %v4830, 2
        %vm4832 = vcmp.gt.s32.totalorder 0, %v4831
        %v4833 = vsel %vm4832, 0, %v4831
        %v4834 = vsub.s32 32, %v4833
        %v4835 = vshll.u32 %v4826, %v4833
        %v4836 = vshrl.u32 %v4818, %v4834
        %v4837 = vor.u32 %v4835, %v4836
        %v4838 = vsub.s32 4294967266, %v4833
        %v4839 = vadd.s32 %v4838, 127
        %v4840 = vshll.u32 %v4839, 23
        %v4841 = vor.u32 4788187, %v4840
        %v4842 = vand.u32 2147483647, %v4841
        %v4844 = vcvt.s32.f32 %v4837
        %v4845 = vmul.f32 %v4844, %v4842
        %v4846 = vxor.u32 %v4845, 2147483648
        %v4847 = vsel %vm4726, %v4846, %v4845
        %v4848 = vsub.s32 4, %v4824
        %v4849 = vsel %vm4726, %v4848, %v4824
        %v4850 = vsel %vm4725, %v226, %v4847
        %v4851 = vsel %vm4725, 0, %v4849
        %v4852 = vmul.f32 %v4850, %v4850
        %v4853 = vmul.f32 %v4852, -0.001358992
        %v4854 = vadd.f32 %v4853, 0.041655596
        %v4855 = vmul.f32 %v4852, %v4854
        %v4856 = vadd.f32 %v4855, -0.4999988
        %v4857 = vmul.f32 %v4852, %v4856
        %v4858 = vadd.f32 1.0, %v4857
        %v4859 = vmul.f32 %v4850, %v4850
        %v4860 = vmul.f32 %v4859, -0.00019511016
        %v4861 = vadd.f32 %v4860, 0.008332121
        %v4862 = vmul.f32 %v4859, %v4861
        %v4863 = vadd.f32 %v4862, -0.16666654
        %v4864 = vmul.f32 %v4859, %v4863
        %v4865 = vadd.f32 %v4864, 1.0
        %v4866 = vmul.f32 %v4865, %v4850
        %vm4867 = vweird.f32 %v226
        %v4868 = vadd.s32 %v4851, 3
        %v4869 = vand.u32 %v4868, 3
        %vm4870 = vcmp.lt.s32.totalorder %v4869, 2
        %vm4871 = vcmp.eq.s32.totalorder %v4869, 0
        %v4872 = vxor.u32 %v4866, 2147483648
        %v4873 = vsel %vm4871, %v4858, %v4872
        %vm4874 = vcmp.eq.s32.totalorder %v4869, 2
        %v4875 = vxor.u32 %v4858, 2147483648
        %v4876 = vsel %vm4874, %v4875, %v4866
        %v4877 = vsel %vm4870, %v4873, %v4876
        %v4878 = vsel %vm4867, nan, %v4877
        %v4879 = vand.u32 2147483647, %v227
        %vm4880 = vcmp.le.f32.partialorder %v4879, 0.7853982
        %vm4881 = vcmp.lt.s32.totalorder %v227, 0
        %v4882 = vand.u32 %v227, 2139095040
        %v4883 = vshrl.u32 %v4882, 23
        %v4884 = vsub.s32 %v4883, 127
        %v4885 = vand.u32 2147483647, %v227
        %v4886 = vand.u32 %v4885, 8388607
        %v4887 = vor.u32 %v4886, 8388608
        %v4888 = vsub.s32 0, %v4887
        %v4889 = vadd.s32 %v4884, 1
        %vm4890 = vcmp.gt.s32.totalorder %v4889, 0
        %v4891 = vsel %vm4890, %v4889, 0
        %v4892 = vshrl.u32 %v4891, 5
        %v4893 = vand.u32 %v4891, 31
        %v4894 = vsub.s32 32, %v4893
        %v4895 = vshrl.u32 683565275, %v4894
        %v4896 = vshll.u32 683565275, %v4893
        %v4897 = vshrl.u32 2475754826, %v4894
        %v4898 = vor.u32 %v4896, %v4897
        %v4899 = vshll.u32 2475754826, %v4893
        %v4900 = vshrl.u32 2131351028, %v4894
        %v4901 = vor.u32 %v4899, %v4900
        %v4902 = vshll.u32 2131351028, %v4893
        %v4903 = vshrl.u32 2102212464, %v4894
        %v4904 = vor.u32 %v4902, %v4903
        %v4905 = vshll.u32 2102212464, %v4893
        %v4906 = vshrl.u32 920167782, %v4894
        %v4907 = vor.u32 %v4905, %v4906
        %v4908 = vshll.u32 920167782, %v4893
        %v4909 = vshrl.u32 1326507024, %v4894
        %v4910 = vor.u32 %v4908, %v4909
        %vm4911 = vcmp.lt.s32.totalorder %v4892, 1
        %vm4912 = vcmp.lt.s32.totalorder %v4892, 2
        %vm4913 = vcmp.lt.s32.totalorder %v4892, 3
        %vm4914 = vcmp.lt.s32.totalorder %v4892, 4
        %v4915 = vsel %vm4911, %v4895, %v4898
        %v4916 = vsel %vm4914, %v4904, 2102212464
        %v4917 = vsel %vm4913, %v4901, %v4916
        %v4918 = vsel %vm4912, %v4915, %v4917
        %v4919 = vsel %vm4911, %v4898, %v4901
        %v4920 = vsel %vm4914, %v4907, 920167782
        %v4921 = vsel %vm4913, %v4904, %v4920
        %v4922 = vsel %vm4912, %v4919, %v4921
        %v4923 = vsel %vm4911, %v4901, %v4904
        %v4924 = vsel %vm4914, %v4910, 1326507024
        %v4925 = vsel %vm4913, %v4907, %v4924
        %v4926 = vsel %vm4912, %v4923, %v4925
        %v4927 = vshll.u32 %v4887, 8
        %v4928 = vand.u32 %v4927, 65535
        %v4929 = vshrl.u32 %v4927, 16
        %v4930 = vand.u32 %v4926, 65535
        %v4931 = vshrl.u32 %v4926, 16
        %v4932 = vmul.u32 %v4928, %v4930
        %v4933 = vmul.u32 %v4928, %v4931
        %v4934 = vmul.u32 %v4929, %v4930
        %v4935 = vmul.u32 %v4929, %v4931
        %v4936 = vshll.u32 %v4933, 16
        %v4937 = vshrl.u32 %v4933, 16
        %v4938 = vshll.u32 %v4934, 16
        %v4939 = vshrl.u32 %v4934, 16
        %vm4940 = vc.u32 %v4932, %v4936
        %v4941 = vsel %vm4940, 1, 0
        %v4942 = vadd.s32 %v4932, %v4936
        %v4943 = vadd.s32 %v4935, %v4941
        %vm4944 = vc.u32 %v4942, %v4938
        %v4945 = vsel %vm4944, 1, 0
        %v4946 = vadd.s32 %v4942, %v4938
        %v4947 = vadd.s32 %v4943, %v4945
        %v4948 = vadd.s32 %v4947, %v4937
        %v4949 = vadd.s32 %v4948, %v4939
        %v4950 = vand.u32 %v4927, 65535
        %v4951 = vshrl.u32 %v4927, 16
        %v4952 = vand.u32 %v4922, 65535
        %v4953 = vshrl.u32 %v4922, 16
        %v4954 = vmul.u32 %v4950, %v4952
        %v4955 = vmul.u32 %v4950, %v4953
        %v4956 = vmul.u32 %v4951, %v4952
        %v4957 = vmul.u32 %v4951, %v4953
        %v4958 = vshll.u32 %v4955, 16
        %v4959 = vshrl.u32 %v4955, 16
        %v4960 = vshll.u32 %v4956, 16
        %v4961 = vshrl.u32 %v4956, 16
        %vm4962 = vc.u32 %v4954, %v4958
        %v4963 = vsel %vm4962, 1, 0
        %v4964 = vadd.s32 %v4954, %v4958
        %v4965 = vadd.s32 %v4957, %v4963
        %vm4966 = vc.u32 %v4964, %v4960
        %v4967 = vsel %vm4966, 1, 0
        %v4968 = vadd.s32 %v4964, %v4960
        %v4969 = vadd.s32 %v4965, %v4967
        %v4970 = vadd.s32 %v4969, %v4959
        %v4971 = vadd.s32 %v4970, %v4961
        %v4972 = vmul.u32 %v4927, %v4918
        %v4973 = vadd.s32 %v4949, %v4968
        %vm4974 = vc.u32 %v4949, %v4968
        %v4975 = vadd.s32 %v4971, 1
        %v4976 = vsel %vm4974, %v4975, %v4971
        %v4977 = vadd.s32 %v4972, %v4976
        %v4978 = vadd.s32 %v4977, 536870912
        %v4979 = vshrl.u32 %v4978, 30
        %v4980 = vshll.u32 %v4979, 30
        %v4981 = vsub.s32 %v4977, %v4980
        %vm4982 = vcmp.lt.s32.totalorder %v4981, 0
        %v4983 = vsub.s32 0, %v4981
        %v4984 = vsel %vm4982, %v4983, %v4981
        %v4985 = vclz %v4984
        %v4986 = vsub.s32 %v4985, 2
        %vm4987 = vcmp.gt.s32.totalorder 0, %v4986
        %v4988 = vsel %vm4987, 0, %v4986
        %v4989 = vsub.s32 32, %v4988
        %v4990 = vshll.u32 %v4981, %v4988
        %v4991 = vshrl.u32 %v4973, %v4989
        %v4992 = vor.u32 %v4990, %v4991
        %v4993 = vsub.s32 4294967266, %v4988
        %v4994 = vadd.s32 %v4993, 127
        %v4995 = vshll.u32 %v4994, 23
        %v4996 = vor.u32 4788187, %v4995
        %v4997 = vand.u32 2147483647, %v4996
        %v4999 = vcvt.s32.f32 %v4992
        %v5000 = vmul.f32 %v4999, %v4997
        %v5001 = vxor.u32 %v5000, 2147483648
        %v5002 = vsel %vm4881, %v5001, %v5000
        %v5003 = vsub.s32 4, %v4979
        %v5004 = vsel %vm4881, %v5003, %v4979
        %v5005 = vsel %vm4880, %v227, %v5002
        %v5006 = vsel %vm4880, 0, %v5004
        %v5007 = vmul.f32 %v5005, %v5005
        %v5008 = vmul.f32 %v5007, -0.001358992
        %v5009 = vadd.f32 %v5008, 0.041655596
        %v5010 = vmul.f32 %v5007, %v5009
        %v5011 = vadd.f32 %v5010, -0.4999988
        %v5012 = vmul.f32 %v5007, %v5011
        %v5013 = vadd.f32 1.0, %v5012
        %v5014 = vmul.f32 %v5005, %v5005
        %v5015 = vmul.f32 %v5014, -0.00019511016
        %v5016 = vadd.f32 %v5015, 0.008332121
        %v5017 = vmul.f32 %v5014, %v5016
        %v5018 = vadd.f32 %v5017, -0.16666654
        %v5019 = vmul.f32 %v5014, %v5018
        %v5020 = vadd.f32 %v5019, 1.0
        %v5021 = vmul.f32 %v5020, %v5005
        %vm5022 = vweird.f32 %v227
        %v5023 = vadd.s32 %v5006, 3
        %v5024 = vand.u32 %v5023, 3
        %vm5025 = vcmp.lt.s32.totalorder %v5024, 2
        %vm5026 = vcmp.eq.s32.totalorder %v5024, 0
        %v5027 = vxor.u32 %v5021, 2147483648
        %v5028 = vsel %vm5026, %v5013, %v5027
        %vm5029 = vcmp.eq.s32.totalorder %v5024, 2
        %v5030 = vxor.u32 %v5013, 2147483648
        %v5031 = vsel %vm5029, %v5030, %v5021
        %v5032 = vsel %vm5025, %v5028, %v5031
        %v5033 = vsel %vm5022, nan, %v5032
        %v5034 = vand.u32 2147483647, %v228
        %vm5035 = vcmp.le.f32.partialorder %v5034, 0.7853982
        %vm5036 = vcmp.lt.s32.totalorder %v228, 0
        %v5037 = vand.u32 %v228, 2139095040
        %v5038 = vshrl.u32 %v5037, 23
        %v5039 = vsub.s32 %v5038, 127
        %v5040 = vand.u32 2147483647, %v228
        %v5041 = vand.u32 %v5040, 8388607
        %v5042 = vor.u32 %v5041, 8388608
        %v5043 = vsub.s32 0, %v5042
        %v5044 = vadd.s32 %v5039, 1
        %vm5045 = vcmp.gt.s32.totalorder %v5044, 0
        %v5046 = vsel %vm5045, %v5044, 0
        %v5047 = vshrl.u32 %v5046, 5
        %v5048 = vand.u32 %v5046, 31
        %v5049 = vsub.s32 32, %v5048
        %v5050 = vshrl.u32 683565275, %v5049
        %v5051 = vshll.u32 683565275, %v5048
        %v5052 = vshrl.u32 2475754826, %v5049
        %v5053 = vor.u32 %v5051, %v5052
        %v5054 = vshll.u32 2475754826, %v5048
        %v5055 = vshrl.u32 2131351028, %v5049
        %v5056 = vor.u32 %v5054, %v5055
        %v5057 = vshll.u32 2131351028, %v5048
        %v5058 = vshrl.u32 2102212464, %v5049
        %v5059 = vor.u32 %v5057, %v5058
        %v5060 = vshll.u32 2102212464, %v5048
        %v5061 = vshrl.u32 920167782, %v5049
        %v5062 = vor.u32 %v5060, %v5061
        %v5063 = vshll.u32 920167782, %v5048
        %v5064 = vshrl.u32 1326507024, %v5049
        %v5065 = vor.u32 %v5063, %v5064
        %vm5066 = vcmp.lt.s32.totalorder %v5047, 1
        %vm5067 = vcmp.lt.s32.totalorder %v5047, 2
        %vm5068 = vcmp.lt.s32.totalorder %v5047, 3
        %vm5069 = vcmp.lt.s32.totalorder %v5047, 4
        %v5070 = vsel %vm5066, %v5050, %v5053
        %v5071 = vsel %vm5069, %v5059, 2102212464
        %v5072 = vsel %vm5068, %v5056, %v5071
        %v5073 = vsel %vm5067, %v5070, %v5072
        %v5074 = vsel %vm5066, %v5053, %v5056
        %v5075 = vsel %vm5069, %v5062, 920167782
        %v5076 = vsel %vm5068, %v5059, %v5075
        %v5077 = vsel %vm5067, %v5074, %v5076
        %v5078 = vsel %vm5066, %v5056, %v5059
        %v5079 = vsel %vm5069, %v5065, 1326507024
        %v5080 = vsel %vm5068, %v5062, %v5079
        %v5081 = vsel %vm5067, %v5078, %v5080
        %v5082 = vshll.u32 %v5042, 8
        %v5083 = vand.u32 %v5082, 65535
        %v5084 = vshrl.u32 %v5082, 16
        %v5085 = vand.u32 %v5081, 65535
        %v5086 = vshrl.u32 %v5081, 16
        %v5087 = vmul.u32 %v5083, %v5085
        %v5088 = vmul.u32 %v5083, %v5086
        %v5089 = vmul.u32 %v5084, %v5085
        %v5090 = vmul.u32 %v5084, %v5086
        %v5091 = vshll.u32 %v5088, 16
        %v5092 = vshrl.u32 %v5088, 16
        %v5093 = vshll.u32 %v5089, 16
        %v5094 = vshrl.u32 %v5089, 16
        %vm5095 = vc.u32 %v5087, %v5091
        %v5096 = vsel %vm5095, 1, 0
        %v5097 = vadd.s32 %v5087, %v5091
        %v5098 = vadd.s32 %v5090, %v5096
        %vm5099 = vc.u32 %v5097, %v5093
        %v5100 = vsel %vm5099, 1, 0
        %v5101 = vadd.s32 %v5097, %v5093
        %v5102 = vadd.s32 %v5098, %v5100
        %v5103 = vadd.s32 %v5102, %v5092
        %v5104 = vadd.s32 %v5103, %v5094
        %v5105 = vand.u32 %v5082, 65535
        %v5106 = vshrl.u32 %v5082, 16
        %v5107 = vand.u32 %v5077, 65535
        %v5108 = vshrl.u32 %v5077, 16
        %v5109 = vmul.u32 %v5105, %v5107
        %v5110 = vmul.u32 %v5105, %v5108
        %v5111 = vmul.u32 %v5106, %v5107
        %v5112 = vmul.u32 %v5106, %v5108
        %v5113 = vshll.u32 %v5110, 16
        %v5114 = vshrl.u32 %v5110, 16
        %v5115 = vshll.u32 %v5111, 16
        %v5116 = vshrl.u32 %v5111, 16
        %vm5117 = vc.u32 %v5109, %v5113
        %v5118 = vsel %vm5117, 1, 0
        %v5119 = vadd.s32 %v5109, %v5113
        %v5120 = vadd.s32 %v5112, %v5118
        %vm5121 = vc.u32 %v5119, %v5115
        %v5122 = vsel %vm5121, 1, 0
        %v5123 = vadd.s32 %v5119, %v5115
        %v5124 = vadd.s32 %v5120, %v5122
        %v5125 = vadd.s32 %v5124, %v5114
        %v5126 = vadd.s32 %v5125, %v5116
        %v5127 = vmul.u32 %v5082, %v5073
        %v5128 = vadd.s32 %v5104, %v5123
        %vm5129 = vc.u32 %v5104, %v5123
        %v5130 = vadd.s32 %v5126, 1
        %v5131 = vsel %vm5129, %v5130, %v5126
        %v5132 = vadd.s32 %v5127, %v5131
        %v5133 = vadd.s32 %v5132, 536870912
        %v5134 = vshrl.u32 %v5133, 30
        %v5135 = vshll.u32 %v5134, 30
        %v5136 = vsub.s32 %v5132, %v5135
        %vm5137 = vcmp.lt.s32.totalorder %v5136, 0
        %v5138 = vsub.s32 0, %v5136
        %v5139 = vsel %vm5137, %v5138, %v5136
        %v5140 = vclz %v5139
        %v5141 = vsub.s32 %v5140, 2
        %vm5142 = vcmp.gt.s32.totalorder 0, %v5141
        %v5143 = vsel %vm5142, 0, %v5141
        %v5144 = vsub.s32 32, %v5143
        %v5145 = vshll.u32 %v5136, %v5143
        %v5146 = vshrl.u32 %v5128, %v5144
        %v5147 = vor.u32 %v5145, %v5146
        %v5148 = vsub.s32 4294967266, %v5143
        %v5149 = vadd.s32 %v5148, 127
        %v5150 = vshll.u32 %v5149, 23
        %v5151 = vor.u32 4788187, %v5150
        %v5152 = vand.u32 2147483647, %v5151
        %v5154 = vcvt.s32.f32 %v5147
        %v5155 = vmul.f32 %v5154, %v5152
        %v5156 = vxor.u32 %v5155, 2147483648
        %v5157 = vsel %vm5036, %v5156, %v5155
        %v5158 = vsub.s32 4, %v5134
        %v5159 = vsel %vm5036, %v5158, %v5134
        %v5160 = vsel %vm5035, %v228, %v5157
        %v5161 = vsel %vm5035, 0, %v5159
        %v5162 = vmul.f32 %v5160, %v5160
        %v5163 = vmul.f32 %v5162, -0.001358992
        %v5164 = vadd.f32 %v5163, 0.041655596
        %v5165 = vmul.f32 %v5162, %v5164
        %v5166 = vadd.f32 %v5165, -0.4999988
        %v5167 = vmul.f32 %v5162, %v5166
        %v5168 = vadd.f32 1.0, %v5167
        %v5169 = vmul.f32 %v5160, %v5160
        %v5170 = vmul.f32 %v5169, -0.00019511016
        %v5171 = vadd.f32 %v5170, 0.008332121
        %v5172 = vmul.f32 %v5169, %v5171
        %v5173 = vadd.f32 %v5172, -0.16666654
        %v5174 = vmul.f32 %v5169, %v5173
        %v5175 = vadd.f32 %v5174, 1.0
        %v5176 = vmul.f32 %v5175, %v5160
        %vm5177 = vweird.f32 %v228
        %v5178 = vadd.s32 %v5161, 3
        %v5179 = vand.u32 %v5178, 3
        %vm5180 = vcmp.lt.s32.totalorder %v5179, 2
        %vm5181 = vcmp.eq.s32.totalorder %v5179, 0
        %v5182 = vxor.u32 %v5176, 2147483648
        %v5183 = vsel %vm5181, %v5168, %v5182
        %vm5184 = vcmp.eq.s32.totalorder %v5179, 2
        %v5185 = vxor.u32 %v5168, 2147483648
        %v5186 = vsel %vm5184, %v5185, %v5176
        %v5187 = vsel %vm5180, %v5183, %v5186
        %v5188 = vsel %vm5177, nan, %v5187
        %5189 = vst [vmem:[%s162] sm:$0xff] %v383
        %5190 = vst [vmem:[%s162 + $0x8] sm:$0xff] %v538
        %5191 = vst [vmem:[%s162 + $0x10] sm:$0xff] %v693
        %5192 = vst [vmem:[%s162 + $0x18] sm:$0xff] %v848
        %5193 = vst [vmem:[%s162 + $0x20] sm:$0xff] %v1003
        %5194 = vst [vmem:[%s162 + $0x28] sm:$0xff] %v1158
        %5195 = vst [vmem:[%s162 + $0x30] sm:$0xff] %v1313
        %5196 = vst [vmem:[%s162 + $0x38] sm:$0xff] %v1468
        %5197 = vst [vmem:[%s162 + $0x40] sm:$0xff] %v1623
        %5198 = vst [vmem:[%s162 + $0x48] sm:$0xff] %v1778
        %5199 = vst [vmem:[%s162 + $0x50] sm:$0xff] %v1933
        %5200 = vst [vmem:[%s162 + $0x58] sm:$0xff] %v2088
        %5201 = vst [vmem:[%s162 + $0x60] sm:$0xff] %v2243
        %5202 = vst [vmem:[%s162 + $0x68] sm:$0xff] %v2398
        %5203 = vst [vmem:[%s162 + $0x70] sm:$0xff] %v2553
        %5204 = vst [vmem:[%s162 + $0x78] sm:$0xff] %v2708
        %5205 = vst [vmem:[%s162 + $0x80] sm:$0xff] %v2863
        %5206 = vst [vmem:[%s162 + $0x88] sm:$0xff] %v3018
        %5207 = vst [vmem:[%s162 + $0x90] sm:$0xff] %v3173
        %5208 = vst [vmem:[%s162 + $0x98] sm:$0xff] %v3328
        %5209 = vst [vmem:[%s162 + $0xa0] sm:$0xff] %v3483
        %5210 = vst [vmem:[%s162 + $0xa8] sm:$0xff] %v3638
        %5211 = vst [vmem:[%s162 + $0xb0] sm:$0xff] %v3793
        %5212 = vst [vmem:[%s162 + $0xb8] sm:$0xff] %v3948
        %5213 = vst [vmem:[%s162 + $0xc0] sm:$0xff] %v4103
        %5214 = vst [vmem:[%s162 + $0xc8] sm:$0xff] %v4258
        %5215 = vst [vmem:[%s162 + $0xd0] sm:$0xff] %v4413
        %5216 = vst [vmem:[%s162 + $0xd8] sm:$0xff] %v4568
        %5217 = vst [vmem:[%s162 + $0xe0] sm:$0xff] %v4723
        %5218 = vst [vmem:[%s162 + $0xe8] sm:$0xff] %v4878
        %5219 = vst [vmem:[%s162 + $0xf0] sm:$0xff] %v5033
        %5220 = vst [vmem:[%s162 + $0xf8] sm:$0xff] %v5188
        %s5221 = sand.u32 %s75, 1
        %s5222 = scalar_lea.sflag [#allocation5], %s5221
        %s5223 = sand.u32 %s75, 1
        %s5224 = smul.addr %s5223, 256
        %s5225 = scalar_lea.vmem [#allocation6], %s5224
        // Predicated region
        $region33: #{tpu_custom_call.1} parent=27 // pred_check
          %p5226 = pneg %p85
        $region34: #{tpu_custom_call.1} parent=27 // pred_check_branch
          %5228 = sbr.rel (%p5226) target = $region36
        $region35: #{tpu_custom_call.1} parent=27 // pred_region
          %5230 = vsyncadd %s5222, 0
          %s5231 = smul.addr %s20, 32
          %s5232 = smul.addr %s5231, 8
          %s5233 = scalar_lea.hbm %s2, %s5232
          %s5235 = sshll.u32 %s5225, 4
          %s5236 = int_to_ptr.vmem [resolvable:$true] %s5235
          %s5237 = sshll.u32 %s5233, 4
          %s5238 = int_to_ptr.hbm [resolvable:$true] %s5237
          %5240 = dma.vmem_to_hbm [thread:$0]  %s5236, 4096, %s5238, %s5222
        $region36: #{tpu_custom_call.1} parent=27 // pred_fallthru
          _
      $region28: #{tpu_custom_call.1} parent=5 // pred_fallthru
        _
      %p5241 = scmp.le.s32.totalorder 2, %s15
      // Predicated region
      $region37: #{tpu_custom_call.1} parent=5 // pred_check
        %p5242 = pneg %p5241
      $region38: #{tpu_custom_call.1} parent=5 // pred_check_branch
        %5244 = sbr.rel (%p5242) target = $region40
      $region39: #{tpu_custom_call.1} parent=5 // pred_region
        %s5245 = ssub.s32 %s15, 2
        // Predicated region
        $region41: #{tpu_custom_call.1} parent=39 // pred_check
          %p5246 = pneg %p91
        $region42: #{tpu_custom_call.1} parent=39 // pred_check_branch
          %5248 = sbr.rel (%p5246) target = $region44
        $region43: #{tpu_custom_call.1} parent=39 // pred_region
          %s5249 = sand.u32 %s76, 1
          %s5250 = scalar_lea.sflag [#allocation5], %s5249
          %s5251 = sand.u32 %s76, 1
          %s5252 = smul.addr %s5251, 256
          %s5253 = scalar_lea.vmem [#allocation6], %s5252
          %5255 = dma.done %s5250, 4096
        $region44: #{tpu_custom_call.1} parent=39 // pred_fallthru
          _
      $region40: #{tpu_custom_call.1} parent=5 // pred_fallthru
        _
    $region6: #{tpu_custom_call.1} parent=1 // loop_footer
      %s19 = sadd.s32 1, %s15
    $region7: #{tpu_custom_call.1} parent=1 // loop_footer_branch
      %14 = sbr.rel target = $region3
    $region8: #{tpu_custom_call.1} parent=1 // loop_exit
      _
    %5256 = vsyncpa [#allocation4], 1
    %s5257 = scalar_lea.sflag [#allocation4], 1
    %5258 = vsyncpa %s5257, 1
    %5259 = vsyncpa [#allocation5], 1
    %s5260 = scalar_lea.sflag [#allocation5], 1
    %5261 = vsyncpa %s5260, 1

</llo_original>
